<compile_context>
chip_gen: v6e
topology: v6e:2x2x1
jax: 0.10.0
libtpu: 0.0.40
codegen_flags: <defaults>
</compile_context>

<pallas_src>
import math

import jax
import jax.numpy as jnp
from jax.experimental import pallas as pl
from jax.experimental.pallas import tpu as pltpu

# ----------------------------- model config ---------------------------------
S = 8          # sequence length
B = 2          # batch
D = 32         # d_model
H = 4          # nhead
DH = D // H    # head dim
F = 64         # dim_feedforward
NUM_LAYERS = 2
LN_EPS = 1e-5

# Row indices inside the packed per-layer (N_VECD, D) small-parameter block.
_BQ, _BK, _BV, _BO, _B2, _G1, _BE1, _G2, _BE2 = range(9)
N_VECD = 9


# ----------------------------- Pallas kernel --------------------------------
def _layernorm(x, gamma, beta):
    mu = jnp.mean(x, axis=-1, keepdims=True)
    xc = x - mu
    var = jnp.mean(xc * xc, axis=-1, keepdims=True)
    return xc * jax.lax.rsqrt(var + LN_EPS) * gamma + beta


def fused_encoder_kernel(x1_ref, x2_ref,
                         wq_ref, wkv_ref, wo_ref, w1_ref, w2_ref,
                         vecd_ref, b1_ref, fin_ref,
                         out_ref):
    scale = 1.0 / math.sqrt(DH)

    # (S, B, D) -> per-batch (S, D) streams, concatenated into (B*S, D) rows so
    # all row-wise matmuls / LayerNorms run on 16 rows at once.
    x1_full = x1_ref[...]
    x2_full = x2_ref[...]
    x = jnp.concatenate([x1_full[:, b, :] for b in range(B)], axis=0)    # (B*S, D)
    x2 = jnp.concatenate([x2_full[:, b, :] for b in range(B)], axis=0)   # (B*S, D)

    for l in range(NUM_LAYERS):            # static loop: weights stay VMEM-resident
        vd = vecd_ref[l]                   # (N_VECD, D) packed biases / LN params
        wq = wq_ref[l]                     # (D, D)
        wkv = wkv_ref[l]                   # (D, 2D)   [Wk | Wv] fused
        wo = wo_ref[l]                     # (D, D)

        # --- projections: q from the query stream, fused k|v from src2 ---
        q = jnp.dot(x, wq, preferred_element_type=jnp.float32) + vd[_BQ:_BQ + 1, :]
        kv = jnp.dot(x2, wkv, preferred_element_type=jnp.float32)
        k = kv[:, :D] + vd[_BK:_BK + 1, :]
        v = kv[:, D:] + vd[_BV:_BV + 1, :]

        # --- multi-head cross attention (per batch element, static loop) ---
        att_rows = []
        for b in range(B):
            rows = slice(b * S, (b + 1) * S)
            att_b = jnp.zeros((S, D), jnp.float32)
            for h in range(H):
                cols = slice(h * DH, (h + 1) * DH)
                s = jnp.dot(q[rows, cols] * scale, k[rows, cols].T,
                            preferred_element_type=jnp.float32)          # (S, S)
                s = s - jnp.max(s, axis=-1, keepdims=True)
                p = jnp.exp(s)
                p = p * pl.reciprocal(jnp.sum(p, axis=-1, keepdims=True),
                                      approx=True)
                oh = jnp.dot(p, v[rows, cols],
                             preferred_element_type=jnp.float32)          # (S, DH)
                # Fold the output projection per head: no head concatenation.
                att_b = att_b + jnp.dot(oh, wo[cols, :],
                                        preferred_element_type=jnp.float32)
            att_rows.append(att_b)
        att = jnp.concatenate(att_rows, axis=0) + vd[_BO:_BO + 1, :]      # (B*S, D)

        # residual + norm1 (dropout = identity, eval semantics)
        x = _layernorm(x + att, vd[_G1:_G1 + 1, :], vd[_BE1:_BE1 + 1, :])

        # --- feed-forward ---
        hdn = jnp.dot(x, w1_ref[l], preferred_element_type=jnp.float32) + b1_ref[l]
        hdn = jnp.maximum(hdn, 0.0)                                       # ReLU
        ff = jnp.dot(hdn, w2_ref[l], preferred_element_type=jnp.float32) + vd[_B2:_B2 + 1, :]

        # residual + norm2
        x = _layernorm(x + ff, vd[_G2:_G2 + 1, :], vd[_BE2:_BE2 + 1, :])

    # final LayerNorm, then scatter rows back into the (S, B, D) layout.
    x = _layernorm(x, fin_ref[0:1, :], fin_ref[1:2, :])
    for b in range(B):
        out_ref[:, b, :] = x[b * S:(b + 1) * S, :].astype(out_ref.dtype)


# ----------------------------- wrapper ---------------------------------------
def _full_spec(shape):
    n = len(shape)
    return pl.BlockSpec(shape, lambda i: (0,) * n)


@jax.jit
def transformer_encoder(src1_sbd, src2_sbd, packed):
    """src1/src2: (S, B, D) float32 (PyTorch seq-first). Returns (S, B, D)."""
    wq, wkv, wo, w1, w2, vecd, b1, fin = packed
    in_specs = [
        _full_spec((S, B, D)), _full_spec((S, B, D)),
        _full_spec((NUM_LAYERS, D, D)), _full_spec((NUM_LAYERS, D, 2 * D)),
        _full_spec((NUM_LAYERS, D, D)), _full_spec((NUM_LAYERS, D, F)),
        _full_spec((NUM_LAYERS, F, D)), _full_spec((NUM_LAYERS, N_VECD, D)),
        _full_spec((NUM_LAYERS, 1, F)), _full_spec((2, D)),
    ]
    return pl.pallas_call(
        fused_encoder_kernel,
        out_shape=jax.ShapeDtypeStruct((S, B, D), jnp.float32),
        grid_spec=pltpu.PrefetchScalarGridSpec(
            num_scalar_prefetch=0,
            grid=(1,),
            in_specs=in_specs,
            out_specs=_full_spec((S, B, D)),
        ),
        compiler_params=pltpu.CompilerParams(
            dimension_semantics=("arbitrary",)),
    )(src1_sbd, src2_sbd, wq, wkv, wo, w1, w2, vecd, b1, fin)


def pack_params(layer_params, final_gamma, final_beta):
    """Stack per-layer PyTorch-style params into the fused kernel layout."""
    wq = jnp.stack([p["wq"] for p in layer_params])                       # (L, D, D)
    wkv = jnp.stack([jnp.concatenate([p["wk"], p["wv"]], axis=1)
                     for p in layer_params])                              # (L, D, 2D)
    wo = jnp.stack([p["wo"] for p in layer_params])                       # (L, D, D)
    w1 = jnp.stack([p["w1"] for p in layer_params])                       # (L, D, F)
    w2 = jnp.stack([p["w2"] for p in layer_params])                       # (L, F, D)
    vecd = jnp.stack([
        jnp.concatenate([p["bq"], p["bk"], p["bv"], p["bo"], p["b2"],
                         p["g1"], p["be1"], p["g2"], p["be2"]], axis=0)
        for p in layer_params])                                           # (L, 9, D)
    b1 = jnp.stack([p["b1"] for p in layer_params])                       # (L, 1, F)
    fin = jnp.concatenate([final_gamma, final_beta], axis=0)              # (2, D)
    return (wq, wkv, wo, w1, w2, vecd, b1, fin)


# ----------------------------- pure-JAX reference ----------------------------
def _ref_layernorm(x, g, b):
    mu = jnp.mean(x, axis=-1, keepdims=True)
    var = jnp.mean((x - mu) ** 2, axis=-1, keepdims=True)
    return (x - mu) / jnp.sqrt(var + LN_EPS) * g + b


def reference_encoder(src1, src2, layer_params, fg, fb):
    x1 = jnp.transpose(src1, (1, 0, 2))
    x2 = jnp.transpose(src2, (1, 0, 2))
    out = x1
    for p in layer_params:
        q = out @ p["wq"] + p["bq"][0]
        k = x2 @ p["wk"] + p["bk"][0]
        v = x2 @ p["wv"] + p["bv"][0]
        qh = q.reshape(B, S, H, DH).transpose(0, 2, 1, 3) / math.sqrt(DH)
        kh = k.reshape(B, S, H, DH).transpose(0, 2, 1, 3)
        vh = v.reshape(B, S, H, DH).transpose(0, 2, 1, 3)
        sc = jnp.einsum("bhqd,bhkd->bhqk", qh, kh)
        pr = jax.nn.softmax(sc, axis=-1)
        at = jnp.einsum("bhqk,bhkd->bhqd", pr, vh).transpose(0, 2, 1, 3).reshape(B, S, D)
        at = at @ p["wo"] + p["bo"][0]
        x = _ref_layernorm(out + at, p["g1"][0], p["be1"][0])
        ff = jnp.maximum(x @ p["w1"] + p["b1"][0], 0.0) @ p["w2"] + p["b2"][0]
        out = _ref_layernorm(x + ff, p["g2"][0], p["be2"][0])
    out = _ref_layernorm(out, fg[0], fb[0])
    return jnp.transpose(out, (1, 0, 2))


# ----------------------------- main -------------------------------------------
def make_params(key):
    layer_params = []
    for _ in range(NUM_LAYERS):
        key, *ks = jax.random.split(key, 8)
        p = {
            "wq": 0.05 * jax.random.normal(ks[0], (D, D), jnp.float32),
            "wk": 0.05 * jax.random.normal(ks[1], (D, D), jnp.float32),
            "wv": 0.05 * jax.random.normal(ks[2], (D, D), jnp.float32),
            "wo": 0.05 * jax.random.normal(ks[3], (D, D), jnp.float32),
            "w1": 0.05 * jax.random.normal(ks[4], (D, F), jnp.float32),
            "w2": 0.05 * jax.random.normal(ks[5], (F, D), jnp.float32),
            "bq": jnp.zeros((1, D), jnp.float32),
            "bk": jnp.zeros((1, D), jnp.float32),
            "bv": jnp.zeros((1, D), jnp.float32),
            "bo": 0.01 * jax.random.normal(ks[6], (1, D), jnp.float32),
            "b1": jnp.zeros((1, F), jnp.float32),
            "b2": jnp.zeros((1, D), jnp.float32),
            "g1": jnp.ones((1, D), jnp.float32),
            "be1": jnp.zeros((1, D), jnp.float32),
            "g2": jnp.ones((1, D), jnp.float32),
            "be2": jnp.zeros((1, D), jnp.float32),
        }
        layer_params.append(p)
    final_gamma = jnp.ones((1, D), jnp.float32)
    final_beta = jnp.zeros((1, D), jnp.float32)
    return layer_params, final_gamma, final_beta, key


if __name__ == "__main__":
    key = jax.random.PRNGKey(0)
    layer_params, fg, fb, key = make_params(key)
    packed = pack_params(layer_params, fg, fb)

    key, k1, k2 = jax.random.split(key, 3)
    src1 = jax.random.normal(k1, (S, B, D), jnp.float32)   # (S, B, D) seq-first
    src2 = jax.random.normal(k2, (S, B, D), jnp.float32)

    out = transformer_encoder(src1, src2, packed)
    out = jax.block_until_ready(out)

    ref = reference_encoder(src1, src2, layer_params, fg, fb)
    assert out.shape == (S, B, D)
    # Tolerance relaxed vs. exact-f32 because the softmax denominator uses the
    # EUP approximate reciprocal (pl.reciprocal(..., approx=True)).
    assert jnp.allclose(out, ref, rtol=2e-3, atol=2e-3), "mismatch vs reference"

    print("KERNEL_OK")
</pallas_src>

<mosaic_0001>
module attributes {stable_mosaic.version = 11 : i64} {
  func.func @fused_encoder_kernel(%arg0: i32, %arg1: memref<8x2x32xf32, #tpu.memory_space<vmem>>, %arg2: memref<8x2x32xf32, #tpu.memory_space<vmem>>, %arg3: memref<2x32x32xf32, #tpu.memory_space<vmem>>, %arg4: memref<2x32x64xf32, #tpu.memory_space<vmem>>, %arg5: memref<2x32x32xf32, #tpu.memory_space<vmem>>, %arg6: memref<2x32x64xf32, #tpu.memory_space<vmem>>, %arg7: memref<2x64x32xf32, #tpu.memory_space<vmem>>, %arg8: memref<2x9x32xf32, #tpu.memory_space<vmem>>, %arg9: memref<2x1x64xf32, #tpu.memory_space<vmem>>, %arg10: memref<2x32xf32, #tpu.memory_space<vmem>>, %arg11: memref<8x2x32xf32, #tpu.memory_space<vmem>>) attributes {dimension_semantics = [#tpu.dimension_semantics<arbitrary>], iteration_bounds = array<i64: 1>, scalar_prefetch = 0 : i64, scratch_operands = 0 : i64, tpu.core_type = #tpu.core_type<tc>, window_params = [{pipeline_mode = #tpu.pipeline_mode<synchronous>, transform_indices = @transform_0, window_bounds = array<i64: 8, 2, 32>}, {pipeline_mode = #tpu.pipeline_mode<synchronous>, transform_indices = @transform_1, window_bounds = array<i64: 8, 2, 32>}, {pipeline_mode = #tpu.pipeline_mode<synchronous>, transform_indices = @transform_2, window_bounds = array<i64: 2, 32, 32>}, {pipeline_mode = #tpu.pipeline_mode<synchronous>, transform_indices = @transform_3, window_bounds = array<i64: 2, 32, 64>}, {pipeline_mode = #tpu.pipeline_mode<synchronous>, transform_indices = @transform_4, window_bounds = array<i64: 2, 32, 32>}, {pipeline_mode = #tpu.pipeline_mode<synchronous>, transform_indices = @transform_5, window_bounds = array<i64: 2, 32, 64>}, {pipeline_mode = #tpu.pipeline_mode<synchronous>, transform_indices = @transform_6, window_bounds = array<i64: 2, 64, 32>}, {pipeline_mode = #tpu.pipeline_mode<synchronous>, transform_indices = @transform_7, window_bounds = array<i64: 2, 9, 32>}, {pipeline_mode = #tpu.pipeline_mode<synchronous>, transform_indices = @transform_8, window_bounds = array<i64: 2, 1, 64>}, {pipeline_mode = #tpu.pipeline_mode<synchronous>, transform_indices = @transform_9, window_bounds = array<i64: 2, 32>}, {pipeline_mode = #tpu.pipeline_mode<synchronous>, transform_indices = @transform_10, window_bounds = array<i64: 8, 2, 32>}]} {
    %c0 = arith.constant 0 : index
    %c0_0 = arith.constant 0 : index
    %c0_1 = arith.constant 0 : index
    %0 = vector.load %arg1[%c0, %c0_0, %c0_1] : memref<8x2x32xf32, #tpu.memory_space<vmem>>, vector<8x2x32xf32>
    %c0_2 = arith.constant 0 : index
    %c0_3 = arith.constant 0 : index
    %c0_4 = arith.constant 0 : index
    %1 = vector.load %arg2[%c0_2, %c0_3, %c0_4] : memref<8x2x32xf32, #tpu.memory_space<vmem>>, vector<8x2x32xf32>
    %2 = vector.extract_strided_slice %0 {offsets = [0, 0, 0], sizes = [8, 1, 32], strides = [1, 1, 1]} : vector<8x2x32xf32> to vector<8x1x32xf32>
    %3 = vector.shape_cast %2 : vector<8x1x32xf32> to vector<8x32xf32>
    %4 = vector.extract_strided_slice %0 {offsets = [0, 1, 0], sizes = [8, 1, 32], strides = [1, 1, 1]} : vector<8x2x32xf32> to vector<8x1x32xf32>
    %5 = vector.shape_cast %4 : vector<8x1x32xf32> to vector<8x32xf32>
    %6 = tpu.concatenate %3, %5 in 0 : vector<8x32xf32>, vector<8x32xf32> -> vector<16x32xf32>
    %7 = vector.extract_strided_slice %1 {offsets = [0, 0, 0], sizes = [8, 1, 32], strides = [1, 1, 1]} : vector<8x2x32xf32> to vector<8x1x32xf32>
    %8 = vector.shape_cast %7 : vector<8x1x32xf32> to vector<8x32xf32>
    %9 = vector.extract_strided_slice %1 {offsets = [0, 1, 0], sizes = [8, 1, 32], strides = [1, 1, 1]} : vector<8x2x32xf32> to vector<8x1x32xf32>
    %10 = vector.shape_cast %9 : vector<8x1x32xf32> to vector<8x32xf32>
    %11 = tpu.concatenate %8, %10 in 0 : vector<8x32xf32>, vector<8x32xf32> -> vector<16x32xf32>
    %c0_5 = arith.constant 0 : index
    %c0_6 = arith.constant 0 : index
    %c0_7 = arith.constant 0 : index
    %12 = vector.load %arg8[%c0_5, %c0_6, %c0_7] : memref<2x9x32xf32, #tpu.memory_space<vmem>>, vector<1x9x32xf32>
    %13 = vector.shape_cast %12 : vector<1x9x32xf32> to vector<9x32xf32>
    %c0_8 = arith.constant 0 : index
    %c0_9 = arith.constant 0 : index
    %c0_10 = arith.constant 0 : index
    %14 = vector.load %arg3[%c0_8, %c0_9, %c0_10] : memref<2x32x32xf32, #tpu.memory_space<vmem>>, vector<1x32x32xf32>
    %15 = vector.shape_cast %14 : vector<1x32x32xf32> to vector<32x32xf32>
    %c0_11 = arith.constant 0 : index
    %c0_12 = arith.constant 0 : index
    %c0_13 = arith.constant 0 : index
    %16 = vector.load %arg4[%c0_11, %c0_12, %c0_13] : memref<2x32x64xf32, #tpu.memory_space<vmem>>, vector<1x32x64xf32>
    %17 = vector.shape_cast %16 : vector<1x32x64xf32> to vector<32x64xf32>
    %c0_14 = arith.constant 0 : index
    %c0_15 = arith.constant 0 : index
    %c0_16 = arith.constant 0 : index
    %18 = vector.load %arg5[%c0_14, %c0_15, %c0_16] : memref<2x32x32xf32, #tpu.memory_space<vmem>>, vector<1x32x32xf32>
    %19 = vector.shape_cast %18 : vector<1x32x32xf32> to vector<32x32xf32>
    %cst = arith.constant dense<0.000000e+00> : vector<16x32xf32>
    %20 = tpu.matmul %6, %15, %cst {dimension_numbers = #tpu.dot_dimension_numbers<[1], [0], [0], [1], [0, 0, 1, 1], [], []>} : vector<16x32xf32>, vector<32x32xf32>, vector<16x32xf32> -> vector<16x32xf32>
    %21 = vector.extract_strided_slice %13 {offsets = [0, 0], sizes = [1, 32], strides = [1, 1]} : vector<9x32xf32> to vector<1x32xf32>
    %22 = vector.broadcast %21 : vector<1x32xf32> to vector<16x32xf32>
    %23 = arith.addf %20, %22 : vector<16x32xf32>
    %cst_17 = arith.constant dense<0.000000e+00> : vector<16x64xf32>
    %24 = tpu.matmul %11, %17, %cst_17 {dimension_numbers = #tpu.dot_dimension_numbers<[1], [0], [0], [1], [0, 0, 1, 1], [], []>} : vector<16x32xf32>, vector<32x64xf32>, vector<16x64xf32> -> vector<16x64xf32>
    %25 = vector.extract_strided_slice %24 {offsets = [0, 0], sizes = [16, 32], strides = [1, 1]} : vector<16x64xf32> to vector<16x32xf32>
    %26 = vector.extract_strided_slice %13 {offsets = [1, 0], sizes = [1, 32], strides = [1, 1]} : vector<9x32xf32> to vector<1x32xf32>
    %27 = vector.broadcast %26 : vector<1x32xf32> to vector<16x32xf32>
    %28 = arith.addf %25, %27 : vector<16x32xf32>
    %29 = vector.extract_strided_slice %24 {offsets = [0, 32], sizes = [16, 32], strides = [1, 1]} : vector<16x64xf32> to vector<16x32xf32>
    %30 = vector.extract_strided_slice %13 {offsets = [2, 0], sizes = [1, 32], strides = [1, 1]} : vector<9x32xf32> to vector<1x32xf32>
    %31 = vector.broadcast %30 : vector<1x32xf32> to vector<16x32xf32>
    %32 = arith.addf %29, %31 : vector<16x32xf32>
    %cst_18 = arith.constant 0.000000e+00 : f32
    %33 = vector.broadcast %cst_18 : f32 to vector<8x32xf32>
    %34 = vector.extract_strided_slice %23 {offsets = [0, 0], sizes = [8, 8], strides = [1, 1]} : vector<16x32xf32> to vector<8x8xf32>
    %cst_19 = arith.constant 0.353553385 : f32
    %35 = vector.broadcast %cst_19 : f32 to vector<8x8xf32>
    %36 = arith.mulf %34, %35 : vector<8x8xf32>
    %37 = vector.extract_strided_slice %28 {offsets = [0, 0], sizes = [8, 8], strides = [1, 1]} : vector<16x32xf32> to vector<8x8xf32>
    %38 = tpu.transpose %37, [1, 0] : vector<8x8xf32> -> vector<8x8xf32>
    %cst_20 = arith.constant dense<0.000000e+00> : vector<8x8xf32>
    %39 = tpu.matmul %36, %38, %cst_20 {dimension_numbers = #tpu.dot_dimension_numbers<[1], [0], [0], [1], [0, 0, 1, 1], [], []>} : vector<8x8xf32>, vector<8x8xf32>, vector<8x8xf32> -> vector<8x8xf32>
    %cst_21 = arith.constant dense<0xFF800000> : vector<8xf32>
    %40 = vector.multi_reduction <maximumf>, %39, %cst_21 [1] : vector<8x8xf32> to vector<8xf32>
    %41 = vector.shape_cast %40 : vector<8xf32> to vector<8x1xf32>
    %42 = vector.broadcast %41 : vector<8x1xf32> to vector<8x8xf32>
    %43 = arith.subf %39, %42 : vector<8x8xf32>
    %44 = math.exp %43 : vector<8x8xf32>
    %cst_22 = arith.constant dense<0.000000e+00> : vector<8xf32>
    %45 = vector.multi_reduction <add>, %44, %cst_22 [1] : vector<8x8xf32> to vector<8xf32>
    %46 = vector.shape_cast %45 : vector<8xf32> to vector<8x1xf32>
    %47 = tpu.reciprocal %46 {approx = true} : vector<8x1xf32> -> vector<8x1xf32>
    %48 = vector.broadcast %47 : vector<8x1xf32> to vector<8x8xf32>
    %49 = arith.mulf %44, %48 : vector<8x8xf32>
    %50 = vector.extract_strided_slice %32 {offsets = [0, 0], sizes = [8, 8], strides = [1, 1]} : vector<16x32xf32> to vector<8x8xf32>
    %cst_23 = arith.constant dense<0.000000e+00> : vector<8x8xf32>
    %51 = tpu.matmul %49, %50, %cst_23 {dimension_numbers = #tpu.dot_dimension_numbers<[1], [0], [0], [1], [0, 0, 1, 1], [], []>} : vector<8x8xf32>, vector<8x8xf32>, vector<8x8xf32> -> vector<8x8xf32>
    %52 = vector.extract_strided_slice %19 {offsets = [0, 0], sizes = [8, 32], strides = [1, 1]} : vector<32x32xf32> to vector<8x32xf32>
    %cst_24 = arith.constant dense<0.000000e+00> : vector<8x32xf32>
    %53 = tpu.matmul %51, %52, %cst_24 {dimension_numbers = #tpu.dot_dimension_numbers<[1], [0], [0], [1], [0, 0, 1, 1], [], []>} : vector<8x8xf32>, vector<8x32xf32>, vector<8x32xf32> -> vector<8x32xf32>
    %54 = arith.addf %33, %53 : vector<8x32xf32>
    %55 = vector.extract_strided_slice %23 {offsets = [0, 8], sizes = [8, 8], strides = [1, 1]} : vector<16x32xf32> to vector<8x8xf32>
    %cst_25 = arith.constant 0.353553385 : f32
    %56 = vector.broadcast %cst_25 : f32 to vector<8x8xf32>
    %57 = arith.mulf %55, %56 : vector<8x8xf32>
    %58 = vector.extract_strided_slice %28 {offsets = [0, 8], sizes = [8, 8], strides = [1, 1]} : vector<16x32xf32> to vector<8x8xf32>
    %59 = tpu.transpose %58, [1, 0] : vector<8x8xf32> -> vector<8x8xf32>
    %cst_26 = arith.constant dense<0.000000e+00> : vector<8x8xf32>
    %60 = tpu.matmul %57, %59, %cst_26 {dimension_numbers = #tpu.dot_dimension_numbers<[1], [0], [0], [1], [0, 0, 1, 1], [], []>} : vector<8x8xf32>, vector<8x8xf32>, vector<8x8xf32> -> vector<8x8xf32>
    %cst_27 = arith.constant dense<0xFF800000> : vector<8xf32>
    %61 = vector.multi_reduction <maximumf>, %60, %cst_27 [1] : vector<8x8xf32> to vector<8xf32>
    %62 = vector.shape_cast %61 : vector<8xf32> to vector<8x1xf32>
    %63 = vector.broadcast %62 : vector<8x1xf32> to vector<8x8xf32>
    %64 = arith.subf %60, %63 : vector<8x8xf32>
    %65 = math.exp %64 : vector<8x8xf32>
    %cst_28 = arith.constant dense<0.000000e+00> : vector<8xf32>
    %66 = vector.multi_reduction <add>, %65, %cst_28 [1] : vector<8x8xf32> to vector<8xf32>
    %67 = vector.shape_cast %66 : vector<8xf32> to vector<8x1xf32>
    %68 = tpu.reciprocal %67 {approx = true} : vector<8x1xf32> -> vector<8x1xf32>
    %69 = vector.broadcast %68 : vector<8x1xf32> to vector<8x8xf32>
    %70 = arith.mulf %65, %69 : vector<8x8xf32>
    %71 = vector.extract_strided_slice %32 {offsets = [0, 8], sizes = [8, 8], strides = [1, 1]} : vector<16x32xf32> to vector<8x8xf32>
    %cst_29 = arith.constant dense<0.000000e+00> : vector<8x8xf32>
    %72 = tpu.matmul %70, %71, %cst_29 {dimension_numbers = #tpu.dot_dimension_numbers<[1], [0], [0], [1], [0, 0, 1, 1], [], []>} : vector<8x8xf32>, vector<8x8xf32>, vector<8x8xf32> -> vector<8x8xf32>
    %73 = vector.extract_strided_slice %19 {offsets = [8, 0], sizes = [8, 32], strides = [1, 1]} : vector<32x32xf32> to vector<8x32xf32>
    %cst_30 = arith.constant dense<0.000000e+00> : vector<8x32xf32>
    %74 = tpu.matmul %72, %73, %cst_30 {dimension_numbers = #tpu.dot_dimension_numbers<[1], [0], [0], [1], [0, 0, 1, 1], [], []>} : vector<8x8xf32>, vector<8x32xf32>, vector<8x32xf32> -> vector<8x32xf32>
    %75 = arith.addf %54, %74 : vector<8x32xf32>
    %76 = vector.extract_strided_slice %23 {offsets = [0, 16], sizes = [8, 8], strides = [1, 1]} : vector<16x32xf32> to vector<8x8xf32>
    %cst_31 = arith.constant 0.353553385 : f32
    %77 = vector.broadcast %cst_31 : f32 to vector<8x8xf32>
    %78 = arith.mulf %76, %77 : vector<8x8xf32>
    %79 = vector.extract_strided_slice %28 {offsets = [0, 16], sizes = [8, 8], strides = [1, 1]} : vector<16x32xf32> to vector<8x8xf32>
    %80 = tpu.transpose %79, [1, 0] : vector<8x8xf32> -> vector<8x8xf32>
    %cst_32 = arith.constant dense<0.000000e+00> : vector<8x8xf32>
    %81 = tpu.matmul %78, %80, %cst_32 {dimension_numbers = #tpu.dot_dimension_numbers<[1], [0], [0], [1], [0, 0, 1, 1], [], []>} : vector<8x8xf32>, vector<8x8xf32>, vector<8x8xf32> -> vector<8x8xf32>
    %cst_33 = arith.constant dense<0xFF800000> : vector<8xf32>
    %82 = vector.multi_reduction <maximumf>, %81, %cst_33 [1] : vector<8x8xf32> to vector<8xf32>
    %83 = vector.shape_cast %82 : vector<8xf32> to vector<8x1xf32>
    %84 = vector.broadcast %83 : vector<8x1xf32> to vector<8x8xf32>
    %85 = arith.subf %81, %84 : vector<8x8xf32>
    %86 = math.exp %85 : vector<8x8xf32>
    %cst_34 = arith.constant dense<0.000000e+00> : vector<8xf32>
    %87 = vector.multi_reduction <add>, %86, %cst_34 [1] : vector<8x8xf32> to vector<8xf32>
    %88 = vector.shape_cast %87 : vector<8xf32> to vector<8x1xf32>
    %89 = tpu.reciprocal %88 {approx = true} : vector<8x1xf32> -> vector<8x1xf32>
    %90 = vector.broadcast %89 : vector<8x1xf32> to vector<8x8xf32>
    %91 = arith.mulf %86, %90 : vector<8x8xf32>
    %92 = vector.extract_strided_slice %32 {offsets = [0, 16], sizes = [8, 8], strides = [1, 1]} : vector<16x32xf32> to vector<8x8xf32>
    %cst_35 = arith.constant dense<0.000000e+00> : vector<8x8xf32>
    %93 = tpu.matmul %91, %92, %cst_35 {dimension_numbers = #tpu.dot_dimension_numbers<[1], [0], [0], [1], [0, 0, 1, 1], [], []>} : vector<8x8xf32>, vector<8x8xf32>, vector<8x8xf32> -> vector<8x8xf32>
    %94 = vector.extract_strided_slice %19 {offsets = [16, 0], sizes = [8, 32], strides = [1, 1]} : vector<32x32xf32> to vector<8x32xf32>
    %cst_36 = arith.constant dense<0.000000e+00> : vector<8x32xf32>
    %95 = tpu.matmul %93, %94, %cst_36 {dimension_numbers = #tpu.dot_dimension_numbers<[1], [0], [0], [1], [0, 0, 1, 1], [], []>} : vector<8x8xf32>, vector<8x32xf32>, vector<8x32xf32> -> vector<8x32xf32>
    %96 = arith.addf %75, %95 : vector<8x32xf32>
    %97 = vector.extract_strided_slice %23 {offsets = [0, 24], sizes = [8, 8], strides = [1, 1]} : vector<16x32xf32> to vector<8x8xf32>
    %cst_37 = arith.constant 0.353553385 : f32
    %98 = vector.broadcast %cst_37 : f32 to vector<8x8xf32>
    %99 = arith.mulf %97, %98 : vector<8x8xf32>
    %100 = vector.extract_strided_slice %28 {offsets = [0, 24], sizes = [8, 8], strides = [1, 1]} : vector<16x32xf32> to vector<8x8xf32>
    %101 = tpu.transpose %100, [1, 0] : vector<8x8xf32> -> vector<8x8xf32>
    %cst_38 = arith.constant dense<0.000000e+00> : vector<8x8xf32>
    %102 = tpu.matmul %99, %101, %cst_38 {dimension_numbers = #tpu.dot_dimension_numbers<[1], [0], [0], [1], [0, 0, 1, 1], [], []>} : vector<8x8xf32>, vector<8x8xf32>, vector<8x8xf32> -> vector<8x8xf32>
    %cst_39 = arith.constant dense<0xFF800000> : vector<8xf32>
    %103 = vector.multi_reduction <maximumf>, %102, %cst_39 [1] : vector<8x8xf32> to vector<8xf32>
    %104 = vector.shape_cast %103 : vector<8xf32> to vector<8x1xf32>
    %105 = vector.broadcast %104 : vector<8x1xf32> to vector<8x8xf32>
    %106 = arith.subf %102, %105 : vector<8x8xf32>
    %107 = math.exp %106 : vector<8x8xf32>
    %cst_40 = arith.constant dense<0.000000e+00> : vector<8xf32>
    %108 = vector.multi_reduction <add>, %107, %cst_40 [1] : vector<8x8xf32> to vector<8xf32>
    %109 = vector.shape_cast %108 : vector<8xf32> to vector<8x1xf32>
    %110 = tpu.reciprocal %109 {approx = true} : vector<8x1xf32> -> vector<8x1xf32>
    %111 = vector.broadcast %110 : vector<8x1xf32> to vector<8x8xf32>
    %112 = arith.mulf %107, %111 : vector<8x8xf32>
    %113 = vector.extract_strided_slice %32 {offsets = [0, 24], sizes = [8, 8], strides = [1, 1]} : vector<16x32xf32> to vector<8x8xf32>
    %cst_41 = arith.constant dense<0.000000e+00> : vector<8x8xf32>
    %114 = tpu.matmul %112, %113, %cst_41 {dimension_numbers = #tpu.dot_dimension_numbers<[1], [0], [0], [1], [0, 0, 1, 1], [], []>} : vector<8x8xf32>, vector<8x8xf32>, vector<8x8xf32> -> vector<8x8xf32>
    %115 = vector.extract_strided_slice %19 {offsets = [24, 0], sizes = [8, 32], strides = [1, 1]} : vector<32x32xf32> to vector<8x32xf32>
    %cst_42 = arith.constant dense<0.000000e+00> : vector<8x32xf32>
    %116 = tpu.matmul %114, %115, %cst_42 {dimension_numbers = #tpu.dot_dimension_numbers<[1], [0], [0], [1], [0, 0, 1, 1], [], []>} : vector<8x8xf32>, vector<8x32xf32>, vector<8x32xf32> -> vector<8x32xf32>
    %117 = arith.addf %96, %116 : vector<8x32xf32>
    %cst_43 = arith.constant 0.000000e+00 : f32
    %118 = vector.broadcast %cst_43 : f32 to vector<8x32xf32>
    %119 = vector.extract_strided_slice %23 {offsets = [8, 0], sizes = [8, 8], strides = [1, 1]} : vector<16x32xf32> to vector<8x8xf32>
    %cst_44 = arith.constant 0.353553385 : f32
    %120 = vector.broadcast %cst_44 : f32 to vector<8x8xf32>
    %121 = arith.mulf %119, %120 : vector<8x8xf32>
    %122 = vector.extract_strided_slice %28 {offsets = [8, 0], sizes = [8, 8], strides = [1, 1]} : vector<16x32xf32> to vector<8x8xf32>
    %123 = tpu.transpose %122, [1, 0] : vector<8x8xf32> -> vector<8x8xf32>
    %cst_45 = arith.constant dense<0.000000e+00> : vector<8x8xf32>
    %124 = tpu.matmul %121, %123, %cst_45 {dimension_numbers = #tpu.dot_dimension_numbers<[1], [0], [0], [1], [0, 0, 1, 1], [], []>} : vector<8x8xf32>, vector<8x8xf32>, vector<8x8xf32> -> vector<8x8xf32>
    %cst_46 = arith.constant dense<0xFF800000> : vector<8xf32>
    %125 = vector.multi_reduction <maximumf>, %124, %cst_46 [1] : vector<8x8xf32> to vector<8xf32>
    %126 = vector.shape_cast %125 : vector<8xf32> to vector<8x1xf32>
    %127 = vector.broadcast %126 : vector<8x1xf32> to vector<8x8xf32>
    %128 = arith.subf %124, %127 : vector<8x8xf32>
    %129 = math.exp %128 : vector<8x8xf32>
    %cst_47 = arith.constant dense<0.000000e+00> : vector<8xf32>
    %130 = vector.multi_reduction <add>, %129, %cst_47 [1] : vector<8x8xf32> to vector<8xf32>
    %131 = vector.shape_cast %130 : vector<8xf32> to vector<8x1xf32>
    %132 = tpu.reciprocal %131 {approx = true} : vector<8x1xf32> -> vector<8x1xf32>
    %133 = vector.broadcast %132 : vector<8x1xf32> to vector<8x8xf32>
    %134 = arith.mulf %129, %133 : vector<8x8xf32>
    %135 = vector.extract_strided_slice %32 {offsets = [8, 0], sizes = [8, 8], strides = [1, 1]} : vector<16x32xf32> to vector<8x8xf32>
    %cst_48 = arith.constant dense<0.000000e+00> : vector<8x8xf32>
    %136 = tpu.matmul %134, %135, %cst_48 {dimension_numbers = #tpu.dot_dimension_numbers<[1], [0], [0], [1], [0, 0, 1, 1], [], []>} : vector<8x8xf32>, vector<8x8xf32>, vector<8x8xf32> -> vector<8x8xf32>
    %137 = vector.extract_strided_slice %19 {offsets = [0, 0], sizes = [8, 32], strides = [1, 1]} : vector<32x32xf32> to vector<8x32xf32>
    %cst_49 = arith.constant dense<0.000000e+00> : vector<8x32xf32>
    %138 = tpu.matmul %136, %137, %cst_49 {dimension_numbers = #tpu.dot_dimension_numbers<[1], [0], [0], [1], [0, 0, 1, 1], [], []>} : vector<8x8xf32>, vector<8x32xf32>, vector<8x32xf32> -> vector<8x32xf32>
    %139 = arith.addf %118, %138 : vector<8x32xf32>
    %140 = vector.extract_strided_slice %23 {offsets = [8, 8], sizes = [8, 8], strides = [1, 1]} : vector<16x32xf32> to vector<8x8xf32>
    %cst_50 = arith.constant 0.353553385 : f32
    %141 = vector.broadcast %cst_50 : f32 to vector<8x8xf32>
    %142 = arith.mulf %140, %141 : vector<8x8xf32>
    %143 = vector.extract_strided_slice %28 {offsets = [8, 8], sizes = [8, 8], strides = [1, 1]} : vector<16x32xf32> to vector<8x8xf32>
    %144 = tpu.transpose %143, [1, 0] : vector<8x8xf32> -> vector<8x8xf32>
    %cst_51 = arith.constant dense<0.000000e+00> : vector<8x8xf32>
    %145 = tpu.matmul %142, %144, %cst_51 {dimension_numbers = #tpu.dot_dimension_numbers<[1], [0], [0], [1], [0, 0, 1, 1], [], []>} : vector<8x8xf32>, vector<8x8xf32>, vector<8x8xf32> -> vector<8x8xf32>
    %cst_52 = arith.constant dense<0xFF800000> : vector<8xf32>
    %146 = vector.multi_reduction <maximumf>, %145, %cst_52 [1] : vector<8x8xf32> to vector<8xf32>
    %147 = vector.shape_cast %146 : vector<8xf32> to vector<8x1xf32>
    %148 = vector.broadcast %147 : vector<8x1xf32> to vector<8x8xf32>
    %149 = arith.subf %145, %148 : vector<8x8xf32>
    %150 = math.exp %149 : vector<8x8xf32>
    %cst_53 = arith.constant dense<0.000000e+00> : vector<8xf32>
    %151 = vector.multi_reduction <add>, %150, %cst_53 [1] : vector<8x8xf32> to vector<8xf32>
    %152 = vector.shape_cast %151 : vector<8xf32> to vector<8x1xf32>
    %153 = tpu.reciprocal %152 {approx = true} : vector<8x1xf32> -> vector<8x1xf32>
    %154 = vector.broadcast %153 : vector<8x1xf32> to vector<8x8xf32>
    %155 = arith.mulf %150, %154 : vector<8x8xf32>
    %156 = vector.extract_strided_slice %32 {offsets = [8, 8], sizes = [8, 8], strides = [1, 1]} : vector<16x32xf32> to vector<8x8xf32>
    %cst_54 = arith.constant dense<0.000000e+00> : vector<8x8xf32>
    %157 = tpu.matmul %155, %156, %cst_54 {dimension_numbers = #tpu.dot_dimension_numbers<[1], [0], [0], [1], [0, 0, 1, 1], [], []>} : vector<8x8xf32>, vector<8x8xf32>, vector<8x8xf32> -> vector<8x8xf32>
    %158 = vector.extract_strided_slice %19 {offsets = [8, 0], sizes = [8, 32], strides = [1, 1]} : vector<32x32xf32> to vector<8x32xf32>
    %cst_55 = arith.constant dense<0.000000e+00> : vector<8x32xf32>
    %159 = tpu.matmul %157, %158, %cst_55 {dimension_numbers = #tpu.dot_dimension_numbers<[1], [0], [0], [1], [0, 0, 1, 1], [], []>} : vector<8x8xf32>, vector<8x32xf32>, vector<8x32xf32> -> vector<8x32xf32>
    %160 = arith.addf %139, %159 : vector<8x32xf32>
    %161 = vector.extract_strided_slice %23 {offsets = [8, 16], sizes = [8, 8], strides = [1, 1]} : vector<16x32xf32> to vector<8x8xf32>
    %cst_56 = arith.constant 0.353553385 : f32
    %162 = vector.broadcast %cst_56 : f32 to vector<8x8xf32>
    %163 = arith.mulf %161, %162 : vector<8x8xf32>
    %164 = vector.extract_strided_slice %28 {offsets = [8, 16], sizes = [8, 8], strides = [1, 1]} : vector<16x32xf32> to vector<8x8xf32>
    %165 = tpu.transpose %164, [1, 0] : vector<8x8xf32> -> vector<8x8xf32>
    %cst_57 = arith.constant dense<0.000000e+00> : vector<8x8xf32>
    %166 = tpu.matmul %163, %165, %cst_57 {dimension_numbers = #tpu.dot_dimension_numbers<[1], [0], [0], [1], [0, 0, 1, 1], [], []>} : vector<8x8xf32>, vector<8x8xf32>, vector<8x8xf32> -> vector<8x8xf32>
    %cst_58 = arith.constant dense<0xFF800000> : vector<8xf32>
    %167 = vector.multi_reduction <maximumf>, %166, %cst_58 [1] : vector<8x8xf32> to vector<8xf32>
    %168 = vector.shape_cast %167 : vector<8xf32> to vector<8x1xf32>
    %169 = vector.broadcast %168 : vector<8x1xf32> to vector<8x8xf32>
    %170 = arith.subf %166, %169 : vector<8x8xf32>
    %171 = math.exp %170 : vector<8x8xf32>
    %cst_59 = arith.constant dense<0.000000e+00> : vector<8xf32>
    %172 = vector.multi_reduction <add>, %171, %cst_59 [1] : vector<8x8xf32> to vector<8xf32>
    %173 = vector.shape_cast %172 : vector<8xf32> to vector<8x1xf32>
    %174 = tpu.reciprocal %173 {approx = true} : vector<8x1xf32> -> vector<8x1xf32>
    %175 = vector.broadcast %174 : vector<8x1xf32> to vector<8x8xf32>
    %176 = arith.mulf %171, %175 : vector<8x8xf32>
    %177 = vector.extract_strided_slice %32 {offsets = [8, 16], sizes = [8, 8], strides = [1, 1]} : vector<16x32xf32> to vector<8x8xf32>
    %cst_60 = arith.constant dense<0.000000e+00> : vector<8x8xf32>
    %178 = tpu.matmul %176, %177, %cst_60 {dimension_numbers = #tpu.dot_dimension_numbers<[1], [0], [0], [1], [0, 0, 1, 1], [], []>} : vector<8x8xf32>, vector<8x8xf32>, vector<8x8xf32> -> vector<8x8xf32>
    %179 = vector.extract_strided_slice %19 {offsets = [16, 0], sizes = [8, 32], strides = [1, 1]} : vector<32x32xf32> to vector<8x32xf32>
    %cst_61 = arith.constant dense<0.000000e+00> : vector<8x32xf32>
    %180 = tpu.matmul %178, %179, %cst_61 {dimension_numbers = #tpu.dot_dimension_numbers<[1], [0], [0], [1], [0, 0, 1, 1], [], []>} : vector<8x8xf32>, vector<8x32xf32>, vector<8x32xf32> -> vector<8x32xf32>
    %181 = arith.addf %160, %180 : vector<8x32xf32>
    %182 = vector.extract_strided_slice %23 {offsets = [8, 24], sizes = [8, 8], strides = [1, 1]} : vector<16x32xf32> to vector<8x8xf32>
    %cst_62 = arith.constant 0.353553385 : f32
    %183 = vector.broadcast %cst_62 : f32 to vector<8x8xf32>
    %184 = arith.mulf %182, %183 : vector<8x8xf32>
    %185 = vector.extract_strided_slice %28 {offsets = [8, 24], sizes = [8, 8], strides = [1, 1]} : vector<16x32xf32> to vector<8x8xf32>
    %186 = tpu.transpose %185, [1, 0] : vector<8x8xf32> -> vector<8x8xf32>
    %cst_63 = arith.constant dense<0.000000e+00> : vector<8x8xf32>
    %187 = tpu.matmul %184, %186, %cst_63 {dimension_numbers = #tpu.dot_dimension_numbers<[1], [0], [0], [1], [0, 0, 1, 1], [], []>} : vector<8x8xf32>, vector<8x8xf32>, vector<8x8xf32> -> vector<8x8xf32>
    %cst_64 = arith.constant dense<0xFF800000> : vector<8xf32>
    %188 = vector.multi_reduction <maximumf>, %187, %cst_64 [1] : vector<8x8xf32> to vector<8xf32>
    %189 = vector.shape_cast %188 : vector<8xf32> to vector<8x1xf32>
    %190 = vector.broadcast %189 : vector<8x1xf32> to vector<8x8xf32>
    %191 = arith.subf %187, %190 : vector<8x8xf32>
    %192 = math.exp %191 : vector<8x8xf32>
    %cst_65 = arith.constant dense<0.000000e+00> : vector<8xf32>
    %193 = vector.multi_reduction <add>, %192, %cst_65 [1] : vector<8x8xf32> to vector<8xf32>
    %194 = vector.shape_cast %193 : vector<8xf32> to vector<8x1xf32>
    %195 = tpu.reciprocal %194 {approx = true} : vector<8x1xf32> -> vector<8x1xf32>
    %196 = vector.broadcast %195 : vector<8x1xf32> to vector<8x8xf32>
    %197 = arith.mulf %192, %196 : vector<8x8xf32>
    %198 = vector.extract_strided_slice %32 {offsets = [8, 24], sizes = [8, 8], strides = [1, 1]} : vector<16x32xf32> to vector<8x8xf32>
    %cst_66 = arith.constant dense<0.000000e+00> : vector<8x8xf32>
    %199 = tpu.matmul %197, %198, %cst_66 {dimension_numbers = #tpu.dot_dimension_numbers<[1], [0], [0], [1], [0, 0, 1, 1], [], []>} : vector<8x8xf32>, vector<8x8xf32>, vector<8x8xf32> -> vector<8x8xf32>
    %200 = vector.extract_strided_slice %19 {offsets = [24, 0], sizes = [8, 32], strides = [1, 1]} : vector<32x32xf32> to vector<8x32xf32>
    %cst_67 = arith.constant dense<0.000000e+00> : vector<8x32xf32>
    %201 = tpu.matmul %199, %200, %cst_67 {dimension_numbers = #tpu.dot_dimension_numbers<[1], [0], [0], [1], [0, 0, 1, 1], [], []>} : vector<8x8xf32>, vector<8x32xf32>, vector<8x32xf32> -> vector<8x32xf32>
    %202 = arith.addf %181, %201 : vector<8x32xf32>
    %203 = tpu.concatenate %117, %202 in 0 : vector<8x32xf32>, vector<8x32xf32> -> vector<16x32xf32>
    %204 = vector.extract_strided_slice %13 {offsets = [3, 0], sizes = [1, 32], strides = [1, 1]} : vector<9x32xf32> to vector<1x32xf32>
    %205 = vector.broadcast %204 : vector<1x32xf32> to vector<16x32xf32>
    %206 = arith.addf %203, %205 : vector<16x32xf32>
    %207 = arith.addf %6, %206 : vector<16x32xf32>
    %208 = vector.extract_strided_slice %13 {offsets = [5, 0], sizes = [1, 32], strides = [1, 1]} : vector<9x32xf32> to vector<1x32xf32>
    %209 = vector.extract_strided_slice %13 {offsets = [6, 0], sizes = [1, 32], strides = [1, 1]} : vector<9x32xf32> to vector<1x32xf32>
    %cst_68 = arith.constant dense<0.000000e+00> : vector<16xf32>
    %210 = vector.multi_reduction <add>, %207, %cst_68 [1] : vector<16x32xf32> to vector<16xf32>
    %211 = vector.shape_cast %210 : vector<16xf32> to vector<16x1xf32>
    %cst_69 = arith.constant 3.200000e+01 : f32
    %212 = vector.broadcast %cst_69 : f32 to vector<16x1xf32>
    %213 = arith.divf %211, %212 : vector<16x1xf32>
    %214 = vector.broadcast %213 : vector<16x1xf32> to vector<16x32xf32>
    %215 = arith.subf %207, %214 : vector<16x32xf32>
    %216 = arith.mulf %215, %215 : vector<16x32xf32>
    %cst_70 = arith.constant dense<0.000000e+00> : vector<16xf32>
    %217 = vector.multi_reduction <add>, %216, %cst_70 [1] : vector<16x32xf32> to vector<16xf32>
    %218 = vector.shape_cast %217 : vector<16xf32> to vector<16x1xf32>
    %cst_71 = arith.constant 3.200000e+01 : f32
    %219 = vector.broadcast %cst_71 : f32 to vector<16x1xf32>
    %220 = arith.divf %218, %219 : vector<16x1xf32>
    %cst_72 = arith.constant 9.99999974E-6 : f32
    %221 = vector.broadcast %cst_72 : f32 to vector<16x1xf32>
    %222 = arith.addf %220, %221 : vector<16x1xf32>
    %223 = math.rsqrt %222 : vector<16x1xf32>
    %224 = vector.broadcast %223 : vector<16x1xf32> to vector<16x32xf32>
    %225 = arith.mulf %215, %224 : vector<16x32xf32>
    %226 = vector.broadcast %208 : vector<1x32xf32> to vector<16x32xf32>
    %227 = arith.mulf %225, %226 : vector<16x32xf32>
    %228 = vector.broadcast %209 : vector<1x32xf32> to vector<16x32xf32>
    %229 = arith.addf %227, %228 : vector<16x32xf32>
    %c0_73 = arith.constant 0 : index
    %c0_74 = arith.constant 0 : index
    %c0_75 = arith.constant 0 : index
    %230 = vector.load %arg6[%c0_73, %c0_74, %c0_75] : memref<2x32x64xf32, #tpu.memory_space<vmem>>, vector<1x32x64xf32>
    %231 = vector.shape_cast %230 : vector<1x32x64xf32> to vector<32x64xf32>
    %cst_76 = arith.constant dense<0.000000e+00> : vector<16x64xf32>
    %232 = tpu.matmul %229, %231, %cst_76 {dimension_numbers = #tpu.dot_dimension_numbers<[1], [0], [0], [1], [0, 0, 1, 1], [], []>} : vector<16x32xf32>, vector<32x64xf32>, vector<16x64xf32> -> vector<16x64xf32>
    %c0_77 = arith.constant 0 : index
    %c0_78 = arith.constant 0 : index
    %c0_79 = arith.constant 0 : index
    %233 = vector.load %arg9[%c0_77, %c0_78, %c0_79] : memref<2x1x64xf32, #tpu.memory_space<vmem>>, vector<1x1x64xf32>
    %234 = vector.shape_cast %233 : vector<1x1x64xf32> to vector<1x64xf32>
    %235 = vector.broadcast %234 : vector<1x64xf32> to vector<16x64xf32>
    %236 = arith.addf %232, %235 : vector<16x64xf32>
    %cst_80 = arith.constant 0.000000e+00 : f32
    %237 = vector.broadcast %cst_80 : f32 to vector<16x64xf32>
    %238 = arith.maximumf %236, %237 : vector<16x64xf32>
    %c0_81 = arith.constant 0 : index
    %c0_82 = arith.constant 0 : index
    %c0_83 = arith.constant 0 : index
    %239 = vector.load %arg7[%c0_81, %c0_82, %c0_83] : memref<2x64x32xf32, #tpu.memory_space<vmem>>, vector<1x64x32xf32>
    %240 = vector.shape_cast %239 : vector<1x64x32xf32> to vector<64x32xf32>
    %cst_84 = arith.constant dense<0.000000e+00> : vector<16x32xf32>
    %241 = tpu.matmul %238, %240, %cst_84 {dimension_numbers = #tpu.dot_dimension_numbers<[1], [0], [0], [1], [0, 0, 1, 1], [], []>} : vector<16x64xf32>, vector<64x32xf32>, vector<16x32xf32> -> vector<16x32xf32>
    %242 = vector.extract_strided_slice %13 {offsets = [4, 0], sizes = [1, 32], strides = [1, 1]} : vector<9x32xf32> to vector<1x32xf32>
    %243 = vector.broadcast %242 : vector<1x32xf32> to vector<16x32xf32>
    %244 = arith.addf %241, %243 : vector<16x32xf32>
    %245 = arith.addf %229, %244 : vector<16x32xf32>
    %246 = vector.extract_strided_slice %13 {offsets = [7, 0], sizes = [1, 32], strides = [1, 1]} : vector<9x32xf32> to vector<1x32xf32>
    %247 = vector.extract_strided_slice %13 {offsets = [8, 0], sizes = [1, 32], strides = [1, 1]} : vector<9x32xf32> to vector<1x32xf32>
    %cst_85 = arith.constant dense<0.000000e+00> : vector<16xf32>
    %248 = vector.multi_reduction <add>, %245, %cst_85 [1] : vector<16x32xf32> to vector<16xf32>
    %249 = vector.shape_cast %248 : vector<16xf32> to vector<16x1xf32>
    %cst_86 = arith.constant 3.200000e+01 : f32
    %250 = vector.broadcast %cst_86 : f32 to vector<16x1xf32>
    %251 = arith.divf %249, %250 : vector<16x1xf32>
    %252 = vector.broadcast %251 : vector<16x1xf32> to vector<16x32xf32>
    %253 = arith.subf %245, %252 : vector<16x32xf32>
    %254 = arith.mulf %253, %253 : vector<16x32xf32>
    %cst_87 = arith.constant dense<0.000000e+00> : vector<16xf32>
    %255 = vector.multi_reduction <add>, %254, %cst_87 [1] : vector<16x32xf32> to vector<16xf32>
    %256 = vector.shape_cast %255 : vector<16xf32> to vector<16x1xf32>
    %cst_88 = arith.constant 3.200000e+01 : f32
    %257 = vector.broadcast %cst_88 : f32 to vector<16x1xf32>
    %258 = arith.divf %256, %257 : vector<16x1xf32>
    %cst_89 = arith.constant 9.99999974E-6 : f32
    %259 = vector.broadcast %cst_89 : f32 to vector<16x1xf32>
    %260 = arith.addf %258, %259 : vector<16x1xf32>
    %261 = math.rsqrt %260 : vector<16x1xf32>
    %262 = vector.broadcast %261 : vector<16x1xf32> to vector<16x32xf32>
    %263 = arith.mulf %253, %262 : vector<16x32xf32>
    %264 = vector.broadcast %246 : vector<1x32xf32> to vector<16x32xf32>
    %265 = arith.mulf %263, %264 : vector<16x32xf32>
    %266 = vector.broadcast %247 : vector<1x32xf32> to vector<16x32xf32>
    %267 = arith.addf %265, %266 : vector<16x32xf32>
    %c1 = arith.constant 1 : index
    %c0_90 = arith.constant 0 : index
    %c0_91 = arith.constant 0 : index
    %268 = vector.load %arg8[%c1, %c0_90, %c0_91] : memref<2x9x32xf32, #tpu.memory_space<vmem>>, vector<1x9x32xf32>
    %269 = vector.shape_cast %268 : vector<1x9x32xf32> to vector<9x32xf32>
    %c1_92 = arith.constant 1 : index
    %c0_93 = arith.constant 0 : index
    %c0_94 = arith.constant 0 : index
    %270 = vector.load %arg3[%c1_92, %c0_93, %c0_94] : memref<2x32x32xf32, #tpu.memory_space<vmem>>, vector<1x32x32xf32>
    %271 = vector.shape_cast %270 : vector<1x32x32xf32> to vector<32x32xf32>
    %c1_95 = arith.constant 1 : index
    %c0_96 = arith.constant 0 : index
    %c0_97 = arith.constant 0 : index
    %272 = vector.load %arg4[%c1_95, %c0_96, %c0_97] : memref<2x32x64xf32, #tpu.memory_space<vmem>>, vector<1x32x64xf32>
    %273 = vector.shape_cast %272 : vector<1x32x64xf32> to vector<32x64xf32>
    %c1_98 = arith.constant 1 : index
    %c0_99 = arith.constant 0 : index
    %c0_100 = arith.constant 0 : index
    %274 = vector.load %arg5[%c1_98, %c0_99, %c0_100] : memref<2x32x32xf32, #tpu.memory_space<vmem>>, vector<1x32x32xf32>
    %275 = vector.shape_cast %274 : vector<1x32x32xf32> to vector<32x32xf32>
    %cst_101 = arith.constant dense<0.000000e+00> : vector<16x32xf32>
    %276 = tpu.matmul %267, %271, %cst_101 {dimension_numbers = #tpu.dot_dimension_numbers<[1], [0], [0], [1], [0, 0, 1, 1], [], []>} : vector<16x32xf32>, vector<32x32xf32>, vector<16x32xf32> -> vector<16x32xf32>
    %277 = vector.extract_strided_slice %269 {offsets = [0, 0], sizes = [1, 32], strides = [1, 1]} : vector<9x32xf32> to vector<1x32xf32>
    %278 = vector.broadcast %277 : vector<1x32xf32> to vector<16x32xf32>
    %279 = arith.addf %276, %278 : vector<16x32xf32>
    %cst_102 = arith.constant dense<0.000000e+00> : vector<16x64xf32>
    %280 = tpu.matmul %11, %273, %cst_102 {dimension_numbers = #tpu.dot_dimension_numbers<[1], [0], [0], [1], [0, 0, 1, 1], [], []>} : vector<16x32xf32>, vector<32x64xf32>, vector<16x64xf32> -> vector<16x64xf32>
    %281 = vector.extract_strided_slice %280 {offsets = [0, 0], sizes = [16, 32], strides = [1, 1]} : vector<16x64xf32> to vector<16x32xf32>
    %282 = vector.extract_strided_slice %269 {offsets = [1, 0], sizes = [1, 32], strides = [1, 1]} : vector<9x32xf32> to vector<1x32xf32>
    %283 = vector.broadcast %282 : vector<1x32xf32> to vector<16x32xf32>
    %284 = arith.addf %281, %283 : vector<16x32xf32>
    %285 = vector.extract_strided_slice %280 {offsets = [0, 32], sizes = [16, 32], strides = [1, 1]} : vector<16x64xf32> to vector<16x32xf32>
    %286 = vector.extract_strided_slice %269 {offsets = [2, 0], sizes = [1, 32], strides = [1, 1]} : vector<9x32xf32> to vector<1x32xf32>
    %287 = vector.broadcast %286 : vector<1x32xf32> to vector<16x32xf32>
    %288 = arith.addf %285, %287 : vector<16x32xf32>
    %cst_103 = arith.constant 0.000000e+00 : f32
    %289 = vector.broadcast %cst_103 : f32 to vector<8x32xf32>
    %290 = vector.extract_strided_slice %279 {offsets = [0, 0], sizes = [8, 8], strides = [1, 1]} : vector<16x32xf32> to vector<8x8xf32>
    %cst_104 = arith.constant 0.353553385 : f32
    %291 = vector.broadcast %cst_104 : f32 to vector<8x8xf32>
    %292 = arith.mulf %290, %291 : vector<8x8xf32>
    %293 = vector.extract_strided_slice %284 {offsets = [0, 0], sizes = [8, 8], strides = [1, 1]} : vector<16x32xf32> to vector<8x8xf32>
    %294 = tpu.transpose %293, [1, 0] : vector<8x8xf32> -> vector<8x8xf32>
    %cst_105 = arith.constant dense<0.000000e+00> : vector<8x8xf32>
    %295 = tpu.matmul %292, %294, %cst_105 {dimension_numbers = #tpu.dot_dimension_numbers<[1], [0], [0], [1], [0, 0, 1, 1], [], []>} : vector<8x8xf32>, vector<8x8xf32>, vector<8x8xf32> -> vector<8x8xf32>
    %cst_106 = arith.constant dense<0xFF800000> : vector<8xf32>
    %296 = vector.multi_reduction <maximumf>, %295, %cst_106 [1] : vector<8x8xf32> to vector<8xf32>
    %297 = vector.shape_cast %296 : vector<8xf32> to vector<8x1xf32>
    %298 = vector.broadcast %297 : vector<8x1xf32> to vector<8x8xf32>
    %299 = arith.subf %295, %298 : vector<8x8xf32>
    %300 = math.exp %299 : vector<8x8xf32>
    %cst_107 = arith.constant dense<0.000000e+00> : vector<8xf32>
    %301 = vector.multi_reduction <add>, %300, %cst_107 [1] : vector<8x8xf32> to vector<8xf32>
    %302 = vector.shape_cast %301 : vector<8xf32> to vector<8x1xf32>
    %303 = tpu.reciprocal %302 {approx = true} : vector<8x1xf32> -> vector<8x1xf32>
    %304 = vector.broadcast %303 : vector<8x1xf32> to vector<8x8xf32>
    %305 = arith.mulf %300, %304 : vector<8x8xf32>
    %306 = vector.extract_strided_slice %288 {offsets = [0, 0], sizes = [8, 8], strides = [1, 1]} : vector<16x32xf32> to vector<8x8xf32>
    %cst_108 = arith.constant dense<0.000000e+00> : vector<8x8xf32>
    %307 = tpu.matmul %305, %306, %cst_108 {dimension_numbers = #tpu.dot_dimension_numbers<[1], [0], [0], [1], [0, 0, 1, 1], [], []>} : vector<8x8xf32>, vector<8x8xf32>, vector<8x8xf32> -> vector<8x8xf32>
    %308 = vector.extract_strided_slice %275 {offsets = [0, 0], sizes = [8, 32], strides = [1, 1]} : vector<32x32xf32> to vector<8x32xf32>
    %cst_109 = arith.constant dense<0.000000e+00> : vector<8x32xf32>
    %309 = tpu.matmul %307, %308, %cst_109 {dimension_numbers = #tpu.dot_dimension_numbers<[1], [0], [0], [1], [0, 0, 1, 1], [], []>} : vector<8x8xf32>, vector<8x32xf32>, vector<8x32xf32> -> vector<8x32xf32>
    %310 = arith.addf %289, %309 : vector<8x32xf32>
    %311 = vector.extract_strided_slice %279 {offsets = [0, 8], sizes = [8, 8], strides = [1, 1]} : vector<16x32xf32> to vector<8x8xf32>
    %cst_110 = arith.constant 0.353553385 : f32
    %312 = vector.broadcast %cst_110 : f32 to vector<8x8xf32>
    %313 = arith.mulf %311, %312 : vector<8x8xf32>
    %314 = vector.extract_strided_slice %284 {offsets = [0, 8], sizes = [8, 8], strides = [1, 1]} : vector<16x32xf32> to vector<8x8xf32>
    %315 = tpu.transpose %314, [1, 0] : vector<8x8xf32> -> vector<8x8xf32>
    %cst_111 = arith.constant dense<0.000000e+00> : vector<8x8xf32>
    %316 = tpu.matmul %313, %315, %cst_111 {dimension_numbers = #tpu.dot_dimension_numbers<[1], [0], [0], [1], [0, 0, 1, 1], [], []>} : vector<8x8xf32>, vector<8x8xf32>, vector<8x8xf32> -> vector<8x8xf32>
    %cst_112 = arith.constant dense<0xFF800000> : vector<8xf32>
    %317 = vector.multi_reduction <maximumf>, %316, %cst_112 [1] : vector<8x8xf32> to vector<8xf32>
    %318 = vector.shape_cast %317 : vector<8xf32> to vector<8x1xf32>
    %319 = vector.broadcast %318 : vector<8x1xf32> to vector<8x8xf32>
    %320 = arith.subf %316, %319 : vector<8x8xf32>
    %321 = math.exp %320 : vector<8x8xf32>
    %cst_113 = arith.constant dense<0.000000e+00> : vector<8xf32>
    %322 = vector.multi_reduction <add>, %321, %cst_113 [1] : vector<8x8xf32> to vector<8xf32>
    %323 = vector.shape_cast %322 : vector<8xf32> to vector<8x1xf32>
    %324 = tpu.reciprocal %323 {approx = true} : vector<8x1xf32> -> vector<8x1xf32>
    %325 = vector.broadcast %324 : vector<8x1xf32> to vector<8x8xf32>
    %326 = arith.mulf %321, %325 : vector<8x8xf32>
    %327 = vector.extract_strided_slice %288 {offsets = [0, 8], sizes = [8, 8], strides = [1, 1]} : vector<16x32xf32> to vector<8x8xf32>
    %cst_114 = arith.constant dense<0.000000e+00> : vector<8x8xf32>
    %328 = tpu.matmul %326, %327, %cst_114 {dimension_numbers = #tpu.dot_dimension_numbers<[1], [0], [0], [1], [0, 0, 1, 1], [], []>} : vector<8x8xf32>, vector<8x8xf32>, vector<8x8xf32> -> vector<8x8xf32>
    %329 = vector.extract_strided_slice %275 {offsets = [8, 0], sizes = [8, 32], strides = [1, 1]} : vector<32x32xf32> to vector<8x32xf32>
    %cst_115 = arith.constant dense<0.000000e+00> : vector<8x32xf32>
    %330 = tpu.matmul %328, %329, %cst_115 {dimension_numbers = #tpu.dot_dimension_numbers<[1], [0], [0], [1], [0, 0, 1, 1], [], []>} : vector<8x8xf32>, vector<8x32xf32>, vector<8x32xf32> -> vector<8x32xf32>
    %331 = arith.addf %310, %330 : vector<8x32xf32>
    %332 = vector.extract_strided_slice %279 {offsets = [0, 16], sizes = [8, 8], strides = [1, 1]} : vector<16x32xf32> to vector<8x8xf32>
    %cst_116 = arith.constant 0.353553385 : f32
    %333 = vector.broadcast %cst_116 : f32 to vector<8x8xf32>
    %334 = arith.mulf %332, %333 : vector<8x8xf32>
    %335 = vector.extract_strided_slice %284 {offsets = [0, 16], sizes = [8, 8], strides = [1, 1]} : vector<16x32xf32> to vector<8x8xf32>
    %336 = tpu.transpose %335, [1, 0] : vector<8x8xf32> -> vector<8x8xf32>
    %cst_117 = arith.constant dense<0.000000e+00> : vector<8x8xf32>
    %337 = tpu.matmul %334, %336, %cst_117 {dimension_numbers = #tpu.dot_dimension_numbers<[1], [0], [0], [1], [0, 0, 1, 1], [], []>} : vector<8x8xf32>, vector<8x8xf32>, vector<8x8xf32> -> vector<8x8xf32>
    %cst_118 = arith.constant dense<0xFF800000> : vector<8xf32>
    %338 = vector.multi_reduction <maximumf>, %337, %cst_118 [1] : vector<8x8xf32> to vector<8xf32>
    %339 = vector.shape_cast %338 : vector<8xf32> to vector<8x1xf32>
    %340 = vector.broadcast %339 : vector<8x1xf32> to vector<8x8xf32>
    %341 = arith.subf %337, %340 : vector<8x8xf32>
    %342 = math.exp %341 : vector<8x8xf32>
    %cst_119 = arith.constant dense<0.000000e+00> : vector<8xf32>
    %343 = vector.multi_reduction <add>, %342, %cst_119 [1] : vector<8x8xf32> to vector<8xf32>
    %344 = vector.shape_cast %343 : vector<8xf32> to vector<8x1xf32>
    %345 = tpu.reciprocal %344 {approx = true} : vector<8x1xf32> -> vector<8x1xf32>
    %346 = vector.broadcast %345 : vector<8x1xf32> to vector<8x8xf32>
    %347 = arith.mulf %342, %346 : vector<8x8xf32>
    %348 = vector.extract_strided_slice %288 {offsets = [0, 16], sizes = [8, 8], strides = [1, 1]} : vector<16x32xf32> to vector<8x8xf32>
    %cst_120 = arith.constant dense<0.000000e+00> : vector<8x8xf32>
    %349 = tpu.matmul %347, %348, %cst_120 {dimension_numbers = #tpu.dot_dimension_numbers<[1], [0], [0], [1], [0, 0, 1, 1], [], []>} : vector<8x8xf32>, vector<8x8xf32>, vector<8x8xf32> -> vector<8x8xf32>
    %350 = vector.extract_strided_slice %275 {offsets = [16, 0], sizes = [8, 32], strides = [1, 1]} : vector<32x32xf32> to vector<8x32xf32>
    %cst_121 = arith.constant dense<0.000000e+00> : vector<8x32xf32>
    %351 = tpu.matmul %349, %350, %cst_121 {dimension_numbers = #tpu.dot_dimension_numbers<[1], [0], [0], [1], [0, 0, 1, 1], [], []>} : vector<8x8xf32>, vector<8x32xf32>, vector<8x32xf32> -> vector<8x32xf32>
    %352 = arith.addf %331, %351 : vector<8x32xf32>
    %353 = vector.extract_strided_slice %279 {offsets = [0, 24], sizes = [8, 8], strides = [1, 1]} : vector<16x32xf32> to vector<8x8xf32>
    %cst_122 = arith.constant 0.353553385 : f32
    %354 = vector.broadcast %cst_122 : f32 to vector<8x8xf32>
    %355 = arith.mulf %353, %354 : vector<8x8xf32>
    %356 = vector.extract_strided_slice %284 {offsets = [0, 24], sizes = [8, 8], strides = [1, 1]} : vector<16x32xf32> to vector<8x8xf32>
    %357 = tpu.transpose %356, [1, 0] : vector<8x8xf32> -> vector<8x8xf32>
    %cst_123 = arith.constant dense<0.000000e+00> : vector<8x8xf32>
    %358 = tpu.matmul %355, %357, %cst_123 {dimension_numbers = #tpu.dot_dimension_numbers<[1], [0], [0], [1], [0, 0, 1, 1], [], []>} : vector<8x8xf32>, vector<8x8xf32>, vector<8x8xf32> -> vector<8x8xf32>
    %cst_124 = arith.constant dense<0xFF800000> : vector<8xf32>
    %359 = vector.multi_reduction <maximumf>, %358, %cst_124 [1] : vector<8x8xf32> to vector<8xf32>
    %360 = vector.shape_cast %359 : vector<8xf32> to vector<8x1xf32>
    %361 = vector.broadcast %360 : vector<8x1xf32> to vector<8x8xf32>
    %362 = arith.subf %358, %361 : vector<8x8xf32>
    %363 = math.exp %362 : vector<8x8xf32>
    %cst_125 = arith.constant dense<0.000000e+00> : vector<8xf32>
    %364 = vector.multi_reduction <add>, %363, %cst_125 [1] : vector<8x8xf32> to vector<8xf32>
    %365 = vector.shape_cast %364 : vector<8xf32> to vector<8x1xf32>
    %366 = tpu.reciprocal %365 {approx = true} : vector<8x1xf32> -> vector<8x1xf32>
    %367 = vector.broadcast %366 : vector<8x1xf32> to vector<8x8xf32>
    %368 = arith.mulf %363, %367 : vector<8x8xf32>
    %369 = vector.extract_strided_slice %288 {offsets = [0, 24], sizes = [8, 8], strides = [1, 1]} : vector<16x32xf32> to vector<8x8xf32>
    %cst_126 = arith.constant dense<0.000000e+00> : vector<8x8xf32>
    %370 = tpu.matmul %368, %369, %cst_126 {dimension_numbers = #tpu.dot_dimension_numbers<[1], [0], [0], [1], [0, 0, 1, 1], [], []>} : vector<8x8xf32>, vector<8x8xf32>, vector<8x8xf32> -> vector<8x8xf32>
    %371 = vector.extract_strided_slice %275 {offsets = [24, 0], sizes = [8, 32], strides = [1, 1]} : vector<32x32xf32> to vector<8x32xf32>
    %cst_127 = arith.constant dense<0.000000e+00> : vector<8x32xf32>
    %372 = tpu.matmul %370, %371, %cst_127 {dimension_numbers = #tpu.dot_dimension_numbers<[1], [0], [0], [1], [0, 0, 1, 1], [], []>} : vector<8x8xf32>, vector<8x32xf32>, vector<8x32xf32> -> vector<8x32xf32>
    %373 = arith.addf %352, %372 : vector<8x32xf32>
    %cst_128 = arith.constant 0.000000e+00 : f32
    %374 = vector.broadcast %cst_128 : f32 to vector<8x32xf32>
    %375 = vector.extract_strided_slice %279 {offsets = [8, 0], sizes = [8, 8], strides = [1, 1]} : vector<16x32xf32> to vector<8x8xf32>
    %cst_129 = arith.constant 0.353553385 : f32
    %376 = vector.broadcast %cst_129 : f32 to vector<8x8xf32>
    %377 = arith.mulf %375, %376 : vector<8x8xf32>
    %378 = vector.extract_strided_slice %284 {offsets = [8, 0], sizes = [8, 8], strides = [1, 1]} : vector<16x32xf32> to vector<8x8xf32>
    %379 = tpu.transpose %378, [1, 0] : vector<8x8xf32> -> vector<8x8xf32>
    %cst_130 = arith.constant dense<0.000000e+00> : vector<8x8xf32>
    %380 = tpu.matmul %377, %379, %cst_130 {dimension_numbers = #tpu.dot_dimension_numbers<[1], [0], [0], [1], [0, 0, 1, 1], [], []>} : vector<8x8xf32>, vector<8x8xf32>, vector<8x8xf32> -> vector<8x8xf32>
    %cst_131 = arith.constant dense<0xFF800000> : vector<8xf32>
    %381 = vector.multi_reduction <maximumf>, %380, %cst_131 [1] : vector<8x8xf32> to vector<8xf32>
    %382 = vector.shape_cast %381 : vector<8xf32> to vector<8x1xf32>
    %383 = vector.broadcast %382 : vector<8x1xf32> to vector<8x8xf32>
    %384 = arith.subf %380, %383 : vector<8x8xf32>
    %385 = math.exp %384 : vector<8x8xf32>
    %cst_132 = arith.constant dense<0.000000e+00> : vector<8xf32>
    %386 = vector.multi_reduction <add>, %385, %cst_132 [1] : vector<8x8xf32> to vector<8xf32>
    %387 = vector.shape_cast %386 : vector<8xf32> to vector<8x1xf32>
    %388 = tpu.reciprocal %387 {approx = true} : vector<8x1xf32> -> vector<8x1xf32>
    %389 = vector.broadcast %388 : vector<8x1xf32> to vector<8x8xf32>
    %390 = arith.mulf %385, %389 : vector<8x8xf32>
    %391 = vector.extract_strided_slice %288 {offsets = [8, 0], sizes = [8, 8], strides = [1, 1]} : vector<16x32xf32> to vector<8x8xf32>
    %cst_133 = arith.constant dense<0.000000e+00> : vector<8x8xf32>
    %392 = tpu.matmul %390, %391, %cst_133 {dimension_numbers = #tpu.dot_dimension_numbers<[1], [0], [0], [1], [0, 0, 1, 1], [], []>} : vector<8x8xf32>, vector<8x8xf32>, vector<8x8xf32> -> vector<8x8xf32>
    %393 = vector.extract_strided_slice %275 {offsets = [0, 0], sizes = [8, 32], strides = [1, 1]} : vector<32x32xf32> to vector<8x32xf32>
    %cst_134 = arith.constant dense<0.000000e+00> : vector<8x32xf32>
    %394 = tpu.matmul %392, %393, %cst_134 {dimension_numbers = #tpu.dot_dimension_numbers<[1], [0], [0], [1], [0, 0, 1, 1], [], []>} : vector<8x8xf32>, vector<8x32xf32>, vector<8x32xf32> -> vector<8x32xf32>
    %395 = arith.addf %374, %394 : vector<8x32xf32>
    %396 = vector.extract_strided_slice %279 {offsets = [8, 8], sizes = [8, 8], strides = [1, 1]} : vector<16x32xf32> to vector<8x8xf32>
    %cst_135 = arith.constant 0.353553385 : f32
    %397 = vector.broadcast %cst_135 : f32 to vector<8x8xf32>
    %398 = arith.mulf %396, %397 : vector<8x8xf32>
    %399 = vector.extract_strided_slice %284 {offsets = [8, 8], sizes = [8, 8], strides = [1, 1]} : vector<16x32xf32> to vector<8x8xf32>
    %400 = tpu.transpose %399, [1, 0] : vector<8x8xf32> -> vector<8x8xf32>
    %cst_136 = arith.constant dense<0.000000e+00> : vector<8x8xf32>
    %401 = tpu.matmul %398, %400, %cst_136 {dimension_numbers = #tpu.dot_dimension_numbers<[1], [0], [0], [1], [0, 0, 1, 1], [], []>} : vector<8x8xf32>, vector<8x8xf32>, vector<8x8xf32> -> vector<8x8xf32>
    %cst_137 = arith.constant dense<0xFF800000> : vector<8xf32>
    %402 = vector.multi_reduction <maximumf>, %401, %cst_137 [1] : vector<8x8xf32> to vector<8xf32>
    %403 = vector.shape_cast %402 : vector<8xf32> to vector<8x1xf32>
    %404 = vector.broadcast %403 : vector<8x1xf32> to vector<8x8xf32>
    %405 = arith.subf %401, %404 : vector<8x8xf32>
    %406 = math.exp %405 : vector<8x8xf32>
    %cst_138 = arith.constant dense<0.000000e+00> : vector<8xf32>
    %407 = vector.multi_reduction <add>, %406, %cst_138 [1] : vector<8x8xf32> to vector<8xf32>
    %408 = vector.shape_cast %407 : vector<8xf32> to vector<8x1xf32>
    %409 = tpu.reciprocal %408 {approx = true} : vector<8x1xf32> -> vector<8x1xf32>
    %410 = vector.broadcast %409 : vector<8x1xf32> to vector<8x8xf32>
    %411 = arith.mulf %406, %410 : vector<8x8xf32>
    %412 = vector.extract_strided_slice %288 {offsets = [8, 8], sizes = [8, 8], strides = [1, 1]} : vector<16x32xf32> to vector<8x8xf32>
    %cst_139 = arith.constant dense<0.000000e+00> : vector<8x8xf32>
    %413 = tpu.matmul %411, %412, %cst_139 {dimension_numbers = #tpu.dot_dimension_numbers<[1], [0], [0], [1], [0, 0, 1, 1], [], []>} : vector<8x8xf32>, vector<8x8xf32>, vector<8x8xf32> -> vector<8x8xf32>
    %414 = vector.extract_strided_slice %275 {offsets = [8, 0], sizes = [8, 32], strides = [1, 1]} : vector<32x32xf32> to vector<8x32xf32>
    %cst_140 = arith.constant dense<0.000000e+00> : vector<8x32xf32>
    %415 = tpu.matmul %413, %414, %cst_140 {dimension_numbers = #tpu.dot_dimension_numbers<[1], [0], [0], [1], [0, 0, 1, 1], [], []>} : vector<8x8xf32>, vector<8x32xf32>, vector<8x32xf32> -> vector<8x32xf32>
    %416 = arith.addf %395, %415 : vector<8x32xf32>
    %417 = vector.extract_strided_slice %279 {offsets = [8, 16], sizes = [8, 8], strides = [1, 1]} : vector<16x32xf32> to vector<8x8xf32>
    %cst_141 = arith.constant 0.353553385 : f32
    %418 = vector.broadcast %cst_141 : f32 to vector<8x8xf32>
    %419 = arith.mulf %417, %418 : vector<8x8xf32>
    %420 = vector.extract_strided_slice %284 {offsets = [8, 16], sizes = [8, 8], strides = [1, 1]} : vector<16x32xf32> to vector<8x8xf32>
    %421 = tpu.transpose %420, [1, 0] : vector<8x8xf32> -> vector<8x8xf32>
    %cst_142 = arith.constant dense<0.000000e+00> : vector<8x8xf32>
    %422 = tpu.matmul %419, %421, %cst_142 {dimension_numbers = #tpu.dot_dimension_numbers<[1], [0], [0], [1], [0, 0, 1, 1], [], []>} : vector<8x8xf32>, vector<8x8xf32>, vector<8x8xf32> -> vector<8x8xf32>
    %cst_143 = arith.constant dense<0xFF800000> : vector<8xf32>
    %423 = vector.multi_reduction <maximumf>, %422, %cst_143 [1] : vector<8x8xf32> to vector<8xf32>
    %424 = vector.shape_cast %423 : vector<8xf32> to vector<8x1xf32>
    %425 = vector.broadcast %424 : vector<8x1xf32> to vector<8x8xf32>
    %426 = arith.subf %422, %425 : vector<8x8xf32>
    %427 = math.exp %426 : vector<8x8xf32>
    %cst_144 = arith.constant dense<0.000000e+00> : vector<8xf32>
    %428 = vector.multi_reduction <add>, %427, %cst_144 [1] : vector<8x8xf32> to vector<8xf32>
    %429 = vector.shape_cast %428 : vector<8xf32> to vector<8x1xf32>
    %430 = tpu.reciprocal %429 {approx = true} : vector<8x1xf32> -> vector<8x1xf32>
    %431 = vector.broadcast %430 : vector<8x1xf32> to vector<8x8xf32>
    %432 = arith.mulf %427, %431 : vector<8x8xf32>
    %433 = vector.extract_strided_slice %288 {offsets = [8, 16], sizes = [8, 8], strides = [1, 1]} : vector<16x32xf32> to vector<8x8xf32>
    %cst_145 = arith.constant dense<0.000000e+00> : vector<8x8xf32>
    %434 = tpu.matmul %432, %433, %cst_145 {dimension_numbers = #tpu.dot_dimension_numbers<[1], [0], [0], [1], [0, 0, 1, 1], [], []>} : vector<8x8xf32>, vector<8x8xf32>, vector<8x8xf32> -> vector<8x8xf32>
    %435 = vector.extract_strided_slice %275 {offsets = [16, 0], sizes = [8, 32], strides = [1, 1]} : vector<32x32xf32> to vector<8x32xf32>
    %cst_146 = arith.constant dense<0.000000e+00> : vector<8x32xf32>
    %436 = tpu.matmul %434, %435, %cst_146 {dimension_numbers = #tpu.dot_dimension_numbers<[1], [0], [0], [1], [0, 0, 1, 1], [], []>} : vector<8x8xf32>, vector<8x32xf32>, vector<8x32xf32> -> vector<8x32xf32>
    %437 = arith.addf %416, %436 : vector<8x32xf32>
    %438 = vector.extract_strided_slice %279 {offsets = [8, 24], sizes = [8, 8], strides = [1, 1]} : vector<16x32xf32> to vector<8x8xf32>
    %cst_147 = arith.constant 0.353553385 : f32
    %439 = vector.broadcast %cst_147 : f32 to vector<8x8xf32>
    %440 = arith.mulf %438, %439 : vector<8x8xf32>
    %441 = vector.extract_strided_slice %284 {offsets = [8, 24], sizes = [8, 8], strides = [1, 1]} : vector<16x32xf32> to vector<8x8xf32>
    %442 = tpu.transpose %441, [1, 0] : vector<8x8xf32> -> vector<8x8xf32>
    %cst_148 = arith.constant dense<0.000000e+00> : vector<8x8xf32>
    %443 = tpu.matmul %440, %442, %cst_148 {dimension_numbers = #tpu.dot_dimension_numbers<[1], [0], [0], [1], [0, 0, 1, 1], [], []>} : vector<8x8xf32>, vector<8x8xf32>, vector<8x8xf32> -> vector<8x8xf32>
    %cst_149 = arith.constant dense<0xFF800000> : vector<8xf32>
    %444 = vector.multi_reduction <maximumf>, %443, %cst_149 [1] : vector<8x8xf32> to vector<8xf32>
    %445 = vector.shape_cast %444 : vector<8xf32> to vector<8x1xf32>
    %446 = vector.broadcast %445 : vector<8x1xf32> to vector<8x8xf32>
    %447 = arith.subf %443, %446 : vector<8x8xf32>
    %448 = math.exp %447 : vector<8x8xf32>
    %cst_150 = arith.constant dense<0.000000e+00> : vector<8xf32>
    %449 = vector.multi_reduction <add>, %448, %cst_150 [1] : vector<8x8xf32> to vector<8xf32>
    %450 = vector.shape_cast %449 : vector<8xf32> to vector<8x1xf32>
    %451 = tpu.reciprocal %450 {approx = true} : vector<8x1xf32> -> vector<8x1xf32>
    %452 = vector.broadcast %451 : vector<8x1xf32> to vector<8x8xf32>
    %453 = arith.mulf %448, %452 : vector<8x8xf32>
    %454 = vector.extract_strided_slice %288 {offsets = [8, 24], sizes = [8, 8], strides = [1, 1]} : vector<16x32xf32> to vector<8x8xf32>
    %cst_151 = arith.constant dense<0.000000e+00> : vector<8x8xf32>
    %455 = tpu.matmul %453, %454, %cst_151 {dimension_numbers = #tpu.dot_dimension_numbers<[1], [0], [0], [1], [0, 0, 1, 1], [], []>} : vector<8x8xf32>, vector<8x8xf32>, vector<8x8xf32> -> vector<8x8xf32>
    %456 = vector.extract_strided_slice %275 {offsets = [24, 0], sizes = [8, 32], strides = [1, 1]} : vector<32x32xf32> to vector<8x32xf32>
    %cst_152 = arith.constant dense<0.000000e+00> : vector<8x32xf32>
    %457 = tpu.matmul %455, %456, %cst_152 {dimension_numbers = #tpu.dot_dimension_numbers<[1], [0], [0], [1], [0, 0, 1, 1], [], []>} : vector<8x8xf32>, vector<8x32xf32>, vector<8x32xf32> -> vector<8x32xf32>
    %458 = arith.addf %437, %457 : vector<8x32xf32>
    %459 = tpu.concatenate %373, %458 in 0 : vector<8x32xf32>, vector<8x32xf32> -> vector<16x32xf32>
    %460 = vector.extract_strided_slice %269 {offsets = [3, 0], sizes = [1, 32], strides = [1, 1]} : vector<9x32xf32> to vector<1x32xf32>
    %461 = vector.broadcast %460 : vector<1x32xf32> to vector<16x32xf32>
    %462 = arith.addf %459, %461 : vector<16x32xf32>
    %463 = arith.addf %267, %462 : vector<16x32xf32>
    %464 = vector.extract_strided_slice %269 {offsets = [5, 0], sizes = [1, 32], strides = [1, 1]} : vector<9x32xf32> to vector<1x32xf32>
    %465 = vector.extract_strided_slice %269 {offsets = [6, 0], sizes = [1, 32], strides = [1, 1]} : vector<9x32xf32> to vector<1x32xf32>
    %cst_153 = arith.constant dense<0.000000e+00> : vector<16xf32>
    %466 = vector.multi_reduction <add>, %463, %cst_153 [1] : vector<16x32xf32> to vector<16xf32>
    %467 = vector.shape_cast %466 : vector<16xf32> to vector<16x1xf32>
    %cst_154 = arith.constant 3.200000e+01 : f32
    %468 = vector.broadcast %cst_154 : f32 to vector<16x1xf32>
    %469 = arith.divf %467, %468 : vector<16x1xf32>
    %470 = vector.broadcast %469 : vector<16x1xf32> to vector<16x32xf32>
    %471 = arith.subf %463, %470 : vector<16x32xf32>
    %472 = arith.mulf %471, %471 : vector<16x32xf32>
    %cst_155 = arith.constant dense<0.000000e+00> : vector<16xf32>
    %473 = vector.multi_reduction <add>, %472, %cst_155 [1] : vector<16x32xf32> to vector<16xf32>
    %474 = vector.shape_cast %473 : vector<16xf32> to vector<16x1xf32>
    %cst_156 = arith.constant 3.200000e+01 : f32
    %475 = vector.broadcast %cst_156 : f32 to vector<16x1xf32>
    %476 = arith.divf %474, %475 : vector<16x1xf32>
    %cst_157 = arith.constant 9.99999974E-6 : f32
    %477 = vector.broadcast %cst_157 : f32 to vector<16x1xf32>
    %478 = arith.addf %476, %477 : vector<16x1xf32>
    %479 = math.rsqrt %478 : vector<16x1xf32>
    %480 = vector.broadcast %479 : vector<16x1xf32> to vector<16x32xf32>
    %481 = arith.mulf %471, %480 : vector<16x32xf32>
    %482 = vector.broadcast %464 : vector<1x32xf32> to vector<16x32xf32>
    %483 = arith.mulf %481, %482 : vector<16x32xf32>
    %484 = vector.broadcast %465 : vector<1x32xf32> to vector<16x32xf32>
    %485 = arith.addf %483, %484 : vector<16x32xf32>
    %c1_158 = arith.constant 1 : index
    %c0_159 = arith.constant 0 : index
    %c0_160 = arith.constant 0 : index
    %486 = vector.load %arg6[%c1_158, %c0_159, %c0_160] : memref<2x32x64xf32, #tpu.memory_space<vmem>>, vector<1x32x64xf32>
    %487 = vector.shape_cast %486 : vector<1x32x64xf32> to vector<32x64xf32>
    %cst_161 = arith.constant dense<0.000000e+00> : vector<16x64xf32>
    %488 = tpu.matmul %485, %487, %cst_161 {dimension_numbers = #tpu.dot_dimension_numbers<[1], [0], [0], [1], [0, 0, 1, 1], [], []>} : vector<16x32xf32>, vector<32x64xf32>, vector<16x64xf32> -> vector<16x64xf32>
    %c1_162 = arith.constant 1 : index
    %c0_163 = arith.constant 0 : index
    %c0_164 = arith.constant 0 : index
    %489 = vector.load %arg9[%c1_162, %c0_163, %c0_164] : memref<2x1x64xf32, #tpu.memory_space<vmem>>, vector<1x1x64xf32>
    %490 = vector.shape_cast %489 : vector<1x1x64xf32> to vector<1x64xf32>
    %491 = vector.broadcast %490 : vector<1x64xf32> to vector<16x64xf32>
    %492 = arith.addf %488, %491 : vector<16x64xf32>
    %cst_165 = arith.constant 0.000000e+00 : f32
    %493 = vector.broadcast %cst_165 : f32 to vector<16x64xf32>
    %494 = arith.maximumf %492, %493 : vector<16x64xf32>
    %c1_166 = arith.constant 1 : index
    %c0_167 = arith.constant 0 : index
    %c0_168 = arith.constant 0 : index
    %495 = vector.load %arg7[%c1_166, %c0_167, %c0_168] : memref<2x64x32xf32, #tpu.memory_space<vmem>>, vector<1x64x32xf32>
    %496 = vector.shape_cast %495 : vector<1x64x32xf32> to vector<64x32xf32>
    %cst_169 = arith.constant dense<0.000000e+00> : vector<16x32xf32>
    %497 = tpu.matmul %494, %496, %cst_169 {dimension_numbers = #tpu.dot_dimension_numbers<[1], [0], [0], [1], [0, 0, 1, 1], [], []>} : vector<16x64xf32>, vector<64x32xf32>, vector<16x32xf32> -> vector<16x32xf32>
    %498 = vector.extract_strided_slice %269 {offsets = [4, 0], sizes = [1, 32], strides = [1, 1]} : vector<9x32xf32> to vector<1x32xf32>
    %499 = vector.broadcast %498 : vector<1x32xf32> to vector<16x32xf32>
    %500 = arith.addf %497, %499 : vector<16x32xf32>
    %501 = arith.addf %485, %500 : vector<16x32xf32>
    %502 = vector.extract_strided_slice %269 {offsets = [7, 0], sizes = [1, 32], strides = [1, 1]} : vector<9x32xf32> to vector<1x32xf32>
    %503 = vector.extract_strided_slice %269 {offsets = [8, 0], sizes = [1, 32], strides = [1, 1]} : vector<9x32xf32> to vector<1x32xf32>
    %cst_170 = arith.constant dense<0.000000e+00> : vector<16xf32>
    %504 = vector.multi_reduction <add>, %501, %cst_170 [1] : vector<16x32xf32> to vector<16xf32>
    %505 = vector.shape_cast %504 : vector<16xf32> to vector<16x1xf32>
    %cst_171 = arith.constant 3.200000e+01 : f32
    %506 = vector.broadcast %cst_171 : f32 to vector<16x1xf32>
    %507 = arith.divf %505, %506 : vector<16x1xf32>
    %508 = vector.broadcast %507 : vector<16x1xf32> to vector<16x32xf32>
    %509 = arith.subf %501, %508 : vector<16x32xf32>
    %510 = arith.mulf %509, %509 : vector<16x32xf32>
    %cst_172 = arith.constant dense<0.000000e+00> : vector<16xf32>
    %511 = vector.multi_reduction <add>, %510, %cst_172 [1] : vector<16x32xf32> to vector<16xf32>
    %512 = vector.shape_cast %511 : vector<16xf32> to vector<16x1xf32>
    %cst_173 = arith.constant 3.200000e+01 : f32
    %513 = vector.broadcast %cst_173 : f32 to vector<16x1xf32>
    %514 = arith.divf %512, %513 : vector<16x1xf32>
    %cst_174 = arith.constant 9.99999974E-6 : f32
    %515 = vector.broadcast %cst_174 : f32 to vector<16x1xf32>
    %516 = arith.addf %514, %515 : vector<16x1xf32>
    %517 = math.rsqrt %516 : vector<16x1xf32>
    %518 = vector.broadcast %517 : vector<16x1xf32> to vector<16x32xf32>
    %519 = arith.mulf %509, %518 : vector<16x32xf32>
    %520 = vector.broadcast %502 : vector<1x32xf32> to vector<16x32xf32>
    %521 = arith.mulf %519, %520 : vector<16x32xf32>
    %522 = vector.broadcast %503 : vector<1x32xf32> to vector<16x32xf32>
    %523 = arith.addf %521, %522 : vector<16x32xf32>
    %c0_175 = arith.constant 0 : index
    %c0_176 = arith.constant 0 : index
    %524 = vector.load %arg10[%c0_175, %c0_176] : memref<2x32xf32, #tpu.memory_space<vmem>>, vector<1x32xf32>
    %c1_177 = arith.constant 1 : index
    %c0_178 = arith.constant 0 : index
    %525 = vector.load %arg10[%c1_177, %c0_178] : memref<2x32xf32, #tpu.memory_space<vmem>>, vector<1x32xf32>
    %cst_179 = arith.constant dense<0.000000e+00> : vector<16xf32>
    %526 = vector.multi_reduction <add>, %523, %cst_179 [1] : vector<16x32xf32> to vector<16xf32>
    %527 = vector.shape_cast %526 : vector<16xf32> to vector<16x1xf32>
    %cst_180 = arith.constant 3.200000e+01 : f32
    %528 = vector.broadcast %cst_180 : f32 to vector<16x1xf32>
    %529 = arith.divf %527, %528 : vector<16x1xf32>
    %530 = vector.broadcast %529 : vector<16x1xf32> to vector<16x32xf32>
    %531 = arith.subf %523, %530 : vector<16x32xf32>
    %532 = arith.mulf %531, %531 : vector<16x32xf32>
    %cst_181 = arith.constant dense<0.000000e+00> : vector<16xf32>
    %533 = vector.multi_reduction <add>, %532, %cst_181 [1] : vector<16x32xf32> to vector<16xf32>
    %534 = vector.shape_cast %533 : vector<16xf32> to vector<16x1xf32>
    %cst_182 = arith.constant 3.200000e+01 : f32
    %535 = vector.broadcast %cst_182 : f32 to vector<16x1xf32>
    %536 = arith.divf %534, %535 : vector<16x1xf32>
    %cst_183 = arith.constant 9.99999974E-6 : f32
    %537 = vector.broadcast %cst_183 : f32 to vector<16x1xf32>
    %538 = arith.addf %536, %537 : vector<16x1xf32>
    %539 = math.rsqrt %538 : vector<16x1xf32>
    %540 = vector.broadcast %539 : vector<16x1xf32> to vector<16x32xf32>
    %541 = arith.mulf %531, %540 : vector<16x32xf32>
    %542 = vector.broadcast %524 : vector<1x32xf32> to vector<16x32xf32>
    %543 = arith.mulf %541, %542 : vector<16x32xf32>
    %544 = vector.broadcast %525 : vector<1x32xf32> to vector<16x32xf32>
    %545 = arith.addf %543, %544 : vector<16x32xf32>
    %546 = vector.extract_strided_slice %545 {offsets = [0, 0], sizes = [8, 32], strides = [1, 1]} : vector<16x32xf32> to vector<8x32xf32>
    %c0_184 = arith.constant 0 : index
    %c0_185 = arith.constant 0 : index
    %c0_186 = arith.constant 0 : index
    %547 = vector.load %arg11[%c0_184, %c0_185, %c0_186] : memref<8x2x32xf32, #tpu.memory_space<vmem>>, vector<8x1x32xf32>
    %548 = vector.shape_cast %547 : vector<8x1x32xf32> to vector<8x32xf32>
    %549 = vector.shape_cast %546 : vector<8x32xf32> to vector<8x1x32xf32>
    tpu.vector_store %arg11[%c0_184, %c0_185, %c0_186], %549 {strides = array<i32>} : memref<8x2x32xf32, #tpu.memory_space<vmem>>, vector<8x1x32xf32>,
    %550 = vector.extract_strided_slice %545 {offsets = [8, 0], sizes = [8, 32], strides = [1, 1]} : vector<16x32xf32> to vector<8x32xf32>
    %c0_187 = arith.constant 0 : index
    %c1_188 = arith.constant 1 : index
    %c0_189 = arith.constant 0 : index
    %551 = vector.load %arg11[%c0_187, %c1_188, %c0_189] : memref<8x2x32xf32, #tpu.memory_space<vmem>>, vector<8x1x32xf32>
    %552 = vector.shape_cast %551 : vector<8x1x32xf32> to vector<8x32xf32>
    %553 = vector.shape_cast %550 : vector<8x32xf32> to vector<8x1x32xf32>
    tpu.vector_store %arg11[%c0_187, %c1_188, %c0_189], %553 {strides = array<i32>} : memref<8x2x32xf32, #tpu.memory_space<vmem>>, vector<8x1x32xf32>,
    return
  }
  func.func @transform_0(%arg0: i32) -> (i32, i32, i32) {
    %c0_i32 = arith.constant 0 : i32
    %c0_i32_0 = arith.constant 0 : i32
    %c0_i32_1 = arith.constant 0 : i32
    %c0_i32_2 = arith.constant 0 : i32
    return %c0_i32, %c0_i32_0, %c0_i32_1 : i32, i32, i32
  }
  func.func @transform_1(%arg0: i32) -> (i32, i32, i32) {
    %c0_i32 = arith.constant 0 : i32
    %c0_i32_0 = arith.constant 0 : i32
    %c0_i32_1 = arith.constant 0 : i32
    %c0_i32_2 = arith.constant 0 : i32
    return %c0_i32, %c0_i32_0, %c0_i32_1 : i32, i32, i32
  }
  func.func @transform_2(%arg0: i32) -> (i32, i32, i32) {
    %c0_i32 = arith.constant 0 : i32
    %c0_i32_0 = arith.constant 0 : i32
    %c0_i32_1 = arith.constant 0 : i32
    %c0_i32_2 = arith.constant 0 : i32
    return %c0_i32, %c0_i32_0, %c0_i32_1 : i32, i32, i32
  }
  func.func @transform_3(%arg0: i32) -> (i32, i32, i32) {
    %c0_i32 = arith.constant 0 : i32
    %c0_i32_0 = arith.constant 0 : i32
    %c0_i32_1 = arith.constant 0 : i32
    %c0_i32_2 = arith.constant 0 : i32
    return %c0_i32, %c0_i32_0, %c0_i32_1 : i32, i32, i32
  }
  func.func @transform_4(%arg0: i32) -> (i32, i32, i32) {
    %c0_i32 = arith.constant 0 : i32
    %c0_i32_0 = arith.constant 0 : i32
    %c0_i32_1 = arith.constant 0 : i32
    %c0_i32_2 = arith.constant 0 : i32
    return %c0_i32, %c0_i32_0, %c0_i32_1 : i32, i32, i32
  }
  func.func @transform_5(%arg0: i32) -> (i32, i32, i32) {
    %c0_i32 = arith.constant 0 : i32
    %c0_i32_0 = arith.constant 0 : i32
    %c0_i32_1 = arith.constant 0 : i32
    %c0_i32_2 = arith.constant 0 : i32
    return %c0_i32, %c0_i32_0, %c0_i32_1 : i32, i32, i32
  }
  func.func @transform_6(%arg0: i32) -> (i32, i32, i32) {
    %c0_i32 = arith.constant 0 : i32
    %c0_i32_0 = arith.constant 0 : i32
    %c0_i32_1 = arith.constant 0 : i32
    %c0_i32_2 = arith.constant 0 : i32
    return %c0_i32, %c0_i32_0, %c0_i32_1 : i32, i32, i32
  }
  func.func @transform_7(%arg0: i32) -> (i32, i32, i32) {
    %c0_i32 = arith.constant 0 : i32
    %c0_i32_0 = arith.constant 0 : i32
    %c0_i32_1 = arith.constant 0 : i32
    %c0_i32_2 = arith.constant 0 : i32
    return %c0_i32, %c0_i32_0, %c0_i32_1 : i32, i32, i32
  }
  func.func @transform_8(%arg0: i32) -> (i32, i32, i32) {
    %c0_i32 = arith.constant 0 : i32
    %c0_i32_0 = arith.constant 0 : i32
    %c0_i32_1 = arith.constant 0 : i32
    %c0_i32_2 = arith.constant 0 : i32
    return %c0_i32, %c0_i32_0, %c0_i32_1 : i32, i32, i32
  }
  func.func @transform_9(%arg0: i32) -> (i32, i32) {
    %c0_i32 = arith.constant 0 : i32
    %c0_i32_0 = arith.constant 0 : i32
    %c0_i32_1 = arith.constant 0 : i32
    return %c0_i32, %c0_i32_0 : i32, i32
  }
  func.func @transform_10(%arg0: i32) -> (i32, i32, i32) {
    %c0_i32 = arith.constant 0 : i32
    %c0_i32_0 = arith.constant 0 : i32
    %c0_i32_1 = arith.constant 0 : i32
    %c0_i32_2 = arith.constant 0 : i32
    return %c0_i32, %c0_i32_0, %c0_i32_1 : i32, i32, i32
  }
}

</mosaic_0001>

<llo_original>
// kernel: transformer_encoder.1
$region0: #{transformer_encoder.1}
  #allocation0 [shape = 'u32[]', space=smem, size = 0x4, offset = 0x4, fixed_abs, tag = 'smem constant byte address 0x4 - core index']
  #allocation1 [shape = 'u32[144,128]{1,0:T(1,128)}', space=vmem, size = 0x12000, scoped, tag = 'internal scratch']
  %s0 = inlined_call_operand.vmem [shape: f32[8,2,32], index: 0, kind: input, shape index: {}]
  %s1 = inlined_call_operand.vmem [shape: f32[8,2,32], index: 1, kind: input, shape index: {}]
  %s2 = inlined_call_operand.vmem [shape: f32[2,32,32], index: 2, kind: input, shape index: {}]
  %s3 = inlined_call_operand.vmem [shape: f32[2,32,64], index: 3, kind: input, shape index: {}]
  %s4 = inlined_call_operand.vmem [shape: f32[2,32,32], index: 4, kind: input, shape index: {}]
  %s5 = inlined_call_operand.hbm [shape: f32[2,32,64], index: 5, kind: input, shape index: {}]
  %s6 = inlined_call_operand.vmem [shape: f32[2,64,32], index: 6, kind: input, shape index: {}]
  %s7 = inlined_call_operand.vmem [shape: f32[2,9,32], index: 7, kind: input, shape index: {}]
  %s8 = inlined_call_operand.vmem [shape: f32[2,1,64], index: 8, kind: input, shape index: {}]
  %s9 = inlined_call_operand.vmem [shape: f32[2,32], index: 9, kind: input, shape index: {}]
  %s10 = inlined_call_operand.hbm [shape: f32[8,2,32], index: 10, kind: output, shape index: {}]
  %s11 = sld [smem:[#allocation0]]
  $region54: #{transformer_encoder.1} parent=0
    _
  %s13 = ssub.s32 1, %s11
  %s14 = scalar_select 0, %s13, %s11
  $region1: #{transformer_encoder.1} parent=0
    #allocation2 [shape = 'u8[32768]{0}', space=vmem, size = 0x8000, scoped, tag = 'input window, operand 5, single buffered']
    #allocation3 [shape = 's32[1]{0}', space=sflag, size = 0x4, scoped, tag = 'scoped memory for transformer_encoder.1']
    #allocation4 [shape = 's32[1]{0}', space=sflag, size = 0x4, scoped, tag = 'scoped memory for transformer_encoder.1']
    #allocation5 [shape = 'u8[8192]{0}', space=vmem, size = 0x2000, scoped, tag = 'output window, operand 0, single buffered']
    %15 = vsyncpa [#allocation3], 0
    %16 = vsyncpa [#allocation4], 0
    // Predicated region
    $region2: #{transformer_encoder.1} parent=1 // pred_check
      _
    $region3: #{transformer_encoder.1} parent=1 // pred_check_branch
      %18 = sbr.rel (0) target = $region5
    $region4: #{transformer_encoder.1} parent=1 // pred_region
      _
    $region5: #{transformer_encoder.1} parent=1 // pred_fallthru
      _
    // Predicated region
    $region6: #{transformer_encoder.1} parent=1 // pred_check
      _
    $region7: #{transformer_encoder.1} parent=1 // pred_check_branch
      %20 = sbr.rel (0) target = $region9
    $region8: #{transformer_encoder.1} parent=1 // pred_region
      _
    $region9: #{transformer_encoder.1} parent=1 // pred_fallthru
      _
    // Predicated region
    $region10: #{transformer_encoder.1} parent=1 // pred_check
      _
    $region11: #{transformer_encoder.1} parent=1 // pred_check_branch
      %22 = sbr.rel (0) target = $region13
    $region12: #{transformer_encoder.1} parent=1 // pred_region
      _
    $region13: #{transformer_encoder.1} parent=1 // pred_fallthru
      _
    // Predicated region
    $region14: #{transformer_encoder.1} parent=1 // pred_check
      _
    $region15: #{transformer_encoder.1} parent=1 // pred_check_branch
      %24 = sbr.rel (0) target = $region17
    $region16: #{transformer_encoder.1} parent=1 // pred_region
      _
    $region17: #{transformer_encoder.1} parent=1 // pred_fallthru
      _
    // Predicated region
    $region18: #{transformer_encoder.1} parent=1 // pred_check
      _
    $region19: #{transformer_encoder.1} parent=1 // pred_check_branch
      %26 = sbr.rel (0) target = $region21
    $region20: #{transformer_encoder.1} parent=1 // pred_region
      _
    $region21: #{transformer_encoder.1} parent=1 // pred_fallthru
      _
    // Predicated region
    $region22: #{transformer_encoder.1} parent=1 // pred_check
      _
    $region23: #{transformer_encoder.1} parent=1 // pred_check_branch
      %28 = sbr.rel (0) target = $region25
    $region24: #{transformer_encoder.1} parent=1 // pred_region
      %s30 = ssub.s32 1024, 1024
      %31 = vsyncadd [#allocation3], %s30
      %s32 = sshll.u32 [#allocation2], 4
      %s33 = int_to_ptr.vmem [resolvable:$true] %s32
      %38 = dma.hbm_to_vmem [thread:$0]  %s5, 1024, %s33, [#allocation3], 128, 128, 8
    $region25: #{transformer_encoder.1} parent=1 // pred_fallthru
      _
    // Predicated region
    $region26: #{transformer_encoder.1} parent=1 // pred_check
      _
    $region27: #{transformer_encoder.1} parent=1 // pred_check_branch
      %40 = sbr.rel (0) target = $region29
    $region28: #{transformer_encoder.1} parent=1 // pred_region
      _
    $region29: #{transformer_encoder.1} parent=1 // pred_fallthru
      _
    // Predicated region
    $region30: #{transformer_encoder.1} parent=1 // pred_check
      _
    $region31: #{transformer_encoder.1} parent=1 // pred_check_branch
      %42 = sbr.rel (0) target = $region33
    $region32: #{transformer_encoder.1} parent=1 // pred_region
      _
    $region33: #{transformer_encoder.1} parent=1 // pred_fallthru
      _
    // Predicated region
    $region34: #{transformer_encoder.1} parent=1 // pred_check
      _
    $region35: #{transformer_encoder.1} parent=1 // pred_check_branch
      %44 = sbr.rel (0) target = $region37
    $region36: #{transformer_encoder.1} parent=1 // pred_region
      _
    $region37: #{transformer_encoder.1} parent=1 // pred_fallthru
      _
    // Predicated region
    $region38: #{transformer_encoder.1} parent=1 // pred_check
      _
    $region39: #{transformer_encoder.1} parent=1 // pred_check_branch
      %46 = sbr.rel (0) target = $region41
    $region40: #{transformer_encoder.1} parent=1 // pred_region
      _
    $region41: #{transformer_encoder.1} parent=1 // pred_fallthru
      _
    // Predicated region
    $region42: #{transformer_encoder.1} parent=1 // pred_check
      _
    $region43: #{transformer_encoder.1} parent=1 // pred_check_branch
      %48 = sbr.rel (0) target = $region45
    $region44: #{transformer_encoder.1} parent=1 // pred_region
      %49 = dma.done [#allocation3], 1024
    $region45: #{transformer_encoder.1} parent=1 // pred_fallthru
      _
    %v50 = vld [vmem:[%s0] sm:$0x3]
    %v51 = vld [vmem:[%s0 + $0x2] sm:$0x3]
    %v52 = vld [vmem:[%s0 + $0x4] sm:$0x3]
    %v53 = vld [vmem:[%s0 + $0x6] sm:$0x3]
    %v54 = vld [vmem:[%s0 + $0x8] sm:$0x3]
    %v55 = vld [vmem:[%s0 + $0xa] sm:$0x3]
    %v56 = vld [vmem:[%s0 + $0xc] sm:$0x3]
    %v57 = vld [vmem:[%s0 + $0xe] sm:$0x3]
    %v58 = vld [vmem:[%s1] sm:$0x3]
    %v59 = vld [vmem:[%s1 + $0x2] sm:$0x3]
    %v60 = vld [vmem:[%s1 + $0x4] sm:$0x3]
    %v61 = vld [vmem:[%s1 + $0x6] sm:$0x3]
    %v62 = vld [vmem:[%s1 + $0x8] sm:$0x3]
    %v63 = vld [vmem:[%s1 + $0xa] sm:$0x3]
    %v64 = vld [vmem:[%s1 + $0xc] sm:$0x3]
    %v65 = vld [vmem:[%s1 + $0xe] sm:$0x3]
    %v74 = vrot.slane %v51, 7
    %vm75 = vcmask 1041409
    %v76 = vsel %vm75, %v74, %v50
    %v77 = vrot.slane %v52, 6
    %vm78 = vcmask 1042434
    %v79 = vsel %vm78, %v77, %v76
    %v80 = vrot.slane %v53, 5
    %vm81 = vcmask 1043459
    %v82 = vsel %vm81, %v80, %v79
    %v83 = vrot.slane %v54, 4
    %vm84 = vcmask 1044484
    %v85 = vsel %vm84, %v83, %v82
    %v86 = vrot.slane %v55, 3
    %vm87 = vcmask 1045509
    %v88 = vsel %vm87, %v86, %v85
    %v89 = vrot.slane %v56, 2
    %vm90 = vcmask 1046534
    %v91 = vsel %vm90, %v89, %v88
    %v92 = vrot.slane %v57, 1
    %vm93 = vcmask 1047559
    %v94 = vsel %vm93, %v92, %v91
    %v96 = vrot.slane %v50, 1
    %v97 = vsel %vm75, %v51, %v96
    %v98 = vrot.slane %v52, 7
    %v99 = vsel %vm78, %v98, %v97
    %v100 = vrot.slane %v53, 6
    %v101 = vsel %vm81, %v100, %v99
    %v102 = vrot.slane %v54, 5
    %v103 = vsel %vm84, %v102, %v101
    %v104 = vrot.slane %v55, 4
    %v105 = vsel %vm87, %v104, %v103
    %v106 = vrot.slane %v56, 3
    %v107 = vsel %vm90, %v106, %v105
    %v108 = vrot.slane %v57, 2
    %v109 = vsel %vm93, %v108, %v107
    %v119 = vrot.slane %v59, 7
    %v120 = vsel %vm75, %v119, %v58
    %v121 = vrot.slane %v60, 6
    %v122 = vsel %vm78, %v121, %v120
    %v123 = vrot.slane %v61, 5
    %v124 = vsel %vm81, %v123, %v122
    %v125 = vrot.slane %v62, 4
    %v126 = vsel %vm84, %v125, %v124
    %v127 = vrot.slane %v63, 3
    %v128 = vsel %vm87, %v127, %v126
    %v129 = vrot.slane %v64, 2
    %v130 = vsel %vm90, %v129, %v128
    %v131 = vrot.slane %v65, 1
    %v132 = vsel %vm93, %v131, %v130
    %v133 = vrot.slane %v58, 1
    %v134 = vsel %vm75, %v59, %v133
    %v135 = vrot.slane %v60, 7
    %v136 = vsel %vm78, %v135, %v134
    %v137 = vrot.slane %v61, 6
    %v138 = vsel %vm81, %v137, %v136
    %v139 = vrot.slane %v62, 5
    %v140 = vsel %vm84, %v139, %v138
    %v141 = vrot.slane %v63, 4
    %v142 = vsel %vm87, %v141, %v140
    %v143 = vrot.slane %v64, 3
    %v144 = vsel %vm90, %v143, %v142
    %v145 = vrot.slane %v65, 2
    %v146 = vsel %vm93, %v145, %v144
    %v147 = vld [vmem:[%s7] sm:$0xff]
    %v148 = vld [vmem:[%s7 + $0x8] sm:$0x1]
    %v149 = vld [vmem:[%s2] sm:$0xff]
    %v150 = vld [vmem:[%s2 + $0x8] sm:$0xff]
    %v151 = vld [vmem:[%s2 + $0x10] sm:$0xff]
    %v152 = vld [vmem:[%s2 + $0x18] sm:$0xff]
    %v153 = vld [vmem:[%s3] sm:$0xff]
    %v154 = vld [vmem:[%s3 + $0x8] sm:$0xff]
    %v155 = vld [vmem:[%s3 + $0x10] sm:$0xff]
    %v156 = vld [vmem:[%s3 + $0x18] sm:$0xff]
    %v157 = vld [vmem:[%s4] sm:$0xff]
    %v158 = vld [vmem:[%s4 + $0x8] sm:$0xff]
    %v159 = vld [vmem:[%s4 + $0x10] sm:$0xff]
    %v160 = vld [vmem:[%s4 + $0x18] sm:$0xff]
    %v161 = vlaneseq
    %v162 = vshrl.u32 %v161, 7
    %v163 = vsub.s32 0, %v162
    %v164 = vrot.slane %v147, %v163
    %vm165 = vcmask 261120
    %v166 = vsel %vm165, %v94, 0
    %v168 = vsel %vm165, %v109, 0
    %170 = vmatprep.subr.mxu0 0.0
    %171 = vmatpush1.msra.mxu0 0.0
    %172 = vmatprep.subr.mxu0 0.0
    %173 = vmatpush1.msra.mxu0 0.0
    %174 = vmatprep.subr.mxu0 0.0
    %175 = vmatpush1.msra.mxu0 0.0
    %176 = vmatprep.subr.mxu0 0.0
    %177 = vmatpush1.msra.mxu0 0.0
    %178 = vmatprep.subr.mxu0 0.0
    %179 = vmatpush1.msra.mxu0 0.0
    %180 = vmatprep.subr.mxu0 0.0
    %181 = vmatpush1.msra.mxu0 0.0
    %182 = vmatprep.subr.mxu0 0.0
    %183 = vmatpush1.msra.mxu0 0.0
    %184 = vmatprep.subr.mxu0 0.0
    %185 = vmatpush1.msra.mxu0 0.0
    %186 = vmatprep.subr.mxu0 0.0
    %187 = vmatpush1.msra.mxu0 0.0
    %188 = vmatprep.subr.mxu0 0.0
    %189 = vmatpush1.msra.mxu0 0.0
    %190 = vmatprep.subr.mxu0 0.0
    %191 = vmatpush1.msra.mxu0 0.0
    %192 = vmatprep.subr.mxu0 0.0
    %193 = vmatpush1.msra.mxu0 0.0
    %194 = vmatprep.subr.mxu0 0.0
    %195 = vmatpush1.msra.mxu0 %v152
    %196 = vmatprep.subr.mxu0 0.0
    %197 = vmatpush1.msra.mxu0 %v151
    %198 = vmatprep.subr.mxu0 0.0
    %199 = vmatpush1.msra.mxu0 %v150
    %200 = vmatprep.subr.mxu0 0.0
    %201 = vmatpush1.msra.mxu0 %v149
    %202 = vmatprep.subr.mxu0 0.0
    %203 = vmatpush2.msra.mxu0 0.0
    %204 = vmatprep.subr.mxu0 0.0
    %205 = vmatpush2.msra.mxu0 0.0
    %206 = vmatprep.subr.mxu0 0.0
    %207 = vmatpush2.msra.mxu0 0.0
    %208 = vmatprep.subr.mxu0 0.0
    %209 = vmatpush2.msra.mxu0 0.0
    %210 = vmatprep.subr.mxu0 0.0
    %211 = vmatpush2.msra.mxu0 0.0
    %212 = vmatprep.subr.mxu0 0.0
    %213 = vmatpush2.msra.mxu0 0.0
    %214 = vmatprep.subr.mxu0 0.0
    %215 = vmatpush2.msra.mxu0 0.0
    %216 = vmatprep.subr.mxu0 0.0
    %217 = vmatpush2.msra.mxu0 0.0
    %218 = vmatprep.subr.mxu0 0.0
    %219 = vmatpush2.msra.mxu0 0.0
    %220 = vmatprep.subr.mxu0 0.0
    %221 = vmatpush2.msra.mxu0 0.0
    %222 = vmatprep.subr.mxu0 0.0
    %223 = vmatpush2.msra.mxu0 0.0
    %224 = vmatprep.subr.mxu0 0.0
    %225 = vmatpush2.msra.mxu0 0.0
    %226 = vmatprep.subr.mxu0 0.0
    %227 = vmatpush2.msra.mxu0 0.0
    %228 = vmatprep.subr.mxu0 0.0
    %229 = vmatpush2.msra.mxu0 0.0
    %230 = vmatprep.subr.mxu0 0.0
    %231 = vmatpush2.msra.mxu0 0.0
    %232 = vmatprep.subr.mxu0 0.0
    %233 = vmatpush2.msra.mxu0 0.0
    %234 = vmatprep.mubr.f32.mxu0 0.0
    %235 = vmatmul.mubr.f32.gmra.mxu0 %v166
    %v236 = vpop.f32.mrf.mxu0
    %v237 = vadd.f32 %v164, %v236
    %v238 = vpop.f32.mrf.mxu0
    %239 = vmatprep.mubr.f32.mxu0 0.0
    %240 = vmatmul.mubr.f32.gmra.mxu0 %v168
    %v241 = vpop.f32.mrf.mxu0
    %v242 = vadd.f32 %v164, %v241
    %v243 = vpop.f32.mrf.mxu0
    %244 = vdwg.mxu0
    %v245 = vsel %vm165, %v132, 0
    %v247 = vsel %vm165, %v146, 0
    %249 = vmatprep.subr.mxu0 0.0
    %250 = vmatpush1.msra.mxu0 0.0
    %251 = vmatprep.subr.mxu0 0.0
    %252 = vmatpush1.msra.mxu0 0.0
    %253 = vmatprep.subr.mxu0 0.0
    %254 = vmatpush1.msra.mxu0 0.0
    %255 = vmatprep.subr.mxu0 0.0
    %256 = vmatpush1.msra.mxu0 0.0
    %257 = vmatprep.subr.mxu0 0.0
    %258 = vmatpush1.msra.mxu0 0.0
    %259 = vmatprep.subr.mxu0 0.0
    %260 = vmatpush1.msra.mxu0 0.0
    %261 = vmatprep.subr.mxu0 0.0
    %262 = vmatpush1.msra.mxu0 0.0
    %263 = vmatprep.subr.mxu0 0.0
    %264 = vmatpush1.msra.mxu0 0.0
    %265 = vmatprep.subr.mxu0 0.0
    %266 = vmatpush1.msra.mxu0 0.0
    %267 = vmatprep.subr.mxu0 0.0
    %268 = vmatpush1.msra.mxu0 0.0
    %269 = vmatprep.subr.mxu0 0.0
    %270 = vmatpush1.msra.mxu0 0.0
    %271 = vmatprep.subr.mxu0 0.0
    %272 = vmatpush1.msra.mxu0 0.0
    %273 = vmatprep.subr.mxu0 0.0
    %274 = vmatpush1.msra.mxu0 %v156
    %275 = vmatprep.subr.mxu0 0.0
    %276 = vmatpush1.msra.mxu0 %v155
    %277 = vmatprep.subr.mxu0 0.0
    %278 = vmatpush1.msra.mxu0 %v154
    %279 = vmatprep.subr.mxu0 0.0
    %280 = vmatpush1.msra.mxu0 %v153
    %281 = vmatprep.subr.mxu0 0.0
    %282 = vmatpush2.msra.mxu0 0.0
    %283 = vmatprep.subr.mxu0 0.0
    %284 = vmatpush2.msra.mxu0 0.0
    %285 = vmatprep.subr.mxu0 0.0
    %286 = vmatpush2.msra.mxu0 0.0
    %287 = vmatprep.subr.mxu0 0.0
    %288 = vmatpush2.msra.mxu0 0.0
    %289 = vmatprep.subr.mxu0 0.0
    %290 = vmatpush2.msra.mxu0 0.0
    %291 = vmatprep.subr.mxu0 0.0
    %292 = vmatpush2.msra.mxu0 0.0
    %293 = vmatprep.subr.mxu0 0.0
    %294 = vmatpush2.msra.mxu0 0.0
    %295 = vmatprep.subr.mxu0 0.0
    %296 = vmatpush2.msra.mxu0 0.0
    %297 = vmatprep.subr.mxu0 0.0
    %298 = vmatpush2.msra.mxu0 0.0
    %299 = vmatprep.subr.mxu0 0.0
    %300 = vmatpush2.msra.mxu0 0.0
    %301 = vmatprep.subr.mxu0 0.0
    %302 = vmatpush2.msra.mxu0 0.0
    %303 = vmatprep.subr.mxu0 0.0
    %304 = vmatpush2.msra.mxu0 0.0
    %305 = vmatprep.subr.mxu0 0.0
    %306 = vmatpush2.msra.mxu0 0.0
    %307 = vmatprep.subr.mxu0 0.0
    %308 = vmatpush2.msra.mxu0 0.0
    %309 = vmatprep.subr.mxu0 0.0
    %310 = vmatpush2.msra.mxu0 0.0
    %311 = vmatprep.subr.mxu0 0.0
    %312 = vmatpush2.msra.mxu0 0.0
    %313 = vmatprep.mubr.f32.mxu0 0.0
    %314 = vmatmul.mubr.f32.gmra.mxu0 %v245
    %v315 = vpop.f32.mrf.mxu0
    %v316 = vadd.f32 0.0, %v315
    %v317 = vpop.f32.mrf.mxu0
    %318 = vmatprep.mubr.f32.mxu0 0.0
    %319 = vmatmul.mubr.f32.gmra.mxu0 %v247
    %v320 = vpop.f32.mrf.mxu0
    %v321 = vadd.f32 0.0, %v320
    %v322 = vpop.f32.mrf.mxu0
    %323 = vdwg.mxu0
    %v324 = vlaneseq
    %v325 = vshrl.u32 %v324, 7
    %v326 = vsub.s32 1, %v325
    %v327 = vrot.slane %v147, %v326
    %v328 = vadd.f32 %v316, %v327
    %v329 = vadd.f32 %v321, %v327
    %v330 = vlaneseq
    %v331 = vshrl.u32 %v330, 7
    %v332 = vsub.s32 2, %v331
    %v333 = vrot.slane %v147, %v332
    %335 = vrot.lane.b32.xlu0 %v333, 32
    %v336 = vpop.permute.xlu0 %335
    %v338 = vadd.f32 %v316, %v336
    %v339 = vadd.f32 %v321, %v336
    %v340 = vmul.f32 %v237, 0.35355338
    %vm341 = vcmask 64512
    %v343 = vsel %vm341, %v340, 0
    %v346 = vsel %vm341, %v328, 0
    %348 = vmatprep.subr.mxu0 0.0
    %349 = vmatpush1.xpose.msra.mxu0 0.0
    %350 = vmatprep.subr.mxu0 0.0
    %351 = vmatpush1.xpose.msra.mxu0 0.0
    %352 = vmatprep.subr.mxu0 0.0
    %353 = vmatpush1.xpose.msra.mxu0 0.0
    %354 = vmatprep.subr.mxu0 0.0
    %355 = vmatpush1.xpose.msra.mxu0 0.0
    %356 = vmatprep.subr.mxu0 0.0
    %357 = vmatpush1.xpose.msra.mxu0 0.0
    %358 = vmatprep.subr.mxu0 0.0
    %359 = vmatpush1.xpose.msra.mxu0 0.0
    %360 = vmatprep.subr.mxu0 0.0
    %361 = vmatpush1.xpose.msra.mxu0 0.0
    %362 = vmatprep.subr.mxu0 0.0
    %363 = vmatpush1.xpose.msra.mxu0 0.0
    %364 = vmatprep.subr.mxu0 0.0
    %365 = vmatpush1.xpose.msra.mxu0 0.0
    %366 = vmatprep.subr.mxu0 0.0
    %367 = vmatpush1.xpose.msra.mxu0 0.0
    %368 = vmatprep.subr.mxu0 0.0
    %369 = vmatpush1.xpose.msra.mxu0 0.0
    %370 = vmatprep.subr.mxu0 0.0
    %371 = vmatpush1.xpose.msra.mxu0 0.0
    %372 = vmatprep.subr.mxu0 0.0
    %373 = vmatpush1.xpose.msra.mxu0 0.0
    %374 = vmatprep.subr.mxu0 0.0
    %375 = vmatpush1.xpose.msra.mxu0 0.0
    %376 = vmatprep.subr.mxu0 0.0
    %377 = vmatpush1.xpose.msra.mxu0 0.0
    %378 = vmatprep.subr.mxu0 0.0
    %379 = vmatpush1.xpose.msra.mxu0 %v346
    %380 = vmatprep.subr.mxu0 0.0
    %381 = vmatpush2.xpose.msra.mxu0 0.0
    %382 = vmatprep.subr.mxu0 0.0
    %383 = vmatpush2.xpose.msra.mxu0 0.0
    %384 = vmatprep.subr.mxu0 0.0
    %385 = vmatpush2.xpose.msra.mxu0 0.0
    %386 = vmatprep.subr.mxu0 0.0
    %387 = vmatpush2.xpose.msra.mxu0 0.0
    %388 = vmatprep.subr.mxu0 0.0
    %389 = vmatpush2.xpose.msra.mxu0 0.0
    %390 = vmatprep.subr.mxu0 0.0
    %391 = vmatpush2.xpose.msra.mxu0 0.0
    %392 = vmatprep.subr.mxu0 0.0
    %393 = vmatpush2.xpose.msra.mxu0 0.0
    %394 = vmatprep.subr.mxu0 0.0
    %395 = vmatpush2.xpose.msra.mxu0 0.0
    %396 = vmatprep.subr.mxu0 0.0
    %397 = vmatpush2.xpose.msra.mxu0 0.0
    %398 = vmatprep.subr.mxu0 0.0
    %399 = vmatpush2.xpose.msra.mxu0 0.0
    %400 = vmatprep.subr.mxu0 0.0
    %401 = vmatpush2.xpose.msra.mxu0 0.0
    %402 = vmatprep.subr.mxu0 0.0
    %403 = vmatpush2.xpose.msra.mxu0 0.0
    %404 = vmatprep.subr.mxu0 0.0
    %405 = vmatpush2.xpose.msra.mxu0 0.0
    %406 = vmatprep.subr.mxu0 0.0
    %407 = vmatpush2.xpose.msra.mxu0 0.0
    %408 = vmatprep.subr.mxu0 0.0
    %409 = vmatpush2.xpose.msra.mxu0 0.0
    %410 = vmatprep.subr.mxu0 0.0
    %411 = vmatpush2.xpose.msra.mxu0 0.0
    %412 = vmatprep.mubr.f32.mxu0 0.0
    %413 = vmatmul.mubr.f32.gmra.mxu0 %v343
    %v414 = vpop.f32.mrf.mxu0
    %v415 = vadd.f32 0.0, %v414
    %v416 = vpop.f32.mrf.mxu0
    %417 = vdwg.mxu0
    %v418 = vsel %vm341, %v415, -inf
    %419 = vmax.xlane.f32.xlu0 %v418
    %v420 = vpop.xlane.xlu0 %419
    %v421 = vsub.f32 %v415, %v420
    %v422 = vmul.f32 %v421, 1.442695
    %v423 = vpow.pop %v422
    %v424 = vsel %vm341, %v423, 0.0
    %425 = vadd.xlane.f32.xlu0 %v424
    %v426 = vpop.xlane.xlu0 %425
    %v427 = vrcp.pop %v426
    %v428 = vmul.f32 %v423, %v427
    %430 = vrot.lane.b32.xlu0 %v338, 96
    %v431 = vpop.permute.xlu0 %430
    %v434 = vsel %vm341, %v428, 0
    %436 = vmatprep.subr.mxu0 0.0
    %437 = vmatpush1.msra.mxu0 0.0
    %438 = vmatprep.subr.mxu0 0.0
    %439 = vmatpush1.msra.mxu0 0.0
    %440 = vmatprep.subr.mxu0 0.0
    %441 = vmatpush1.msra.mxu0 0.0
    %442 = vmatprep.subr.mxu0 0.0
    %443 = vmatpush1.msra.mxu0 0.0
    %444 = vmatprep.subr.mxu0 0.0
    %445 = vmatpush1.msra.mxu0 0.0
    %446 = vmatprep.subr.mxu0 0.0
    %447 = vmatpush1.msra.mxu0 0.0
    %448 = vmatprep.subr.mxu0 0.0
    %449 = vmatpush1.msra.mxu0 0.0
    %450 = vmatprep.subr.mxu0 0.0
    %451 = vmatpush1.msra.mxu0 0.0
    %452 = vmatprep.subr.mxu0 0.0
    %453 = vmatpush1.msra.mxu0 0.0
    %454 = vmatprep.subr.mxu0 0.0
    %455 = vmatpush1.msra.mxu0 0.0
    %456 = vmatprep.subr.mxu0 0.0
    %457 = vmatpush1.msra.mxu0 0.0
    %458 = vmatprep.subr.mxu0 0.0
    %459 = vmatpush1.msra.mxu0 0.0
    %460 = vmatprep.subr.mxu0 0.0
    %461 = vmatpush1.msra.mxu0 0.0
    %462 = vmatprep.subr.mxu0 0.0
    %463 = vmatpush1.msra.mxu0 0.0
    %464 = vmatprep.subr.mxu0 0.0
    %465 = vmatpush1.msra.mxu0 0.0
    %466 = vmatprep.subr.mxu0 0.0
    %467 = vmatpush1.msra.mxu0 %v431
    %468 = vmatprep.subr.mxu0 0.0
    %469 = vmatpush2.msra.mxu0 0.0
    %470 = vmatprep.subr.mxu0 0.0
    %471 = vmatpush2.msra.mxu0 0.0
    %472 = vmatprep.subr.mxu0 0.0
    %473 = vmatpush2.msra.mxu0 0.0
    %474 = vmatprep.subr.mxu0 0.0
    %475 = vmatpush2.msra.mxu0 0.0
    %476 = vmatprep.subr.mxu0 0.0
    %477 = vmatpush2.msra.mxu0 0.0
    %478 = vmatprep.subr.mxu0 0.0
    %479 = vmatpush2.msra.mxu0 0.0
    %480 = vmatprep.subr.mxu0 0.0
    %481 = vmatpush2.msra.mxu0 0.0
    %482 = vmatprep.subr.mxu0 0.0
    %483 = vmatpush2.msra.mxu0 0.0
    %484 = vmatprep.subr.mxu0 0.0
    %485 = vmatpush2.msra.mxu0 0.0
    %486 = vmatprep.subr.mxu0 0.0
    %487 = vmatpush2.msra.mxu0 0.0
    %488 = vmatprep.subr.mxu0 0.0
    %489 = vmatpush2.msra.mxu0 0.0
    %490 = vmatprep.subr.mxu0 0.0
    %491 = vmatpush2.msra.mxu0 0.0
    %492 = vmatprep.subr.mxu0 0.0
    %493 = vmatpush2.msra.mxu0 0.0
    %494 = vmatprep.subr.mxu0 0.0
    %495 = vmatpush2.msra.mxu0 0.0
    %496 = vmatprep.subr.mxu0 0.0
    %497 = vmatpush2.msra.mxu0 0.0
    %498 = vmatprep.subr.mxu0 0.0
    %499 = vmatpush2.msra.mxu0 0.0
    %500 = vmatprep.mubr.f32.mxu0 0.0
    %501 = vmatmul.mubr.f32.gmra.mxu0 %v434
    %v502 = vpop.f32.mrf.mxu0
    %v503 = vadd.f32 0.0, %v502
    %v504 = vpop.f32.mrf.mxu0
    %505 = vdwg.mxu0
    %506 = vrot.lane.b32.xlu0 %v340, 120
    %v507 = vpop.permute.xlu0 %506
    %508 = vrot.lane.b32.xlu0 %v328, 120
    %v509 = vpop.permute.xlu0 %508
    %v510 = vsel %vm341, %v507, 0
    %v512 = vsel %vm341, %v509, 0
    %514 = vmatprep.subr.mxu0 0.0
    %515 = vmatpush1.xpose.msra.mxu0 0.0
    %516 = vmatprep.subr.mxu0 0.0
    %517 = vmatpush1.xpose.msra.mxu0 0.0
    %518 = vmatprep.subr.mxu0 0.0
    %519 = vmatpush1.xpose.msra.mxu0 0.0
    %520 = vmatprep.subr.mxu0 0.0
    %521 = vmatpush1.xpose.msra.mxu0 0.0
    %522 = vmatprep.subr.mxu0 0.0
    %523 = vmatpush1.xpose.msra.mxu0 0.0
    %524 = vmatprep.subr.mxu0 0.0
    %525 = vmatpush1.xpose.msra.mxu0 0.0
    %526 = vmatprep.subr.mxu0 0.0
    %527 = vmatpush1.xpose.msra.mxu0 0.0
    %528 = vmatprep.subr.mxu0 0.0
    %529 = vmatpush1.xpose.msra.mxu0 0.0
    %530 = vmatprep.subr.mxu0 0.0
    %531 = vmatpush1.xpose.msra.mxu0 0.0
    %532 = vmatprep.subr.mxu0 0.0
    %533 = vmatpush1.xpose.msra.mxu0 0.0
    %534 = vmatprep.subr.mxu0 0.0
    %535 = vmatpush1.xpose.msra.mxu0 0.0
    %536 = vmatprep.subr.mxu0 0.0
    %537 = vmatpush1.xpose.msra.mxu0 0.0
    %538 = vmatprep.subr.mxu0 0.0
    %539 = vmatpush1.xpose.msra.mxu0 0.0
    %540 = vmatprep.subr.mxu0 0.0
    %541 = vmatpush1.xpose.msra.mxu0 0.0
    %542 = vmatprep.subr.mxu0 0.0
    %543 = vmatpush1.xpose.msra.mxu0 0.0
    %544 = vmatprep.subr.mxu0 0.0
    %545 = vmatpush1.xpose.msra.mxu0 %v512
    %546 = vmatprep.subr.mxu0 0.0
    %547 = vmatpush2.xpose.msra.mxu0 0.0
    %548 = vmatprep.subr.mxu0 0.0
    %549 = vmatpush2.xpose.msra.mxu0 0.0
    %550 = vmatprep.subr.mxu0 0.0
    %551 = vmatpush2.xpose.msra.mxu0 0.0
    %552 = vmatprep.subr.mxu0 0.0
    %553 = vmatpush2.xpose.msra.mxu0 0.0
    %554 = vmatprep.subr.mxu0 0.0
    %555 = vmatpush2.xpose.msra.mxu0 0.0
    %556 = vmatprep.subr.mxu0 0.0
    %557 = vmatpush2.xpose.msra.mxu0 0.0
    %558 = vmatprep.subr.mxu0 0.0
    %559 = vmatpush2.xpose.msra.mxu0 0.0
    %560 = vmatprep.subr.mxu0 0.0
    %561 = vmatpush2.xpose.msra.mxu0 0.0
    %562 = vmatprep.subr.mxu0 0.0
    %563 = vmatpush2.xpose.msra.mxu0 0.0
    %564 = vmatprep.subr.mxu0 0.0
    %565 = vmatpush2.xpose.msra.mxu0 0.0
    %566 = vmatprep.subr.mxu0 0.0
    %567 = vmatpush2.xpose.msra.mxu0 0.0
    %568 = vmatprep.subr.mxu0 0.0
    %569 = vmatpush2.xpose.msra.mxu0 0.0
    %570 = vmatprep.subr.mxu0 0.0
    %571 = vmatpush2.xpose.msra.mxu0 0.0
    %572 = vmatprep.subr.mxu0 0.0
    %573 = vmatpush2.xpose.msra.mxu0 0.0
    %574 = vmatprep.subr.mxu0 0.0
    %575 = vmatpush2.xpose.msra.mxu0 0.0
    %576 = vmatprep.subr.mxu0 0.0
    %577 = vmatpush2.xpose.msra.mxu0 0.0
    %578 = vmatprep.mubr.f32.mxu0 0.0
    %579 = vmatmul.mubr.f32.gmra.mxu0 %v510
    %v580 = vpop.f32.mrf.mxu0
    %v581 = vadd.f32 0.0, %v580
    %v582 = vpop.f32.mrf.mxu0
    %583 = vdwg.mxu0
    %v584 = vsel %vm341, %v581, -inf
    %585 = vmax.xlane.f32.xlu0 %v584
    %v586 = vpop.xlane.xlu0 %585
    %v587 = vsub.f32 %v581, %v586
    %v588 = vmul.f32 %v587, 1.442695
    %v589 = vpow.pop %v588
    %v590 = vsel %vm341, %v589, 0.0
    %591 = vadd.xlane.f32.xlu0 %v590
    %v592 = vpop.xlane.xlu0 %591
    %v593 = vrcp.pop %v592
    %v594 = vmul.f32 %v589, %v593
    %595 = vrot.lane.b32.xlu0 %v338, 88
    %v596 = vpop.permute.xlu0 %595
    %v599 = vsel %vm341, %v594, 0
    %601 = vmatprep.subr.mxu0 0.0
    %602 = vmatpush1.msra.mxu0 0.0
    %603 = vmatprep.subr.mxu0 0.0
    %604 = vmatpush1.msra.mxu0 0.0
    %605 = vmatprep.subr.mxu0 0.0
    %606 = vmatpush1.msra.mxu0 0.0
    %607 = vmatprep.subr.mxu0 0.0
    %608 = vmatpush1.msra.mxu0 0.0
    %609 = vmatprep.subr.mxu0 0.0
    %610 = vmatpush1.msra.mxu0 0.0
    %611 = vmatprep.subr.mxu0 0.0
    %612 = vmatpush1.msra.mxu0 0.0
    %613 = vmatprep.subr.mxu0 0.0
    %614 = vmatpush1.msra.mxu0 0.0
    %615 = vmatprep.subr.mxu0 0.0
    %616 = vmatpush1.msra.mxu0 0.0
    %617 = vmatprep.subr.mxu0 0.0
    %618 = vmatpush1.msra.mxu0 0.0
    %619 = vmatprep.subr.mxu0 0.0
    %620 = vmatpush1.msra.mxu0 0.0
    %621 = vmatprep.subr.mxu0 0.0
    %622 = vmatpush1.msra.mxu0 0.0
    %623 = vmatprep.subr.mxu0 0.0
    %624 = vmatpush1.msra.mxu0 0.0
    %625 = vmatprep.subr.mxu0 0.0
    %626 = vmatpush1.msra.mxu0 0.0
    %627 = vmatprep.subr.mxu0 0.0
    %628 = vmatpush1.msra.mxu0 0.0
    %629 = vmatprep.subr.mxu0 0.0
    %630 = vmatpush1.msra.mxu0 0.0
    %631 = vmatprep.subr.mxu0 0.0
    %632 = vmatpush1.msra.mxu0 %v596
    %633 = vmatprep.subr.mxu0 0.0
    %634 = vmatpush2.msra.mxu0 0.0
    %635 = vmatprep.subr.mxu0 0.0
    %636 = vmatpush2.msra.mxu0 0.0
    %637 = vmatprep.subr.mxu0 0.0
    %638 = vmatpush2.msra.mxu0 0.0
    %639 = vmatprep.subr.mxu0 0.0
    %640 = vmatpush2.msra.mxu0 0.0
    %641 = vmatprep.subr.mxu0 0.0
    %642 = vmatpush2.msra.mxu0 0.0
    %643 = vmatprep.subr.mxu0 0.0
    %644 = vmatpush2.msra.mxu0 0.0
    %645 = vmatprep.subr.mxu0 0.0
    %646 = vmatpush2.msra.mxu0 0.0
    %647 = vmatprep.subr.mxu0 0.0
    %648 = vmatpush2.msra.mxu0 0.0
    %649 = vmatprep.subr.mxu0 0.0
    %650 = vmatpush2.msra.mxu0 0.0
    %651 = vmatprep.subr.mxu0 0.0
    %652 = vmatpush2.msra.mxu0 0.0
    %653 = vmatprep.subr.mxu0 0.0
    %654 = vmatpush2.msra.mxu0 0.0
    %655 = vmatprep.subr.mxu0 0.0
    %656 = vmatpush2.msra.mxu0 0.0
    %657 = vmatprep.subr.mxu0 0.0
    %658 = vmatpush2.msra.mxu0 0.0
    %659 = vmatprep.subr.mxu0 0.0
    %660 = vmatpush2.msra.mxu0 0.0
    %661 = vmatprep.subr.mxu0 0.0
    %662 = vmatpush2.msra.mxu0 0.0
    %663 = vmatprep.subr.mxu0 0.0
    %664 = vmatpush2.msra.mxu0 0.0
    %665 = vmatprep.mubr.f32.mxu0 0.0
    %666 = vmatmul.mubr.f32.gmra.mxu0 %v599
    %v667 = vpop.f32.mrf.mxu0
    %v668 = vadd.f32 0.0, %v667
    %v669 = vpop.f32.mrf.mxu0
    %670 = vdwg.mxu0
    %v672 = vsel %vm341, %v668, 0
    %674 = vmatprep.subr.mxu0 0.0
    %675 = vmatpush1.msra.mxu0 0.0
    %676 = vmatprep.subr.mxu0 0.0
    %677 = vmatpush1.msra.mxu0 0.0
    %678 = vmatprep.subr.mxu0 0.0
    %679 = vmatpush1.msra.mxu0 0.0
    %680 = vmatprep.subr.mxu0 0.0
    %681 = vmatpush1.msra.mxu0 0.0
    %682 = vmatprep.subr.mxu0 0.0
    %683 = vmatpush1.msra.mxu0 0.0
    %684 = vmatprep.subr.mxu0 0.0
    %685 = vmatpush1.msra.mxu0 0.0
    %686 = vmatprep.subr.mxu0 0.0
    %687 = vmatpush1.msra.mxu0 0.0
    %688 = vmatprep.subr.mxu0 0.0
    %689 = vmatpush1.msra.mxu0 0.0
    %690 = vmatprep.subr.mxu0 0.0
    %691 = vmatpush1.msra.mxu0 0.0
    %692 = vmatprep.subr.mxu0 0.0
    %693 = vmatpush1.msra.mxu0 0.0
    %694 = vmatprep.subr.mxu0 0.0
    %695 = vmatpush1.msra.mxu0 0.0
    %696 = vmatprep.subr.mxu0 0.0
    %697 = vmatpush1.msra.mxu0 0.0
    %698 = vmatprep.subr.mxu0 0.0
    %699 = vmatpush1.msra.mxu0 0.0
    %700 = vmatprep.subr.mxu0 0.0
    %701 = vmatpush1.msra.mxu0 0.0
    %702 = vmatprep.subr.mxu0 0.0
    %703 = vmatpush1.msra.mxu0 0.0
    %704 = vmatprep.subr.mxu0 0.0
    %705 = vmatpush1.msra.mxu0 %v158
    %706 = vmatprep.subr.mxu0 0.0
    %707 = vmatpush2.msra.mxu0 0.0
    %708 = vmatprep.subr.mxu0 0.0
    %709 = vmatpush2.msra.mxu0 0.0
    %710 = vmatprep.subr.mxu0 0.0
    %711 = vmatpush2.msra.mxu0 0.0
    %712 = vmatprep.subr.mxu0 0.0
    %713 = vmatpush2.msra.mxu0 0.0
    %714 = vmatprep.subr.mxu0 0.0
    %715 = vmatpush2.msra.mxu0 0.0
    %716 = vmatprep.subr.mxu0 0.0
    %717 = vmatpush2.msra.mxu0 0.0
    %718 = vmatprep.subr.mxu0 0.0
    %719 = vmatpush2.msra.mxu0 0.0
    %720 = vmatprep.subr.mxu0 0.0
    %721 = vmatpush2.msra.mxu0 0.0
    %722 = vmatprep.subr.mxu0 0.0
    %723 = vmatpush2.msra.mxu0 0.0
    %724 = vmatprep.subr.mxu0 0.0
    %725 = vmatpush2.msra.mxu0 0.0
    %726 = vmatprep.subr.mxu0 0.0
    %727 = vmatpush2.msra.mxu0 0.0
    %728 = vmatprep.subr.mxu0 0.0
    %729 = vmatpush2.msra.mxu0 0.0
    %730 = vmatprep.subr.mxu0 0.0
    %731 = vmatpush2.msra.mxu0 0.0
    %732 = vmatprep.subr.mxu0 0.0
    %733 = vmatpush2.msra.mxu0 0.0
    %734 = vmatprep.subr.mxu0 0.0
    %735 = vmatpush2.msra.mxu0 0.0
    %736 = vmatprep.subr.mxu0 0.0
    %737 = vmatpush2.msra.mxu0 0.0
    %738 = vmatprep.mubr.f32.mxu0 0.0
    %739 = vmatmul.mubr.f32.gmra.mxu0 %v672
    %v740 = vpop.f32.mrf.mxu0
    %v741 = vadd.f32 0.0, %v740
    %v742 = vpop.f32.mrf.mxu0
    %743 = vdwg.mxu0
    %v745 = vsel %vm341, %v503, 0
    %747 = vmatprep.subr.mxu0 0.0
    %748 = vmatpush1.msra.mxu0 0.0
    %749 = vmatprep.subr.mxu0 0.0
    %750 = vmatpush1.msra.mxu0 0.0
    %751 = vmatprep.subr.mxu0 0.0
    %752 = vmatpush1.msra.mxu0 0.0
    %753 = vmatprep.subr.mxu0 0.0
    %754 = vmatpush1.msra.mxu0 0.0
    %755 = vmatprep.subr.mxu0 0.0
    %756 = vmatpush1.msra.mxu0 0.0
    %757 = vmatprep.subr.mxu0 0.0
    %758 = vmatpush1.msra.mxu0 0.0
    %759 = vmatprep.subr.mxu0 0.0
    %760 = vmatpush1.msra.mxu0 0.0
    %761 = vmatprep.subr.mxu0 0.0
    %762 = vmatpush1.msra.mxu0 0.0
    %763 = vmatprep.subr.mxu0 0.0
    %764 = vmatpush1.msra.mxu0 0.0
    %765 = vmatprep.subr.mxu0 0.0
    %766 = vmatpush1.msra.mxu0 0.0
    %767 = vmatprep.subr.mxu0 0.0
    %768 = vmatpush1.msra.mxu0 0.0
    %769 = vmatprep.subr.mxu0 0.0
    %770 = vmatpush1.msra.mxu0 0.0
    %771 = vmatprep.subr.mxu0 0.0
    %772 = vmatpush1.msra.mxu0 0.0
    %773 = vmatprep.subr.mxu0 0.0
    %774 = vmatpush1.msra.mxu0 0.0
    %775 = vmatprep.subr.mxu0 0.0
    %776 = vmatpush1.msra.mxu0 0.0
    %777 = vmatprep.subr.mxu0 0.0
    %778 = vmatpush1.msra.mxu0 %v157
    %779 = vmatprep.subr.mxu0 0.0
    %780 = vmatpush2.msra.mxu0 0.0
    %781 = vmatprep.subr.mxu0 0.0
    %782 = vmatpush2.msra.mxu0 0.0
    %783 = vmatprep.subr.mxu0 0.0
    %784 = vmatpush2.msra.mxu0 0.0
    %785 = vmatprep.subr.mxu0 0.0
    %786 = vmatpush2.msra.mxu0 0.0
    %787 = vmatprep.subr.mxu0 0.0
    %788 = vmatpush2.msra.mxu0 0.0
    %789 = vmatprep.subr.mxu0 0.0
    %790 = vmatpush2.msra.mxu0 0.0
    %791 = vmatprep.subr.mxu0 0.0
    %792 = vmatpush2.msra.mxu0 0.0
    %793 = vmatprep.subr.mxu0 0.0
    %794 = vmatpush2.msra.mxu0 0.0
    %795 = vmatprep.subr.mxu0 0.0
    %796 = vmatpush2.msra.mxu0 0.0
    %797 = vmatprep.subr.mxu0 0.0
    %798 = vmatpush2.msra.mxu0 0.0
    %799 = vmatprep.subr.mxu0 0.0
    %800 = vmatpush2.msra.mxu0 0.0
    %801 = vmatprep.subr.mxu0 0.0
    %802 = vmatpush2.msra.mxu0 0.0
    %803 = vmatprep.subr.mxu0 0.0
    %804 = vmatpush2.msra.mxu0 0.0
    %805 = vmatprep.subr.mxu0 0.0
    %806 = vmatpush2.msra.mxu0 0.0
    %807 = vmatprep.subr.mxu0 0.0
    %808 = vmatpush2.msra.mxu0 0.0
    %809 = vmatprep.subr.mxu0 0.0
    %810 = vmatpush2.msra.mxu0 0.0
    %811 = vmatprep.mubr.f32.mxu0 0.0
    %812 = vmatmul.mubr.f32.gmra.mxu0 %v745
    %v813 = vpop.f32.mrf.mxu0
    %v814 = vadd.f32 %v741, %v813
    %v815 = vpop.f32.mrf.mxu0
    %816 = vdwg.mxu0
    %817 = vrot.lane.b32.xlu0 %v340, 112
    %v818 = vpop.permute.xlu0 %817
    %819 = vrot.lane.b32.xlu0 %v328, 112
    %v820 = vpop.permute.xlu0 %819
    %v821 = vsel %vm341, %v818, 0
    %v823 = vsel %vm341, %v820, 0
    %825 = vmatprep.subr.mxu0 0.0
    %826 = vmatpush1.xpose.msra.mxu0 0.0
    %827 = vmatprep.subr.mxu0 0.0
    %828 = vmatpush1.xpose.msra.mxu0 0.0
    %829 = vmatprep.subr.mxu0 0.0
    %830 = vmatpush1.xpose.msra.mxu0 0.0
    %831 = vmatprep.subr.mxu0 0.0
    %832 = vmatpush1.xpose.msra.mxu0 0.0
    %833 = vmatprep.subr.mxu0 0.0
    %834 = vmatpush1.xpose.msra.mxu0 0.0
    %835 = vmatprep.subr.mxu0 0.0
    %836 = vmatpush1.xpose.msra.mxu0 0.0
    %837 = vmatprep.subr.mxu0 0.0
    %838 = vmatpush1.xpose.msra.mxu0 0.0
    %839 = vmatprep.subr.mxu0 0.0
    %840 = vmatpush1.xpose.msra.mxu0 0.0
    %841 = vmatprep.subr.mxu0 0.0
    %842 = vmatpush1.xpose.msra.mxu0 0.0
    %843 = vmatprep.subr.mxu0 0.0
    %844 = vmatpush1.xpose.msra.mxu0 0.0
    %845 = vmatprep.subr.mxu0 0.0
    %846 = vmatpush1.xpose.msra.mxu0 0.0
    %847 = vmatprep.subr.mxu0 0.0
    %848 = vmatpush1.xpose.msra.mxu0 0.0
    %849 = vmatprep.subr.mxu0 0.0
    %850 = vmatpush1.xpose.msra.mxu0 0.0
    %851 = vmatprep.subr.mxu0 0.0
    %852 = vmatpush1.xpose.msra.mxu0 0.0
    %853 = vmatprep.subr.mxu0 0.0
    %854 = vmatpush1.xpose.msra.mxu0 0.0
    %855 = vmatprep.subr.mxu0 0.0
    %856 = vmatpush1.xpose.msra.mxu0 %v823
    %857 = vmatprep.subr.mxu0 0.0
    %858 = vmatpush2.xpose.msra.mxu0 0.0
    %859 = vmatprep.subr.mxu0 0.0
    %860 = vmatpush2.xpose.msra.mxu0 0.0
    %861 = vmatprep.subr.mxu0 0.0
    %862 = vmatpush2.xpose.msra.mxu0 0.0
    %863 = vmatprep.subr.mxu0 0.0
    %864 = vmatpush2.xpose.msra.mxu0 0.0
    %865 = vmatprep.subr.mxu0 0.0
    %866 = vmatpush2.xpose.msra.mxu0 0.0
    %867 = vmatprep.subr.mxu0 0.0
    %868 = vmatpush2.xpose.msra.mxu0 0.0
    %869 = vmatprep.subr.mxu0 0.0
    %870 = vmatpush2.xpose.msra.mxu0 0.0
    %871 = vmatprep.subr.mxu0 0.0
    %872 = vmatpush2.xpose.msra.mxu0 0.0
    %873 = vmatprep.subr.mxu0 0.0
    %874 = vmatpush2.xpose.msra.mxu0 0.0
    %875 = vmatprep.subr.mxu0 0.0
    %876 = vmatpush2.xpose.msra.mxu0 0.0
    %877 = vmatprep.subr.mxu0 0.0
    %878 = vmatpush2.xpose.msra.mxu0 0.0
    %879 = vmatprep.subr.mxu0 0.0
    %880 = vmatpush2.xpose.msra.mxu0 0.0
    %881 = vmatprep.subr.mxu0 0.0
    %882 = vmatpush2.xpose.msra.mxu0 0.0
    %883 = vmatprep.subr.mxu0 0.0
    %884 = vmatpush2.xpose.msra.mxu0 0.0
    %885 = vmatprep.subr.mxu0 0.0
    %886 = vmatpush2.xpose.msra.mxu0 0.0
    %887 = vmatprep.subr.mxu0 0.0
    %888 = vmatpush2.xpose.msra.mxu0 0.0
    %889 = vmatprep.mubr.f32.mxu0 0.0
    %890 = vmatmul.mubr.f32.gmra.mxu0 %v821
    %v891 = vpop.f32.mrf.mxu0
    %v892 = vadd.f32 0.0, %v891
    %v893 = vpop.f32.mrf.mxu0
    %894 = vdwg.mxu0
    %v895 = vsel %vm341, %v892, -inf
    %896 = vmax.xlane.f32.xlu0 %v895
    %v897 = vpop.xlane.xlu0 %896
    %v898 = vsub.f32 %v892, %v897
    %v899 = vmul.f32 %v898, 1.442695
    %v900 = vpow.pop %v899
    %v901 = vsel %vm341, %v900, 0.0
    %902 = vadd.xlane.f32.xlu0 %v901
    %v903 = vpop.xlane.xlu0 %902
    %v904 = vrcp.pop %v903
    %v905 = vmul.f32 %v900, %v904
    %906 = vrot.lane.b32.xlu0 %v338, 80
    %v907 = vpop.permute.xlu0 %906
    %v910 = vsel %vm341, %v905, 0
    %912 = vmatprep.subr.mxu0 0.0
    %913 = vmatpush1.msra.mxu0 0.0
    %914 = vmatprep.subr.mxu0 0.0
    %915 = vmatpush1.msra.mxu0 0.0
    %916 = vmatprep.subr.mxu0 0.0
    %917 = vmatpush1.msra.mxu0 0.0
    %918 = vmatprep.subr.mxu0 0.0
    %919 = vmatpush1.msra.mxu0 0.0
    %920 = vmatprep.subr.mxu0 0.0
    %921 = vmatpush1.msra.mxu0 0.0
    %922 = vmatprep.subr.mxu0 0.0
    %923 = vmatpush1.msra.mxu0 0.0
    %924 = vmatprep.subr.mxu0 0.0
    %925 = vmatpush1.msra.mxu0 0.0
    %926 = vmatprep.subr.mxu0 0.0
    %927 = vmatpush1.msra.mxu0 0.0
    %928 = vmatprep.subr.mxu0 0.0
    %929 = vmatpush1.msra.mxu0 0.0
    %930 = vmatprep.subr.mxu0 0.0
    %931 = vmatpush1.msra.mxu0 0.0
    %932 = vmatprep.subr.mxu0 0.0
    %933 = vmatpush1.msra.mxu0 0.0
    %934 = vmatprep.subr.mxu0 0.0
    %935 = vmatpush1.msra.mxu0 0.0
    %936 = vmatprep.subr.mxu0 0.0
    %937 = vmatpush1.msra.mxu0 0.0
    %938 = vmatprep.subr.mxu0 0.0
    %939 = vmatpush1.msra.mxu0 0.0
    %940 = vmatprep.subr.mxu0 0.0
    %941 = vmatpush1.msra.mxu0 0.0
    %942 = vmatprep.subr.mxu0 0.0
    %943 = vmatpush1.msra.mxu0 %v907
    %944 = vmatprep.subr.mxu0 0.0
    %945 = vmatpush2.msra.mxu0 0.0
    %946 = vmatprep.subr.mxu0 0.0
    %947 = vmatpush2.msra.mxu0 0.0
    %948 = vmatprep.subr.mxu0 0.0
    %949 = vmatpush2.msra.mxu0 0.0
    %950 = vmatprep.subr.mxu0 0.0
    %951 = vmatpush2.msra.mxu0 0.0
    %952 = vmatprep.subr.mxu0 0.0
    %953 = vmatpush2.msra.mxu0 0.0
    %954 = vmatprep.subr.mxu0 0.0
    %955 = vmatpush2.msra.mxu0 0.0
    %956 = vmatprep.subr.mxu0 0.0
    %957 = vmatpush2.msra.mxu0 0.0
    %958 = vmatprep.subr.mxu0 0.0
    %959 = vmatpush2.msra.mxu0 0.0
    %960 = vmatprep.subr.mxu0 0.0
    %961 = vmatpush2.msra.mxu0 0.0
    %962 = vmatprep.subr.mxu0 0.0
    %963 = vmatpush2.msra.mxu0 0.0
    %964 = vmatprep.subr.mxu0 0.0
    %965 = vmatpush2.msra.mxu0 0.0
    %966 = vmatprep.subr.mxu0 0.0
    %967 = vmatpush2.msra.mxu0 0.0
    %968 = vmatprep.subr.mxu0 0.0
    %969 = vmatpush2.msra.mxu0 0.0
    %970 = vmatprep.subr.mxu0 0.0
    %971 = vmatpush2.msra.mxu0 0.0
    %972 = vmatprep.subr.mxu0 0.0
    %973 = vmatpush2.msra.mxu0 0.0
    %974 = vmatprep.subr.mxu0 0.0
    %975 = vmatpush2.msra.mxu0 0.0
    %976 = vmatprep.mubr.f32.mxu0 0.0
    %977 = vmatmul.mubr.f32.gmra.mxu0 %v910
    %v978 = vpop.f32.mrf.mxu0
    %v979 = vadd.f32 0.0, %v978
    %v980 = vpop.f32.mrf.mxu0
    %981 = vdwg.mxu0
    %v983 = vsel %vm341, %v979, 0
    %985 = vmatprep.subr.mxu0 0.0
    %986 = vmatpush1.msra.mxu0 0.0
    %987 = vmatprep.subr.mxu0 0.0
    %988 = vmatpush1.msra.mxu0 0.0
    %989 = vmatprep.subr.mxu0 0.0
    %990 = vmatpush1.msra.mxu0 0.0
    %991 = vmatprep.subr.mxu0 0.0
    %992 = vmatpush1.msra.mxu0 0.0
    %993 = vmatprep.subr.mxu0 0.0
    %994 = vmatpush1.msra.mxu0 0.0
    %995 = vmatprep.subr.mxu0 0.0
    %996 = vmatpush1.msra.mxu0 0.0
    %997 = vmatprep.subr.mxu0 0.0
    %998 = vmatpush1.msra.mxu0 0.0
    %999 = vmatprep.subr.mxu0 0.0
    %1000 = vmatpush1.msra.mxu0 0.0
    %1001 = vmatprep.subr.mxu0 0.0
    %1002 = vmatpush1.msra.mxu0 0.0
    %1003 = vmatprep.subr.mxu0 0.0
    %1004 = vmatpush1.msra.mxu0 0.0
    %1005 = vmatprep.subr.mxu0 0.0
    %1006 = vmatpush1.msra.mxu0 0.0
    %1007 = vmatprep.subr.mxu0 0.0
    %1008 = vmatpush1.msra.mxu0 0.0
    %1009 = vmatprep.subr.mxu0 0.0
    %1010 = vmatpush1.msra.mxu0 0.0
    %1011 = vmatprep.subr.mxu0 0.0
    %1012 = vmatpush1.msra.mxu0 0.0
    %1013 = vmatprep.subr.mxu0 0.0
    %1014 = vmatpush1.msra.mxu0 0.0
    %1015 = vmatprep.subr.mxu0 0.0
    %1016 = vmatpush1.msra.mxu0 %v159
    %1017 = vmatprep.subr.mxu0 0.0
    %1018 = vmatpush2.msra.mxu0 0.0
    %1019 = vmatprep.subr.mxu0 0.0
    %1020 = vmatpush2.msra.mxu0 0.0
    %1021 = vmatprep.subr.mxu0 0.0
    %1022 = vmatpush2.msra.mxu0 0.0
    %1023 = vmatprep.subr.mxu0 0.0
    %1024 = vmatpush2.msra.mxu0 0.0
    %1025 = vmatprep.subr.mxu0 0.0
    %1026 = vmatpush2.msra.mxu0 0.0
    %1027 = vmatprep.subr.mxu0 0.0
    %1028 = vmatpush2.msra.mxu0 0.0
    %1029 = vmatprep.subr.mxu0 0.0
    %1030 = vmatpush2.msra.mxu0 0.0
    %1031 = vmatprep.subr.mxu0 0.0
    %1032 = vmatpush2.msra.mxu0 0.0
    %1033 = vmatprep.subr.mxu0 0.0
    %1034 = vmatpush2.msra.mxu0 0.0
    %1035 = vmatprep.subr.mxu0 0.0
    %1036 = vmatpush2.msra.mxu0 0.0
    %1037 = vmatprep.subr.mxu0 0.0
    %1038 = vmatpush2.msra.mxu0 0.0
    %1039 = vmatprep.subr.mxu0 0.0
    %1040 = vmatpush2.msra.mxu0 0.0
    %1041 = vmatprep.subr.mxu0 0.0
    %1042 = vmatpush2.msra.mxu0 0.0
    %1043 = vmatprep.subr.mxu0 0.0
    %1044 = vmatpush2.msra.mxu0 0.0
    %1045 = vmatprep.subr.mxu0 0.0
    %1046 = vmatpush2.msra.mxu0 0.0
    %1047 = vmatprep.subr.mxu0 0.0
    %1048 = vmatpush2.msra.mxu0 0.0
    %1049 = vmatprep.mubr.f32.mxu0 0.0
    %1050 = vmatmul.mubr.f32.gmra.mxu0 %v983
    %v1051 = vpop.f32.mrf.mxu0
    %v1052 = vadd.f32 0.0, %v1051
    %v1053 = vpop.f32.mrf.mxu0
    %1054 = vdwg.mxu0
    %v1055 = vadd.f32 %v814, %v1052
    %1056 = vrot.lane.b32.xlu0 %v340, 104
    %v1057 = vpop.permute.xlu0 %1056
    %1058 = vrot.lane.b32.xlu0 %v328, 104
    %v1059 = vpop.permute.xlu0 %1058
    %v1060 = vsel %vm341, %v1057, 0
    %v1062 = vsel %vm341, %v1059, 0
    %1064 = vmatprep.subr.mxu0 0.0
    %1065 = vmatpush1.xpose.msra.mxu0 0.0
    %1066 = vmatprep.subr.mxu0 0.0
    %1067 = vmatpush1.xpose.msra.mxu0 0.0
    %1068 = vmatprep.subr.mxu0 0.0
    %1069 = vmatpush1.xpose.msra.mxu0 0.0
    %1070 = vmatprep.subr.mxu0 0.0
    %1071 = vmatpush1.xpose.msra.mxu0 0.0
    %1072 = vmatprep.subr.mxu0 0.0
    %1073 = vmatpush1.xpose.msra.mxu0 0.0
    %1074 = vmatprep.subr.mxu0 0.0
    %1075 = vmatpush1.xpose.msra.mxu0 0.0
    %1076 = vmatprep.subr.mxu0 0.0
    %1077 = vmatpush1.xpose.msra.mxu0 0.0
    %1078 = vmatprep.subr.mxu0 0.0
    %1079 = vmatpush1.xpose.msra.mxu0 0.0
    %1080 = vmatprep.subr.mxu0 0.0
    %1081 = vmatpush1.xpose.msra.mxu0 0.0
    %1082 = vmatprep.subr.mxu0 0.0
    %1083 = vmatpush1.xpose.msra.mxu0 0.0
    %1084 = vmatprep.subr.mxu0 0.0
    %1085 = vmatpush1.xpose.msra.mxu0 0.0
    %1086 = vmatprep.subr.mxu0 0.0
    %1087 = vmatpush1.xpose.msra.mxu0 0.0
    %1088 = vmatprep.subr.mxu0 0.0
    %1089 = vmatpush1.xpose.msra.mxu0 0.0
    %1090 = vmatprep.subr.mxu0 0.0
    %1091 = vmatpush1.xpose.msra.mxu0 0.0
    %1092 = vmatprep.subr.mxu0 0.0
    %1093 = vmatpush1.xpose.msra.mxu0 0.0
    %1094 = vmatprep.subr.mxu0 0.0
    %1095 = vmatpush1.xpose.msra.mxu0 %v1062
    %1096 = vmatprep.subr.mxu0 0.0
    %1097 = vmatpush2.xpose.msra.mxu0 0.0
    %1098 = vmatprep.subr.mxu0 0.0
    %1099 = vmatpush2.xpose.msra.mxu0 0.0
    %1100 = vmatprep.subr.mxu0 0.0
    %1101 = vmatpush2.xpose.msra.mxu0 0.0
    %1102 = vmatprep.subr.mxu0 0.0
    %1103 = vmatpush2.xpose.msra.mxu0 0.0
    %1104 = vmatprep.subr.mxu0 0.0
    %1105 = vmatpush2.xpose.msra.mxu0 0.0
    %1106 = vmatprep.subr.mxu0 0.0
    %1107 = vmatpush2.xpose.msra.mxu0 0.0
    %1108 = vmatprep.subr.mxu0 0.0
    %1109 = vmatpush2.xpose.msra.mxu0 0.0
    %1110 = vmatprep.subr.mxu0 0.0
    %1111 = vmatpush2.xpose.msra.mxu0 0.0
    %1112 = vmatprep.subr.mxu0 0.0
    %1113 = vmatpush2.xpose.msra.mxu0 0.0
    %1114 = vmatprep.subr.mxu0 0.0
    %1115 = vmatpush2.xpose.msra.mxu0 0.0
    %1116 = vmatprep.subr.mxu0 0.0
    %1117 = vmatpush2.xpose.msra.mxu0 0.0
    %1118 = vmatprep.subr.mxu0 0.0
    %1119 = vmatpush2.xpose.msra.mxu0 0.0
    %1120 = vmatprep.subr.mxu0 0.0
    %1121 = vmatpush2.xpose.msra.mxu0 0.0
    %1122 = vmatprep.subr.mxu0 0.0
    %1123 = vmatpush2.xpose.msra.mxu0 0.0
    %1124 = vmatprep.subr.mxu0 0.0
    %1125 = vmatpush2.xpose.msra.mxu0 0.0
    %1126 = vmatprep.subr.mxu0 0.0
    %1127 = vmatpush2.xpose.msra.mxu0 0.0
    %1128 = vmatprep.mubr.f32.mxu0 0.0
    %1129 = vmatmul.mubr.f32.gmra.mxu0 %v1060
    %v1130 = vpop.f32.mrf.mxu0
    %v1131 = vadd.f32 0.0, %v1130
    %v1132 = vpop.f32.mrf.mxu0
    %1133 = vdwg.mxu0
    %v1134 = vsel %vm341, %v1131, -inf
    %1135 = vmax.xlane.f32.xlu0 %v1134
    %v1136 = vpop.xlane.xlu0 %1135
    %v1137 = vsub.f32 %v1131, %v1136
    %v1138 = vmul.f32 %v1137, 1.442695
    %v1139 = vpow.pop %v1138
    %v1140 = vsel %vm341, %v1139, 0.0
    %1141 = vadd.xlane.f32.xlu0 %v1140
    %v1142 = vpop.xlane.xlu0 %1141
    %v1143 = vrcp.pop %v1142
    %v1144 = vmul.f32 %v1139, %v1143
    %1145 = vrot.lane.b32.xlu0 %v338, 72
    %v1146 = vpop.permute.xlu0 %1145
    %v1149 = vsel %vm341, %v1144, 0
    %1151 = vmatprep.subr.mxu0 0.0
    %1152 = vmatpush1.msra.mxu0 0.0
    %1153 = vmatprep.subr.mxu0 0.0
    %1154 = vmatpush1.msra.mxu0 0.0
    %1155 = vmatprep.subr.mxu0 0.0
    %1156 = vmatpush1.msra.mxu0 0.0
    %1157 = vmatprep.subr.mxu0 0.0
    %1158 = vmatpush1.msra.mxu0 0.0
    %1159 = vmatprep.subr.mxu0 0.0
    %1160 = vmatpush1.msra.mxu0 0.0
    %1161 = vmatprep.subr.mxu0 0.0
    %1162 = vmatpush1.msra.mxu0 0.0
    %1163 = vmatprep.subr.mxu0 0.0
    %1164 = vmatpush1.msra.mxu0 0.0
    %1165 = vmatprep.subr.mxu0 0.0
    %1166 = vmatpush1.msra.mxu0 0.0
    %1167 = vmatprep.subr.mxu0 0.0
    %1168 = vmatpush1.msra.mxu0 0.0
    %1169 = vmatprep.subr.mxu0 0.0
    %1170 = vmatpush1.msra.mxu0 0.0
    %1171 = vmatprep.subr.mxu0 0.0
    %1172 = vmatpush1.msra.mxu0 0.0
    %1173 = vmatprep.subr.mxu0 0.0
    %1174 = vmatpush1.msra.mxu0 0.0
    %1175 = vmatprep.subr.mxu0 0.0
    %1176 = vmatpush1.msra.mxu0 0.0
    %1177 = vmatprep.subr.mxu0 0.0
    %1178 = vmatpush1.msra.mxu0 0.0
    %1179 = vmatprep.subr.mxu0 0.0
    %1180 = vmatpush1.msra.mxu0 0.0
    %1181 = vmatprep.subr.mxu0 0.0
    %1182 = vmatpush1.msra.mxu0 %v1146
    %1183 = vmatprep.subr.mxu0 0.0
    %1184 = vmatpush2.msra.mxu0 0.0
    %1185 = vmatprep.subr.mxu0 0.0
    %1186 = vmatpush2.msra.mxu0 0.0
    %1187 = vmatprep.subr.mxu0 0.0
    %1188 = vmatpush2.msra.mxu0 0.0
    %1189 = vmatprep.subr.mxu0 0.0
    %1190 = vmatpush2.msra.mxu0 0.0
    %1191 = vmatprep.subr.mxu0 0.0
    %1192 = vmatpush2.msra.mxu0 0.0
    %1193 = vmatprep.subr.mxu0 0.0
    %1194 = vmatpush2.msra.mxu0 0.0
    %1195 = vmatprep.subr.mxu0 0.0
    %1196 = vmatpush2.msra.mxu0 0.0
    %1197 = vmatprep.subr.mxu0 0.0
    %1198 = vmatpush2.msra.mxu0 0.0
    %1199 = vmatprep.subr.mxu0 0.0
    %1200 = vmatpush2.msra.mxu0 0.0
    %1201 = vmatprep.subr.mxu0 0.0
    %1202 = vmatpush2.msra.mxu0 0.0
    %1203 = vmatprep.subr.mxu0 0.0
    %1204 = vmatpush2.msra.mxu0 0.0
    %1205 = vmatprep.subr.mxu0 0.0
    %1206 = vmatpush2.msra.mxu0 0.0
    %1207 = vmatprep.subr.mxu0 0.0
    %1208 = vmatpush2.msra.mxu0 0.0
    %1209 = vmatprep.subr.mxu0 0.0
    %1210 = vmatpush2.msra.mxu0 0.0
    %1211 = vmatprep.subr.mxu0 0.0
    %1212 = vmatpush2.msra.mxu0 0.0
    %1213 = vmatprep.subr.mxu0 0.0
    %1214 = vmatpush2.msra.mxu0 0.0
    %1215 = vmatprep.mubr.f32.mxu0 0.0
    %1216 = vmatmul.mubr.f32.gmra.mxu0 %v1149
    %v1217 = vpop.f32.mrf.mxu0
    %v1218 = vadd.f32 0.0, %v1217
    %v1219 = vpop.f32.mrf.mxu0
    %1220 = vdwg.mxu0
    %v1222 = vsel %vm341, %v1218, 0
    %1224 = vmatprep.subr.mxu0 0.0
    %1225 = vmatpush1.msra.mxu0 0.0
    %1226 = vmatprep.subr.mxu0 0.0
    %1227 = vmatpush1.msra.mxu0 0.0
    %1228 = vmatprep.subr.mxu0 0.0
    %1229 = vmatpush1.msra.mxu0 0.0
    %1230 = vmatprep.subr.mxu0 0.0
    %1231 = vmatpush1.msra.mxu0 0.0
    %1232 = vmatprep.subr.mxu0 0.0
    %1233 = vmatpush1.msra.mxu0 0.0
    %1234 = vmatprep.subr.mxu0 0.0
    %1235 = vmatpush1.msra.mxu0 0.0
    %1236 = vmatprep.subr.mxu0 0.0
    %1237 = vmatpush1.msra.mxu0 0.0
    %1238 = vmatprep.subr.mxu0 0.0
    %1239 = vmatpush1.msra.mxu0 0.0
    %1240 = vmatprep.subr.mxu0 0.0
    %1241 = vmatpush1.msra.mxu0 0.0
    %1242 = vmatprep.subr.mxu0 0.0
    %1243 = vmatpush1.msra.mxu0 0.0
    %1244 = vmatprep.subr.mxu0 0.0
    %1245 = vmatpush1.msra.mxu0 0.0
    %1246 = vmatprep.subr.mxu0 0.0
    %1247 = vmatpush1.msra.mxu0 0.0
    %1248 = vmatprep.subr.mxu0 0.0
    %1249 = vmatpush1.msra.mxu0 0.0
    %1250 = vmatprep.subr.mxu0 0.0
    %1251 = vmatpush1.msra.mxu0 0.0
    %1252 = vmatprep.subr.mxu0 0.0
    %1253 = vmatpush1.msra.mxu0 0.0
    %1254 = vmatprep.subr.mxu0 0.0
    %1255 = vmatpush1.msra.mxu0 %v160
    %1256 = vmatprep.subr.mxu0 0.0
    %1257 = vmatpush2.msra.mxu0 0.0
    %1258 = vmatprep.subr.mxu0 0.0
    %1259 = vmatpush2.msra.mxu0 0.0
    %1260 = vmatprep.subr.mxu0 0.0
    %1261 = vmatpush2.msra.mxu0 0.0
    %1262 = vmatprep.subr.mxu0 0.0
    %1263 = vmatpush2.msra.mxu0 0.0
    %1264 = vmatprep.subr.mxu0 0.0
    %1265 = vmatpush2.msra.mxu0 0.0
    %1266 = vmatprep.subr.mxu0 0.0
    %1267 = vmatpush2.msra.mxu0 0.0
    %1268 = vmatprep.subr.mxu0 0.0
    %1269 = vmatpush2.msra.mxu0 0.0
    %1270 = vmatprep.subr.mxu0 0.0
    %1271 = vmatpush2.msra.mxu0 0.0
    %1272 = vmatprep.subr.mxu0 0.0
    %1273 = vmatpush2.msra.mxu0 0.0
    %1274 = vmatprep.subr.mxu0 0.0
    %1275 = vmatpush2.msra.mxu0 0.0
    %1276 = vmatprep.subr.mxu0 0.0
    %1277 = vmatpush2.msra.mxu0 0.0
    %1278 = vmatprep.subr.mxu0 0.0
    %1279 = vmatpush2.msra.mxu0 0.0
    %1280 = vmatprep.subr.mxu0 0.0
    %1281 = vmatpush2.msra.mxu0 0.0
    %1282 = vmatprep.subr.mxu0 0.0
    %1283 = vmatpush2.msra.mxu0 0.0
    %1284 = vmatprep.subr.mxu0 0.0
    %1285 = vmatpush2.msra.mxu0 0.0
    %1286 = vmatprep.subr.mxu0 0.0
    %1287 = vmatpush2.msra.mxu0 0.0
    %1288 = vmatprep.mubr.f32.mxu0 0.0
    %1289 = vmatmul.mubr.f32.gmra.mxu0 %v1222
    %v1290 = vpop.f32.mrf.mxu0
    %v1291 = vadd.f32 0.0, %v1290
    %v1292 = vpop.f32.mrf.mxu0
    %1293 = vdwg.mxu0
    %v1294 = vadd.f32 %v1055, %v1291
    %v1295 = vmul.f32 %v242, 0.35355338
    %v1297 = vsel %vm341, %v1295, 0
    %v1300 = vsel %vm341, %v329, 0
    %1302 = vmatprep.subr.mxu0 0.0
    %1303 = vmatpush1.xpose.msra.mxu0 0.0
    %1304 = vmatprep.subr.mxu0 0.0
    %1305 = vmatpush1.xpose.msra.mxu0 0.0
    %1306 = vmatprep.subr.mxu0 0.0
    %1307 = vmatpush1.xpose.msra.mxu0 0.0
    %1308 = vmatprep.subr.mxu0 0.0
    %1309 = vmatpush1.xpose.msra.mxu0 0.0
    %1310 = vmatprep.subr.mxu0 0.0
    %1311 = vmatpush1.xpose.msra.mxu0 0.0
    %1312 = vmatprep.subr.mxu0 0.0
    %1313 = vmatpush1.xpose.msra.mxu0 0.0
    %1314 = vmatprep.subr.mxu0 0.0
    %1315 = vmatpush1.xpose.msra.mxu0 0.0
    %1316 = vmatprep.subr.mxu0 0.0
    %1317 = vmatpush1.xpose.msra.mxu0 0.0
    %1318 = vmatprep.subr.mxu0 0.0
    %1319 = vmatpush1.xpose.msra.mxu0 0.0
    %1320 = vmatprep.subr.mxu0 0.0
    %1321 = vmatpush1.xpose.msra.mxu0 0.0
    %1322 = vmatprep.subr.mxu0 0.0
    %1323 = vmatpush1.xpose.msra.mxu0 0.0
    %1324 = vmatprep.subr.mxu0 0.0
    %1325 = vmatpush1.xpose.msra.mxu0 0.0
    %1326 = vmatprep.subr.mxu0 0.0
    %1327 = vmatpush1.xpose.msra.mxu0 0.0
    %1328 = vmatprep.subr.mxu0 0.0
    %1329 = vmatpush1.xpose.msra.mxu0 0.0
    %1330 = vmatprep.subr.mxu0 0.0
    %1331 = vmatpush1.xpose.msra.mxu0 0.0
    %1332 = vmatprep.subr.mxu0 0.0
    %1333 = vmatpush1.xpose.msra.mxu0 %v1300
    %1334 = vmatprep.subr.mxu0 0.0
    %1335 = vmatpush2.xpose.msra.mxu0 0.0
    %1336 = vmatprep.subr.mxu0 0.0
    %1337 = vmatpush2.xpose.msra.mxu0 0.0
    %1338 = vmatprep.subr.mxu0 0.0
    %1339 = vmatpush2.xpose.msra.mxu0 0.0
    %1340 = vmatprep.subr.mxu0 0.0
    %1341 = vmatpush2.xpose.msra.mxu0 0.0
    %1342 = vmatprep.subr.mxu0 0.0
    %1343 = vmatpush2.xpose.msra.mxu0 0.0
    %1344 = vmatprep.subr.mxu0 0.0
    %1345 = vmatpush2.xpose.msra.mxu0 0.0
    %1346 = vmatprep.subr.mxu0 0.0
    %1347 = vmatpush2.xpose.msra.mxu0 0.0
    %1348 = vmatprep.subr.mxu0 0.0
    %1349 = vmatpush2.xpose.msra.mxu0 0.0
    %1350 = vmatprep.subr.mxu0 0.0
    %1351 = vmatpush2.xpose.msra.mxu0 0.0
    %1352 = vmatprep.subr.mxu0 0.0
    %1353 = vmatpush2.xpose.msra.mxu0 0.0
    %1354 = vmatprep.subr.mxu0 0.0
    %1355 = vmatpush2.xpose.msra.mxu0 0.0
    %1356 = vmatprep.subr.mxu0 0.0
    %1357 = vmatpush2.xpose.msra.mxu0 0.0
    %1358 = vmatprep.subr.mxu0 0.0
    %1359 = vmatpush2.xpose.msra.mxu0 0.0
    %1360 = vmatprep.subr.mxu0 0.0
    %1361 = vmatpush2.xpose.msra.mxu0 0.0
    %1362 = vmatprep.subr.mxu0 0.0
    %1363 = vmatpush2.xpose.msra.mxu0 0.0
    %1364 = vmatprep.subr.mxu0 0.0
    %1365 = vmatpush2.xpose.msra.mxu0 0.0
    %1366 = vmatprep.mubr.f32.mxu0 0.0
    %1367 = vmatmul.mubr.f32.gmra.mxu0 %v1297
    %v1368 = vpop.f32.mrf.mxu0
    %v1369 = vadd.f32 0.0, %v1368
    %v1370 = vpop.f32.mrf.mxu0
    %1371 = vdwg.mxu0
    %v1372 = vsel %vm341, %v1369, -inf
    %1373 = vmax.xlane.f32.xlu0 %v1372
    %v1374 = vpop.xlane.xlu0 %1373
    %v1375 = vsub.f32 %v1369, %v1374
    %v1376 = vmul.f32 %v1375, 1.442695
    %v1377 = vpow.pop %v1376
    %v1378 = vsel %vm341, %v1377, 0.0
    %1379 = vadd.xlane.f32.xlu0 %v1378
    %v1380 = vpop.xlane.xlu0 %1379
    %v1381 = vrcp.pop %v1380
    %v1382 = vmul.f32 %v1377, %v1381
    %1384 = vrot.lane.b32.xlu0 %v339, 96
    %v1385 = vpop.permute.xlu0 %1384
    %v1388 = vsel %vm341, %v1382, 0
    %1390 = vmatprep.subr.mxu0 0.0
    %1391 = vmatpush1.msra.mxu0 0.0
    %1392 = vmatprep.subr.mxu0 0.0
    %1393 = vmatpush1.msra.mxu0 0.0
    %1394 = vmatprep.subr.mxu0 0.0
    %1395 = vmatpush1.msra.mxu0 0.0
    %1396 = vmatprep.subr.mxu0 0.0
    %1397 = vmatpush1.msra.mxu0 0.0
    %1398 = vmatprep.subr.mxu0 0.0
    %1399 = vmatpush1.msra.mxu0 0.0
    %1400 = vmatprep.subr.mxu0 0.0
    %1401 = vmatpush1.msra.mxu0 0.0
    %1402 = vmatprep.subr.mxu0 0.0
    %1403 = vmatpush1.msra.mxu0 0.0
    %1404 = vmatprep.subr.mxu0 0.0
    %1405 = vmatpush1.msra.mxu0 0.0
    %1406 = vmatprep.subr.mxu0 0.0
    %1407 = vmatpush1.msra.mxu0 0.0
    %1408 = vmatprep.subr.mxu0 0.0
    %1409 = vmatpush1.msra.mxu0 0.0
    %1410 = vmatprep.subr.mxu0 0.0
    %1411 = vmatpush1.msra.mxu0 0.0
    %1412 = vmatprep.subr.mxu0 0.0
    %1413 = vmatpush1.msra.mxu0 0.0
    %1414 = vmatprep.subr.mxu0 0.0
    %1415 = vmatpush1.msra.mxu0 0.0
    %1416 = vmatprep.subr.mxu0 0.0
    %1417 = vmatpush1.msra.mxu0 0.0
    %1418 = vmatprep.subr.mxu0 0.0
    %1419 = vmatpush1.msra.mxu0 0.0
    %1420 = vmatprep.subr.mxu0 0.0
    %1421 = vmatpush1.msra.mxu0 %v1385
    %1422 = vmatprep.subr.mxu0 0.0
    %1423 = vmatpush2.msra.mxu0 0.0
    %1424 = vmatprep.subr.mxu0 0.0
    %1425 = vmatpush2.msra.mxu0 0.0
    %1426 = vmatprep.subr.mxu0 0.0
    %1427 = vmatpush2.msra.mxu0 0.0
    %1428 = vmatprep.subr.mxu0 0.0
    %1429 = vmatpush2.msra.mxu0 0.0
    %1430 = vmatprep.subr.mxu0 0.0
    %1431 = vmatpush2.msra.mxu0 0.0
    %1432 = vmatprep.subr.mxu0 0.0
    %1433 = vmatpush2.msra.mxu0 0.0
    %1434 = vmatprep.subr.mxu0 0.0
    %1435 = vmatpush2.msra.mxu0 0.0
    %1436 = vmatprep.subr.mxu0 0.0
    %1437 = vmatpush2.msra.mxu0 0.0
    %1438 = vmatprep.subr.mxu0 0.0
    %1439 = vmatpush2.msra.mxu0 0.0
    %1440 = vmatprep.subr.mxu0 0.0
    %1441 = vmatpush2.msra.mxu0 0.0
    %1442 = vmatprep.subr.mxu0 0.0
    %1443 = vmatpush2.msra.mxu0 0.0
    %1444 = vmatprep.subr.mxu0 0.0
    %1445 = vmatpush2.msra.mxu0 0.0
    %1446 = vmatprep.subr.mxu0 0.0
    %1447 = vmatpush2.msra.mxu0 0.0
    %1448 = vmatprep.subr.mxu0 0.0
    %1449 = vmatpush2.msra.mxu0 0.0
    %1450 = vmatprep.subr.mxu0 0.0
    %1451 = vmatpush2.msra.mxu0 0.0
    %1452 = vmatprep.subr.mxu0 0.0
    %1453 = vmatpush2.msra.mxu0 0.0
    %1454 = vmatprep.mubr.f32.mxu0 0.0
    %1455 = vmatmul.mubr.f32.gmra.mxu0 %v1388
    %v1456 = vpop.f32.mrf.mxu0
    %v1457 = vadd.f32 0.0, %v1456
    %v1458 = vpop.f32.mrf.mxu0
    %1459 = vdwg.mxu0
    %1460 = vrot.lane.b32.xlu0 %v1295, 120
    %v1461 = vpop.permute.xlu0 %1460
    %1462 = vrot.lane.b32.xlu0 %v329, 120
    %v1463 = vpop.permute.xlu0 %1462
    %v1464 = vsel %vm341, %v1461, 0
    %v1466 = vsel %vm341, %v1463, 0
    %1468 = vmatprep.subr.mxu0 0.0
    %1469 = vmatpush1.xpose.msra.mxu0 0.0
    %1470 = vmatprep.subr.mxu0 0.0
    %1471 = vmatpush1.xpose.msra.mxu0 0.0
    %1472 = vmatprep.subr.mxu0 0.0
    %1473 = vmatpush1.xpose.msra.mxu0 0.0
    %1474 = vmatprep.subr.mxu0 0.0
    %1475 = vmatpush1.xpose.msra.mxu0 0.0
    %1476 = vmatprep.subr.mxu0 0.0
    %1477 = vmatpush1.xpose.msra.mxu0 0.0
    %1478 = vmatprep.subr.mxu0 0.0
    %1479 = vmatpush1.xpose.msra.mxu0 0.0
    %1480 = vmatprep.subr.mxu0 0.0
    %1481 = vmatpush1.xpose.msra.mxu0 0.0
    %1482 = vmatprep.subr.mxu0 0.0
    %1483 = vmatpush1.xpose.msra.mxu0 0.0
    %1484 = vmatprep.subr.mxu0 0.0
    %1485 = vmatpush1.xpose.msra.mxu0 0.0
    %1486 = vmatprep.subr.mxu0 0.0
    %1487 = vmatpush1.xpose.msra.mxu0 0.0
    %1488 = vmatprep.subr.mxu0 0.0
    %1489 = vmatpush1.xpose.msra.mxu0 0.0
    %1490 = vmatprep.subr.mxu0 0.0
    %1491 = vmatpush1.xpose.msra.mxu0 0.0
    %1492 = vmatprep.subr.mxu0 0.0
    %1493 = vmatpush1.xpose.msra.mxu0 0.0
    %1494 = vmatprep.subr.mxu0 0.0
    %1495 = vmatpush1.xpose.msra.mxu0 0.0
    %1496 = vmatprep.subr.mxu0 0.0
    %1497 = vmatpush1.xpose.msra.mxu0 0.0
    %1498 = vmatprep.subr.mxu0 0.0
    %1499 = vmatpush1.xpose.msra.mxu0 %v1466
    %1500 = vmatprep.subr.mxu0 0.0
    %1501 = vmatpush2.xpose.msra.mxu0 0.0
    %1502 = vmatprep.subr.mxu0 0.0
    %1503 = vmatpush2.xpose.msra.mxu0 0.0
    %1504 = vmatprep.subr.mxu0 0.0
    %1505 = vmatpush2.xpose.msra.mxu0 0.0
    %1506 = vmatprep.subr.mxu0 0.0
    %1507 = vmatpush2.xpose.msra.mxu0 0.0
    %1508 = vmatprep.subr.mxu0 0.0
    %1509 = vmatpush2.xpose.msra.mxu0 0.0
    %1510 = vmatprep.subr.mxu0 0.0
    %1511 = vmatpush2.xpose.msra.mxu0 0.0
    %1512 = vmatprep.subr.mxu0 0.0
    %1513 = vmatpush2.xpose.msra.mxu0 0.0
    %1514 = vmatprep.subr.mxu0 0.0
    %1515 = vmatpush2.xpose.msra.mxu0 0.0
    %1516 = vmatprep.subr.mxu0 0.0
    %1517 = vmatpush2.xpose.msra.mxu0 0.0
    %1518 = vmatprep.subr.mxu0 0.0
    %1519 = vmatpush2.xpose.msra.mxu0 0.0
    %1520 = vmatprep.subr.mxu0 0.0
    %1521 = vmatpush2.xpose.msra.mxu0 0.0
    %1522 = vmatprep.subr.mxu0 0.0
    %1523 = vmatpush2.xpose.msra.mxu0 0.0
    %1524 = vmatprep.subr.mxu0 0.0
    %1525 = vmatpush2.xpose.msra.mxu0 0.0
    %1526 = vmatprep.subr.mxu0 0.0
    %1527 = vmatpush2.xpose.msra.mxu0 0.0
    %1528 = vmatprep.subr.mxu0 0.0
    %1529 = vmatpush2.xpose.msra.mxu0 0.0
    %1530 = vmatprep.subr.mxu0 0.0
    %1531 = vmatpush2.xpose.msra.mxu0 0.0
    %1532 = vmatprep.mubr.f32.mxu0 0.0
    %1533 = vmatmul.mubr.f32.gmra.mxu0 %v1464
    %v1534 = vpop.f32.mrf.mxu0
    %v1535 = vadd.f32 0.0, %v1534
    %v1536 = vpop.f32.mrf.mxu0
    %1537 = vdwg.mxu0
    %v1538 = vsel %vm341, %v1535, -inf
    %1539 = vmax.xlane.f32.xlu0 %v1538
    %v1540 = vpop.xlane.xlu0 %1539
    %v1541 = vsub.f32 %v1535, %v1540
    %v1542 = vmul.f32 %v1541, 1.442695
    %v1543 = vpow.pop %v1542
    %v1544 = vsel %vm341, %v1543, 0.0
    %1545 = vadd.xlane.f32.xlu0 %v1544
    %v1546 = vpop.xlane.xlu0 %1545
    %v1547 = vrcp.pop %v1546
    %v1548 = vmul.f32 %v1543, %v1547
    %1549 = vrot.lane.b32.xlu0 %v339, 88
    %v1550 = vpop.permute.xlu0 %1549
    %v1553 = vsel %vm341, %v1548, 0
    %1555 = vmatprep.subr.mxu0 0.0
    %1556 = vmatpush1.msra.mxu0 0.0
    %1557 = vmatprep.subr.mxu0 0.0
    %1558 = vmatpush1.msra.mxu0 0.0
    %1559 = vmatprep.subr.mxu0 0.0
    %1560 = vmatpush1.msra.mxu0 0.0
    %1561 = vmatprep.subr.mxu0 0.0
    %1562 = vmatpush1.msra.mxu0 0.0
    %1563 = vmatprep.subr.mxu0 0.0
    %1564 = vmatpush1.msra.mxu0 0.0
    %1565 = vmatprep.subr.mxu0 0.0
    %1566 = vmatpush1.msra.mxu0 0.0
    %1567 = vmatprep.subr.mxu0 0.0
    %1568 = vmatpush1.msra.mxu0 0.0
    %1569 = vmatprep.subr.mxu0 0.0
    %1570 = vmatpush1.msra.mxu0 0.0
    %1571 = vmatprep.subr.mxu0 0.0
    %1572 = vmatpush1.msra.mxu0 0.0
    %1573 = vmatprep.subr.mxu0 0.0
    %1574 = vmatpush1.msra.mxu0 0.0
    %1575 = vmatprep.subr.mxu0 0.0
    %1576 = vmatpush1.msra.mxu0 0.0
    %1577 = vmatprep.subr.mxu0 0.0
    %1578 = vmatpush1.msra.mxu0 0.0
    %1579 = vmatprep.subr.mxu0 0.0
    %1580 = vmatpush1.msra.mxu0 0.0
    %1581 = vmatprep.subr.mxu0 0.0
    %1582 = vmatpush1.msra.mxu0 0.0
    %1583 = vmatprep.subr.mxu0 0.0
    %1584 = vmatpush1.msra.mxu0 0.0
    %1585 = vmatprep.subr.mxu0 0.0
    %1586 = vmatpush1.msra.mxu0 %v1550
    %1587 = vmatprep.subr.mxu0 0.0
    %1588 = vmatpush2.msra.mxu0 0.0
    %1589 = vmatprep.subr.mxu0 0.0
    %1590 = vmatpush2.msra.mxu0 0.0
    %1591 = vmatprep.subr.mxu0 0.0
    %1592 = vmatpush2.msra.mxu0 0.0
    %1593 = vmatprep.subr.mxu0 0.0
    %1594 = vmatpush2.msra.mxu0 0.0
    %1595 = vmatprep.subr.mxu0 0.0
    %1596 = vmatpush2.msra.mxu0 0.0
    %1597 = vmatprep.subr.mxu0 0.0
    %1598 = vmatpush2.msra.mxu0 0.0
    %1599 = vmatprep.subr.mxu0 0.0
    %1600 = vmatpush2.msra.mxu0 0.0
    %1601 = vmatprep.subr.mxu0 0.0
    %1602 = vmatpush2.msra.mxu0 0.0
    %1603 = vmatprep.subr.mxu0 0.0
    %1604 = vmatpush2.msra.mxu0 0.0
    %1605 = vmatprep.subr.mxu0 0.0
    %1606 = vmatpush2.msra.mxu0 0.0
    %1607 = vmatprep.subr.mxu0 0.0
    %1608 = vmatpush2.msra.mxu0 0.0
    %1609 = vmatprep.subr.mxu0 0.0
    %1610 = vmatpush2.msra.mxu0 0.0
    %1611 = vmatprep.subr.mxu0 0.0
    %1612 = vmatpush2.msra.mxu0 0.0
    %1613 = vmatprep.subr.mxu0 0.0
    %1614 = vmatpush2.msra.mxu0 0.0
    %1615 = vmatprep.subr.mxu0 0.0
    %1616 = vmatpush2.msra.mxu0 0.0
    %1617 = vmatprep.subr.mxu0 0.0
    %1618 = vmatpush2.msra.mxu0 0.0
    %1619 = vmatprep.mubr.f32.mxu0 0.0
    %1620 = vmatmul.mubr.f32.gmra.mxu0 %v1553
    %v1621 = vpop.f32.mrf.mxu0
    %v1622 = vadd.f32 0.0, %v1621
    %v1623 = vpop.f32.mrf.mxu0
    %1624 = vdwg.mxu0
    %v1626 = vsel %vm341, %v1622, 0
    %1628 = vmatprep.subr.mxu0 0.0
    %1629 = vmatpush1.msra.mxu0 0.0
    %1630 = vmatprep.subr.mxu0 0.0
    %1631 = vmatpush1.msra.mxu0 0.0
    %1632 = vmatprep.subr.mxu0 0.0
    %1633 = vmatpush1.msra.mxu0 0.0
    %1634 = vmatprep.subr.mxu0 0.0
    %1635 = vmatpush1.msra.mxu0 0.0
    %1636 = vmatprep.subr.mxu0 0.0
    %1637 = vmatpush1.msra.mxu0 0.0
    %1638 = vmatprep.subr.mxu0 0.0
    %1639 = vmatpush1.msra.mxu0 0.0
    %1640 = vmatprep.subr.mxu0 0.0
    %1641 = vmatpush1.msra.mxu0 0.0
    %1642 = vmatprep.subr.mxu0 0.0
    %1643 = vmatpush1.msra.mxu0 0.0
    %1644 = vmatprep.subr.mxu0 0.0
    %1645 = vmatpush1.msra.mxu0 0.0
    %1646 = vmatprep.subr.mxu0 0.0
    %1647 = vmatpush1.msra.mxu0 0.0
    %1648 = vmatprep.subr.mxu0 0.0
    %1649 = vmatpush1.msra.mxu0 0.0
    %1650 = vmatprep.subr.mxu0 0.0
    %1651 = vmatpush1.msra.mxu0 0.0
    %1652 = vmatprep.subr.mxu0 0.0
    %1653 = vmatpush1.msra.mxu0 0.0
    %1654 = vmatprep.subr.mxu0 0.0
    %1655 = vmatpush1.msra.mxu0 0.0
    %1656 = vmatprep.subr.mxu0 0.0
    %1657 = vmatpush1.msra.mxu0 0.0
    %1658 = vmatprep.subr.mxu0 0.0
    %1659 = vmatpush1.msra.mxu0 %v158
    %1660 = vmatprep.subr.mxu0 0.0
    %1661 = vmatpush2.msra.mxu0 0.0
    %1662 = vmatprep.subr.mxu0 0.0
    %1663 = vmatpush2.msra.mxu0 0.0
    %1664 = vmatprep.subr.mxu0 0.0
    %1665 = vmatpush2.msra.mxu0 0.0
    %1666 = vmatprep.subr.mxu0 0.0
    %1667 = vmatpush2.msra.mxu0 0.0
    %1668 = vmatprep.subr.mxu0 0.0
    %1669 = vmatpush2.msra.mxu0 0.0
    %1670 = vmatprep.subr.mxu0 0.0
    %1671 = vmatpush2.msra.mxu0 0.0
    %1672 = vmatprep.subr.mxu0 0.0
    %1673 = vmatpush2.msra.mxu0 0.0
    %1674 = vmatprep.subr.mxu0 0.0
    %1675 = vmatpush2.msra.mxu0 0.0
    %1676 = vmatprep.subr.mxu0 0.0
    %1677 = vmatpush2.msra.mxu0 0.0
    %1678 = vmatprep.subr.mxu0 0.0
    %1679 = vmatpush2.msra.mxu0 0.0
    %1680 = vmatprep.subr.mxu0 0.0
    %1681 = vmatpush2.msra.mxu0 0.0
    %1682 = vmatprep.subr.mxu0 0.0
    %1683 = vmatpush2.msra.mxu0 0.0
    %1684 = vmatprep.subr.mxu0 0.0
    %1685 = vmatpush2.msra.mxu0 0.0
    %1686 = vmatprep.subr.mxu0 0.0
    %1687 = vmatpush2.msra.mxu0 0.0
    %1688 = vmatprep.subr.mxu0 0.0
    %1689 = vmatpush2.msra.mxu0 0.0
    %1690 = vmatprep.subr.mxu0 0.0
    %1691 = vmatpush2.msra.mxu0 0.0
    %1692 = vmatprep.mubr.f32.mxu0 0.0
    %1693 = vmatmul.mubr.f32.gmra.mxu0 %v1626
    %v1694 = vpop.f32.mrf.mxu0
    %v1695 = vadd.f32 0.0, %v1694
    %v1696 = vpop.f32.mrf.mxu0
    %1697 = vdwg.mxu0
    %v1699 = vsel %vm341, %v1457, 0
    %1701 = vmatprep.subr.mxu0 0.0
    %1702 = vmatpush1.msra.mxu0 0.0
    %1703 = vmatprep.subr.mxu0 0.0
    %1704 = vmatpush1.msra.mxu0 0.0
    %1705 = vmatprep.subr.mxu0 0.0
    %1706 = vmatpush1.msra.mxu0 0.0
    %1707 = vmatprep.subr.mxu0 0.0
    %1708 = vmatpush1.msra.mxu0 0.0
    %1709 = vmatprep.subr.mxu0 0.0
    %1710 = vmatpush1.msra.mxu0 0.0
    %1711 = vmatprep.subr.mxu0 0.0
    %1712 = vmatpush1.msra.mxu0 0.0
    %1713 = vmatprep.subr.mxu0 0.0
    %1714 = vmatpush1.msra.mxu0 0.0
    %1715 = vmatprep.subr.mxu0 0.0
    %1716 = vmatpush1.msra.mxu0 0.0
    %1717 = vmatprep.subr.mxu0 0.0
    %1718 = vmatpush1.msra.mxu0 0.0
    %1719 = vmatprep.subr.mxu0 0.0
    %1720 = vmatpush1.msra.mxu0 0.0
    %1721 = vmatprep.subr.mxu0 0.0
    %1722 = vmatpush1.msra.mxu0 0.0
    %1723 = vmatprep.subr.mxu0 0.0
    %1724 = vmatpush1.msra.mxu0 0.0
    %1725 = vmatprep.subr.mxu0 0.0
    %1726 = vmatpush1.msra.mxu0 0.0
    %1727 = vmatprep.subr.mxu0 0.0
    %1728 = vmatpush1.msra.mxu0 0.0
    %1729 = vmatprep.subr.mxu0 0.0
    %1730 = vmatpush1.msra.mxu0 0.0
    %1731 = vmatprep.subr.mxu0 0.0
    %1732 = vmatpush1.msra.mxu0 %v157
    %1733 = vmatprep.subr.mxu0 0.0
    %1734 = vmatpush2.msra.mxu0 0.0
    %1735 = vmatprep.subr.mxu0 0.0
    %1736 = vmatpush2.msra.mxu0 0.0
    %1737 = vmatprep.subr.mxu0 0.0
    %1738 = vmatpush2.msra.mxu0 0.0
    %1739 = vmatprep.subr.mxu0 0.0
    %1740 = vmatpush2.msra.mxu0 0.0
    %1741 = vmatprep.subr.mxu0 0.0
    %1742 = vmatpush2.msra.mxu0 0.0
    %1743 = vmatprep.subr.mxu0 0.0
    %1744 = vmatpush2.msra.mxu0 0.0
    %1745 = vmatprep.subr.mxu0 0.0
    %1746 = vmatpush2.msra.mxu0 0.0
    %1747 = vmatprep.subr.mxu0 0.0
    %1748 = vmatpush2.msra.mxu0 0.0
    %1749 = vmatprep.subr.mxu0 0.0
    %1750 = vmatpush2.msra.mxu0 0.0
    %1751 = vmatprep.subr.mxu0 0.0
    %1752 = vmatpush2.msra.mxu0 0.0
    %1753 = vmatprep.subr.mxu0 0.0
    %1754 = vmatpush2.msra.mxu0 0.0
    %1755 = vmatprep.subr.mxu0 0.0
    %1756 = vmatpush2.msra.mxu0 0.0
    %1757 = vmatprep.subr.mxu0 0.0
    %1758 = vmatpush2.msra.mxu0 0.0
    %1759 = vmatprep.subr.mxu0 0.0
    %1760 = vmatpush2.msra.mxu0 0.0
    %1761 = vmatprep.subr.mxu0 0.0
    %1762 = vmatpush2.msra.mxu0 0.0
    %1763 = vmatprep.subr.mxu0 0.0
    %1764 = vmatpush2.msra.mxu0 0.0
    %1765 = vmatprep.mubr.f32.mxu0 0.0
    %1766 = vmatmul.mubr.f32.gmra.mxu0 %v1699
    %v1767 = vpop.f32.mrf.mxu0
    %v1768 = vadd.f32 %v1695, %v1767
    %v1769 = vpop.f32.mrf.mxu0
    %1770 = vdwg.mxu0
    %1771 = vrot.lane.b32.xlu0 %v1295, 112
    %v1772 = vpop.permute.xlu0 %1771
    %1773 = vrot.lane.b32.xlu0 %v329, 112
    %v1774 = vpop.permute.xlu0 %1773
    %v1775 = vsel %vm341, %v1772, 0
    %v1777 = vsel %vm341, %v1774, 0
    %1779 = vmatprep.subr.mxu0 0.0
    %1780 = vmatpush1.xpose.msra.mxu0 0.0
    %1781 = vmatprep.subr.mxu0 0.0
    %1782 = vmatpush1.xpose.msra.mxu0 0.0
    %1783 = vmatprep.subr.mxu0 0.0
    %1784 = vmatpush1.xpose.msra.mxu0 0.0
    %1785 = vmatprep.subr.mxu0 0.0
    %1786 = vmatpush1.xpose.msra.mxu0 0.0
    %1787 = vmatprep.subr.mxu0 0.0
    %1788 = vmatpush1.xpose.msra.mxu0 0.0
    %1789 = vmatprep.subr.mxu0 0.0
    %1790 = vmatpush1.xpose.msra.mxu0 0.0
    %1791 = vmatprep.subr.mxu0 0.0
    %1792 = vmatpush1.xpose.msra.mxu0 0.0
    %1793 = vmatprep.subr.mxu0 0.0
    %1794 = vmatpush1.xpose.msra.mxu0 0.0
    %1795 = vmatprep.subr.mxu0 0.0
    %1796 = vmatpush1.xpose.msra.mxu0 0.0
    %1797 = vmatprep.subr.mxu0 0.0
    %1798 = vmatpush1.xpose.msra.mxu0 0.0
    %1799 = vmatprep.subr.mxu0 0.0
    %1800 = vmatpush1.xpose.msra.mxu0 0.0
    %1801 = vmatprep.subr.mxu0 0.0
    %1802 = vmatpush1.xpose.msra.mxu0 0.0
    %1803 = vmatprep.subr.mxu0 0.0
    %1804 = vmatpush1.xpose.msra.mxu0 0.0
    %1805 = vmatprep.subr.mxu0 0.0
    %1806 = vmatpush1.xpose.msra.mxu0 0.0
    %1807 = vmatprep.subr.mxu0 0.0
    %1808 = vmatpush1.xpose.msra.mxu0 0.0
    %1809 = vmatprep.subr.mxu0 0.0
    %1810 = vmatpush1.xpose.msra.mxu0 %v1777
    %1811 = vmatprep.subr.mxu0 0.0
    %1812 = vmatpush2.xpose.msra.mxu0 0.0
    %1813 = vmatprep.subr.mxu0 0.0
    %1814 = vmatpush2.xpose.msra.mxu0 0.0
    %1815 = vmatprep.subr.mxu0 0.0
    %1816 = vmatpush2.xpose.msra.mxu0 0.0
    %1817 = vmatprep.subr.mxu0 0.0
    %1818 = vmatpush2.xpose.msra.mxu0 0.0
    %1819 = vmatprep.subr.mxu0 0.0
    %1820 = vmatpush2.xpose.msra.mxu0 0.0
    %1821 = vmatprep.subr.mxu0 0.0
    %1822 = vmatpush2.xpose.msra.mxu0 0.0
    %1823 = vmatprep.subr.mxu0 0.0
    %1824 = vmatpush2.xpose.msra.mxu0 0.0
    %1825 = vmatprep.subr.mxu0 0.0
    %1826 = vmatpush2.xpose.msra.mxu0 0.0
    %1827 = vmatprep.subr.mxu0 0.0
    %1828 = vmatpush2.xpose.msra.mxu0 0.0
    %1829 = vmatprep.subr.mxu0 0.0
    %1830 = vmatpush2.xpose.msra.mxu0 0.0
    %1831 = vmatprep.subr.mxu0 0.0
    %1832 = vmatpush2.xpose.msra.mxu0 0.0
    %1833 = vmatprep.subr.mxu0 0.0
    %1834 = vmatpush2.xpose.msra.mxu0 0.0
    %1835 = vmatprep.subr.mxu0 0.0
    %1836 = vmatpush2.xpose.msra.mxu0 0.0
    %1837 = vmatprep.subr.mxu0 0.0
    %1838 = vmatpush2.xpose.msra.mxu0 0.0
    %1839 = vmatprep.subr.mxu0 0.0
    %1840 = vmatpush2.xpose.msra.mxu0 0.0
    %1841 = vmatprep.subr.mxu0 0.0
    %1842 = vmatpush2.xpose.msra.mxu0 0.0
    %1843 = vmatprep.mubr.f32.mxu0 0.0
    %1844 = vmatmul.mubr.f32.gmra.mxu0 %v1775
    %v1845 = vpop.f32.mrf.mxu0
    %v1846 = vadd.f32 0.0, %v1845
    %v1847 = vpop.f32.mrf.mxu0
    %1848 = vdwg.mxu0
    %v1849 = vsel %vm341, %v1846, -inf
    %1850 = vmax.xlane.f32.xlu0 %v1849
    %v1851 = vpop.xlane.xlu0 %1850
    %v1852 = vsub.f32 %v1846, %v1851
    %v1853 = vmul.f32 %v1852, 1.442695
    %v1854 = vpow.pop %v1853
    %v1855 = vsel %vm341, %v1854, 0.0
    %1856 = vadd.xlane.f32.xlu0 %v1855
    %v1857 = vpop.xlane.xlu0 %1856
    %v1858 = vrcp.pop %v1857
    %v1859 = vmul.f32 %v1854, %v1858
    %1860 = vrot.lane.b32.xlu0 %v339, 80
    %v1861 = vpop.permute.xlu0 %1860
    %v1864 = vsel %vm341, %v1859, 0
    %1866 = vmatprep.subr.mxu0 0.0
    %1867 = vmatpush1.msra.mxu0 0.0
    %1868 = vmatprep.subr.mxu0 0.0
    %1869 = vmatpush1.msra.mxu0 0.0
    %1870 = vmatprep.subr.mxu0 0.0
    %1871 = vmatpush1.msra.mxu0 0.0
    %1872 = vmatprep.subr.mxu0 0.0
    %1873 = vmatpush1.msra.mxu0 0.0
    %1874 = vmatprep.subr.mxu0 0.0
    %1875 = vmatpush1.msra.mxu0 0.0
    %1876 = vmatprep.subr.mxu0 0.0
    %1877 = vmatpush1.msra.mxu0 0.0
    %1878 = vmatprep.subr.mxu0 0.0
    %1879 = vmatpush1.msra.mxu0 0.0
    %1880 = vmatprep.subr.mxu0 0.0
    %1881 = vmatpush1.msra.mxu0 0.0
    %1882 = vmatprep.subr.mxu0 0.0
    %1883 = vmatpush1.msra.mxu0 0.0
    %1884 = vmatprep.subr.mxu0 0.0
    %1885 = vmatpush1.msra.mxu0 0.0
    %1886 = vmatprep.subr.mxu0 0.0
    %1887 = vmatpush1.msra.mxu0 0.0
    %1888 = vmatprep.subr.mxu0 0.0
    %1889 = vmatpush1.msra.mxu0 0.0
    %1890 = vmatprep.subr.mxu0 0.0
    %1891 = vmatpush1.msra.mxu0 0.0
    %1892 = vmatprep.subr.mxu0 0.0
    %1893 = vmatpush1.msra.mxu0 0.0
    %1894 = vmatprep.subr.mxu0 0.0
    %1895 = vmatpush1.msra.mxu0 0.0
    %1896 = vmatprep.subr.mxu0 0.0
    %1897 = vmatpush1.msra.mxu0 %v1861
    %1898 = vmatprep.subr.mxu0 0.0
    %1899 = vmatpush2.msra.mxu0 0.0
    %1900 = vmatprep.subr.mxu0 0.0
    %1901 = vmatpush2.msra.mxu0 0.0
    %1902 = vmatprep.subr.mxu0 0.0
    %1903 = vmatpush2.msra.mxu0 0.0
    %1904 = vmatprep.subr.mxu0 0.0
    %1905 = vmatpush2.msra.mxu0 0.0
    %1906 = vmatprep.subr.mxu0 0.0
    %1907 = vmatpush2.msra.mxu0 0.0
    %1908 = vmatprep.subr.mxu0 0.0
    %1909 = vmatpush2.msra.mxu0 0.0
    %1910 = vmatprep.subr.mxu0 0.0
    %1911 = vmatpush2.msra.mxu0 0.0
    %1912 = vmatprep.subr.mxu0 0.0
    %1913 = vmatpush2.msra.mxu0 0.0
    %1914 = vmatprep.subr.mxu0 0.0
    %1915 = vmatpush2.msra.mxu0 0.0
    %1916 = vmatprep.subr.mxu0 0.0
    %1917 = vmatpush2.msra.mxu0 0.0
    %1918 = vmatprep.subr.mxu0 0.0
    %1919 = vmatpush2.msra.mxu0 0.0
    %1920 = vmatprep.subr.mxu0 0.0
    %1921 = vmatpush2.msra.mxu0 0.0
    %1922 = vmatprep.subr.mxu0 0.0
    %1923 = vmatpush2.msra.mxu0 0.0
    %1924 = vmatprep.subr.mxu0 0.0
    %1925 = vmatpush2.msra.mxu0 0.0
    %1926 = vmatprep.subr.mxu0 0.0
    %1927 = vmatpush2.msra.mxu0 0.0
    %1928 = vmatprep.subr.mxu0 0.0
    %1929 = vmatpush2.msra.mxu0 0.0
    %1930 = vmatprep.mubr.f32.mxu0 0.0
    %1931 = vmatmul.mubr.f32.gmra.mxu0 %v1864
    %v1932 = vpop.f32.mrf.mxu0
    %v1933 = vadd.f32 0.0, %v1932
    %v1934 = vpop.f32.mrf.mxu0
    %1935 = vdwg.mxu0
    %v1937 = vsel %vm341, %v1933, 0
    %1939 = vmatprep.subr.mxu0 0.0
    %1940 = vmatpush1.msra.mxu0 0.0
    %1941 = vmatprep.subr.mxu0 0.0
    %1942 = vmatpush1.msra.mxu0 0.0
    %1943 = vmatprep.subr.mxu0 0.0
    %1944 = vmatpush1.msra.mxu0 0.0
    %1945 = vmatprep.subr.mxu0 0.0
    %1946 = vmatpush1.msra.mxu0 0.0
    %1947 = vmatprep.subr.mxu0 0.0
    %1948 = vmatpush1.msra.mxu0 0.0
    %1949 = vmatprep.subr.mxu0 0.0
    %1950 = vmatpush1.msra.mxu0 0.0
    %1951 = vmatprep.subr.mxu0 0.0
    %1952 = vmatpush1.msra.mxu0 0.0
    %1953 = vmatprep.subr.mxu0 0.0
    %1954 = vmatpush1.msra.mxu0 0.0
    %1955 = vmatprep.subr.mxu0 0.0
    %1956 = vmatpush1.msra.mxu0 0.0
    %1957 = vmatprep.subr.mxu0 0.0
    %1958 = vmatpush1.msra.mxu0 0.0
    %1959 = vmatprep.subr.mxu0 0.0
    %1960 = vmatpush1.msra.mxu0 0.0
    %1961 = vmatprep.subr.mxu0 0.0
    %1962 = vmatpush1.msra.mxu0 0.0
    %1963 = vmatprep.subr.mxu0 0.0
    %1964 = vmatpush1.msra.mxu0 0.0
    %1965 = vmatprep.subr.mxu0 0.0
    %1966 = vmatpush1.msra.mxu0 0.0
    %1967 = vmatprep.subr.mxu0 0.0
    %1968 = vmatpush1.msra.mxu0 0.0
    %1969 = vmatprep.subr.mxu0 0.0
    %1970 = vmatpush1.msra.mxu0 %v159
    %1971 = vmatprep.subr.mxu0 0.0
    %1972 = vmatpush2.msra.mxu0 0.0
    %1973 = vmatprep.subr.mxu0 0.0
    %1974 = vmatpush2.msra.mxu0 0.0
    %1975 = vmatprep.subr.mxu0 0.0
    %1976 = vmatpush2.msra.mxu0 0.0
    %1977 = vmatprep.subr.mxu0 0.0
    %1978 = vmatpush2.msra.mxu0 0.0
    %1979 = vmatprep.subr.mxu0 0.0
    %1980 = vmatpush2.msra.mxu0 0.0
    %1981 = vmatprep.subr.mxu0 0.0
    %1982 = vmatpush2.msra.mxu0 0.0
    %1983 = vmatprep.subr.mxu0 0.0
    %1984 = vmatpush2.msra.mxu0 0.0
    %1985 = vmatprep.subr.mxu0 0.0
    %1986 = vmatpush2.msra.mxu0 0.0
    %1987 = vmatprep.subr.mxu0 0.0
    %1988 = vmatpush2.msra.mxu0 0.0
    %1989 = vmatprep.subr.mxu0 0.0
    %1990 = vmatpush2.msra.mxu0 0.0
    %1991 = vmatprep.subr.mxu0 0.0
    %1992 = vmatpush2.msra.mxu0 0.0
    %1993 = vmatprep.subr.mxu0 0.0
    %1994 = vmatpush2.msra.mxu0 0.0
    %1995 = vmatprep.subr.mxu0 0.0
    %1996 = vmatpush2.msra.mxu0 0.0
    %1997 = vmatprep.subr.mxu0 0.0
    %1998 = vmatpush2.msra.mxu0 0.0
    %1999 = vmatprep.subr.mxu0 0.0
    %2000 = vmatpush2.msra.mxu0 0.0
    %2001 = vmatprep.subr.mxu0 0.0
    %2002 = vmatpush2.msra.mxu0 0.0
    %2003 = vmatprep.mubr.f32.mxu0 0.0
    %2004 = vmatmul.mubr.f32.gmra.mxu0 %v1937
    %v2005 = vpop.f32.mrf.mxu0
    %v2006 = vadd.f32 0.0, %v2005
    %v2007 = vpop.f32.mrf.mxu0
    %2008 = vdwg.mxu0
    %v2009 = vadd.f32 %v1768, %v2006
    %2010 = vrot.lane.b32.xlu0 %v1295, 104
    %v2011 = vpop.permute.xlu0 %2010
    %2012 = vrot.lane.b32.xlu0 %v329, 104
    %v2013 = vpop.permute.xlu0 %2012
    %v2014 = vsel %vm341, %v2011, 0
    %v2016 = vsel %vm341, %v2013, 0
    %2018 = vmatprep.subr.mxu0 0.0
    %2019 = vmatpush1.xpose.msra.mxu0 0.0
    %2020 = vmatprep.subr.mxu0 0.0
    %2021 = vmatpush1.xpose.msra.mxu0 0.0
    %2022 = vmatprep.subr.mxu0 0.0
    %2023 = vmatpush1.xpose.msra.mxu0 0.0
    %2024 = vmatprep.subr.mxu0 0.0
    %2025 = vmatpush1.xpose.msra.mxu0 0.0
    %2026 = vmatprep.subr.mxu0 0.0
    %2027 = vmatpush1.xpose.msra.mxu0 0.0
    %2028 = vmatprep.subr.mxu0 0.0
    %2029 = vmatpush1.xpose.msra.mxu0 0.0
    %2030 = vmatprep.subr.mxu0 0.0
    %2031 = vmatpush1.xpose.msra.mxu0 0.0
    %2032 = vmatprep.subr.mxu0 0.0
    %2033 = vmatpush1.xpose.msra.mxu0 0.0
    %2034 = vmatprep.subr.mxu0 0.0
    %2035 = vmatpush1.xpose.msra.mxu0 0.0
    %2036 = vmatprep.subr.mxu0 0.0
    %2037 = vmatpush1.xpose.msra.mxu0 0.0
    %2038 = vmatprep.subr.mxu0 0.0
    %2039 = vmatpush1.xpose.msra.mxu0 0.0
    %2040 = vmatprep.subr.mxu0 0.0
    %2041 = vmatpush1.xpose.msra.mxu0 0.0
    %2042 = vmatprep.subr.mxu0 0.0
    %2043 = vmatpush1.xpose.msra.mxu0 0.0
    %2044 = vmatprep.subr.mxu0 0.0
    %2045 = vmatpush1.xpose.msra.mxu0 0.0
    %2046 = vmatprep.subr.mxu0 0.0
    %2047 = vmatpush1.xpose.msra.mxu0 0.0
    %2048 = vmatprep.subr.mxu0 0.0
    %2049 = vmatpush1.xpose.msra.mxu0 %v2016
    %2050 = vmatprep.subr.mxu0 0.0
    %2051 = vmatpush2.xpose.msra.mxu0 0.0
    %2052 = vmatprep.subr.mxu0 0.0
    %2053 = vmatpush2.xpose.msra.mxu0 0.0
    %2054 = vmatprep.subr.mxu0 0.0
    %2055 = vmatpush2.xpose.msra.mxu0 0.0
    %2056 = vmatprep.subr.mxu0 0.0
    %2057 = vmatpush2.xpose.msra.mxu0 0.0
    %2058 = vmatprep.subr.mxu0 0.0
    %2059 = vmatpush2.xpose.msra.mxu0 0.0
    %2060 = vmatprep.subr.mxu0 0.0
    %2061 = vmatpush2.xpose.msra.mxu0 0.0
    %2062 = vmatprep.subr.mxu0 0.0
    %2063 = vmatpush2.xpose.msra.mxu0 0.0
    %2064 = vmatprep.subr.mxu0 0.0
    %2065 = vmatpush2.xpose.msra.mxu0 0.0
    %2066 = vmatprep.subr.mxu0 0.0
    %2067 = vmatpush2.xpose.msra.mxu0 0.0
    %2068 = vmatprep.subr.mxu0 0.0
    %2069 = vmatpush2.xpose.msra.mxu0 0.0
    %2070 = vmatprep.subr.mxu0 0.0
    %2071 = vmatpush2.xpose.msra.mxu0 0.0
    %2072 = vmatprep.subr.mxu0 0.0
    %2073 = vmatpush2.xpose.msra.mxu0 0.0
    %2074 = vmatprep.subr.mxu0 0.0
    %2075 = vmatpush2.xpose.msra.mxu0 0.0
    %2076 = vmatprep.subr.mxu0 0.0
    %2077 = vmatpush2.xpose.msra.mxu0 0.0
    %2078 = vmatprep.subr.mxu0 0.0
    %2079 = vmatpush2.xpose.msra.mxu0 0.0
    %2080 = vmatprep.subr.mxu0 0.0
    %2081 = vmatpush2.xpose.msra.mxu0 0.0
    %2082 = vmatprep.mubr.f32.mxu0 0.0
    %2083 = vmatmul.mubr.f32.gmra.mxu0 %v2014
    %v2084 = vpop.f32.mrf.mxu0
    %v2085 = vadd.f32 0.0, %v2084
    %v2086 = vpop.f32.mrf.mxu0
    %2087 = vdwg.mxu0
    %v2088 = vsel %vm341, %v2085, -inf
    %2089 = vmax.xlane.f32.xlu0 %v2088
    %v2090 = vpop.xlane.xlu0 %2089
    %v2091 = vsub.f32 %v2085, %v2090
    %v2092 = vmul.f32 %v2091, 1.442695
    %v2093 = vpow.pop %v2092
    %v2094 = vsel %vm341, %v2093, 0.0
    %2095 = vadd.xlane.f32.xlu0 %v2094
    %v2096 = vpop.xlane.xlu0 %2095
    %v2097 = vrcp.pop %v2096
    %v2098 = vmul.f32 %v2093, %v2097
    %2099 = vrot.lane.b32.xlu0 %v339, 72
    %v2100 = vpop.permute.xlu0 %2099
    %v2103 = vsel %vm341, %v2098, 0
    %2105 = vmatprep.subr.mxu0 0.0
    %2106 = vmatpush1.msra.mxu0 0.0
    %2107 = vmatprep.subr.mxu0 0.0
    %2108 = vmatpush1.msra.mxu0 0.0
    %2109 = vmatprep.subr.mxu0 0.0
    %2110 = vmatpush1.msra.mxu0 0.0
    %2111 = vmatprep.subr.mxu0 0.0
    %2112 = vmatpush1.msra.mxu0 0.0
    %2113 = vmatprep.subr.mxu0 0.0
    %2114 = vmatpush1.msra.mxu0 0.0
    %2115 = vmatprep.subr.mxu0 0.0
    %2116 = vmatpush1.msra.mxu0 0.0
    %2117 = vmatprep.subr.mxu0 0.0
    %2118 = vmatpush1.msra.mxu0 0.0
    %2119 = vmatprep.subr.mxu0 0.0
    %2120 = vmatpush1.msra.mxu0 0.0
    %2121 = vmatprep.subr.mxu0 0.0
    %2122 = vmatpush1.msra.mxu0 0.0
    %2123 = vmatprep.subr.mxu0 0.0
    %2124 = vmatpush1.msra.mxu0 0.0
    %2125 = vmatprep.subr.mxu0 0.0
    %2126 = vmatpush1.msra.mxu0 0.0
    %2127 = vmatprep.subr.mxu0 0.0
    %2128 = vmatpush1.msra.mxu0 0.0
    %2129 = vmatprep.subr.mxu0 0.0
    %2130 = vmatpush1.msra.mxu0 0.0
    %2131 = vmatprep.subr.mxu0 0.0
    %2132 = vmatpush1.msra.mxu0 0.0
    %2133 = vmatprep.subr.mxu0 0.0
    %2134 = vmatpush1.msra.mxu0 0.0
    %2135 = vmatprep.subr.mxu0 0.0
    %2136 = vmatpush1.msra.mxu0 %v2100
    %2137 = vmatprep.subr.mxu0 0.0
    %2138 = vmatpush2.msra.mxu0 0.0
    %2139 = vmatprep.subr.mxu0 0.0
    %2140 = vmatpush2.msra.mxu0 0.0
    %2141 = vmatprep.subr.mxu0 0.0
    %2142 = vmatpush2.msra.mxu0 0.0
    %2143 = vmatprep.subr.mxu0 0.0
    %2144 = vmatpush2.msra.mxu0 0.0
    %2145 = vmatprep.subr.mxu0 0.0
    %2146 = vmatpush2.msra.mxu0 0.0
    %2147 = vmatprep.subr.mxu0 0.0
    %2148 = vmatpush2.msra.mxu0 0.0
    %2149 = vmatprep.subr.mxu0 0.0
    %2150 = vmatpush2.msra.mxu0 0.0
    %2151 = vmatprep.subr.mxu0 0.0
    %2152 = vmatpush2.msra.mxu0 0.0
    %2153 = vmatprep.subr.mxu0 0.0
    %2154 = vmatpush2.msra.mxu0 0.0
    %2155 = vmatprep.subr.mxu0 0.0
    %2156 = vmatpush2.msra.mxu0 0.0
    %2157 = vmatprep.subr.mxu0 0.0
    %2158 = vmatpush2.msra.mxu0 0.0
    %2159 = vmatprep.subr.mxu0 0.0
    %2160 = vmatpush2.msra.mxu0 0.0
    %2161 = vmatprep.subr.mxu0 0.0
    %2162 = vmatpush2.msra.mxu0 0.0
    %2163 = vmatprep.subr.mxu0 0.0
    %2164 = vmatpush2.msra.mxu0 0.0
    %2165 = vmatprep.subr.mxu0 0.0
    %2166 = vmatpush2.msra.mxu0 0.0
    %2167 = vmatprep.subr.mxu0 0.0
    %2168 = vmatpush2.msra.mxu0 0.0
    %2169 = vmatprep.mubr.f32.mxu0 0.0
    %2170 = vmatmul.mubr.f32.gmra.mxu0 %v2103
    %v2171 = vpop.f32.mrf.mxu0
    %v2172 = vadd.f32 0.0, %v2171
    %v2173 = vpop.f32.mrf.mxu0
    %2174 = vdwg.mxu0
    %v2176 = vsel %vm341, %v2172, 0
    %2178 = vmatprep.subr.mxu0 0.0
    %2179 = vmatpush1.msra.mxu0 0.0
    %2180 = vmatprep.subr.mxu0 0.0
    %2181 = vmatpush1.msra.mxu0 0.0
    %2182 = vmatprep.subr.mxu0 0.0
    %2183 = vmatpush1.msra.mxu0 0.0
    %2184 = vmatprep.subr.mxu0 0.0
    %2185 = vmatpush1.msra.mxu0 0.0
    %2186 = vmatprep.subr.mxu0 0.0
    %2187 = vmatpush1.msra.mxu0 0.0
    %2188 = vmatprep.subr.mxu0 0.0
    %2189 = vmatpush1.msra.mxu0 0.0
    %2190 = vmatprep.subr.mxu0 0.0
    %2191 = vmatpush1.msra.mxu0 0.0
    %2192 = vmatprep.subr.mxu0 0.0
    %2193 = vmatpush1.msra.mxu0 0.0
    %2194 = vmatprep.subr.mxu0 0.0
    %2195 = vmatpush1.msra.mxu0 0.0
    %2196 = vmatprep.subr.mxu0 0.0
    %2197 = vmatpush1.msra.mxu0 0.0
    %2198 = vmatprep.subr.mxu0 0.0
    %2199 = vmatpush1.msra.mxu0 0.0
    %2200 = vmatprep.subr.mxu0 0.0
    %2201 = vmatpush1.msra.mxu0 0.0
    %2202 = vmatprep.subr.mxu0 0.0
    %2203 = vmatpush1.msra.mxu0 0.0
    %2204 = vmatprep.subr.mxu0 0.0
    %2205 = vmatpush1.msra.mxu0 0.0
    %2206 = vmatprep.subr.mxu0 0.0
    %2207 = vmatpush1.msra.mxu0 0.0
    %2208 = vmatprep.subr.mxu0 0.0
    %2209 = vmatpush1.msra.mxu0 %v160
    %2210 = vmatprep.subr.mxu0 0.0
    %2211 = vmatpush2.msra.mxu0 0.0
    %2212 = vmatprep.subr.mxu0 0.0
    %2213 = vmatpush2.msra.mxu0 0.0
    %2214 = vmatprep.subr.mxu0 0.0
    %2215 = vmatpush2.msra.mxu0 0.0
    %2216 = vmatprep.subr.mxu0 0.0
    %2217 = vmatpush2.msra.mxu0 0.0
    %2218 = vmatprep.subr.mxu0 0.0
    %2219 = vmatpush2.msra.mxu0 0.0
    %2220 = vmatprep.subr.mxu0 0.0
    %2221 = vmatpush2.msra.mxu0 0.0
    %2222 = vmatprep.subr.mxu0 0.0
    %2223 = vmatpush2.msra.mxu0 0.0
    %2224 = vmatprep.subr.mxu0 0.0
    %2225 = vmatpush2.msra.mxu0 0.0
    %2226 = vmatprep.subr.mxu0 0.0
    %2227 = vmatpush2.msra.mxu0 0.0
    %2228 = vmatprep.subr.mxu0 0.0
    %2229 = vmatpush2.msra.mxu0 0.0
    %2230 = vmatprep.subr.mxu0 0.0
    %2231 = vmatpush2.msra.mxu0 0.0
    %2232 = vmatprep.subr.mxu0 0.0
    %2233 = vmatpush2.msra.mxu0 0.0
    %2234 = vmatprep.subr.mxu0 0.0
    %2235 = vmatpush2.msra.mxu0 0.0
    %2236 = vmatprep.subr.mxu0 0.0
    %2237 = vmatpush2.msra.mxu0 0.0
    %2238 = vmatprep.subr.mxu0 0.0
    %2239 = vmatpush2.msra.mxu0 0.0
    %2240 = vmatprep.subr.mxu0 0.0
    %2241 = vmatpush2.msra.mxu0 0.0
    %2242 = vmatprep.mubr.f32.mxu0 0.0
    %2243 = vmatmul.mubr.f32.gmra.mxu0 %v2176
    %v2244 = vpop.f32.mrf.mxu0
    %v2245 = vadd.f32 0.0, %v2244
    %v2246 = vpop.f32.mrf.mxu0
    %2247 = vdwg.mxu0
    %v2248 = vadd.f32 %v2009, %v2245
    %v2249 = vlaneseq
    %v2250 = vshrl.u32 %v2249, 7
    %v2251 = vsub.s32 3, %v2250
    %v2252 = vrot.slane %v147, %v2251
    %v2253 = vadd.f32 %v1294, %v2252
    %v2254 = vadd.f32 %v2248, %v2252
    %v2255 = vadd.f32 %v94, %v2253
    %v2256 = vadd.f32 %v109, %v2254
    %v2257 = vsel %vm165, %v2255, 0.0
    %2258 = vadd.xlane.f32.xlu0 %v2257
    %v2259 = vpop.xlane.xlu0 %2258
    %v2260 = vsel %vm165, %v2256, 0.0
    %2261 = vadd.xlane.f32.xlu0 %v2260
    %v2262 = vpop.xlane.xlu0 %2261
    %v2263 = vrcp.pop 32.0
    %v2264 = vmul.f32 %v2259, %v2263
    %v2265 = vmul.f32 %v2262, %v2263
    %v2266 = vsub.f32 %v2255, %v2264
    %v2267 = vsub.f32 %v2256, %v2265
    %v2268 = vmul.f32 %v2266, %v2266
    %v2269 = vmul.f32 %v2267, %v2267
    %v2270 = vsel %vm165, %v2268, 0.0
    %2271 = vadd.xlane.f32.xlu0 %v2270
    %v2272 = vpop.xlane.xlu0 %2271
    %v2273 = vsel %vm165, %v2269, 0.0
    %2274 = vadd.xlane.f32.xlu0 %v2273
    %v2275 = vpop.xlane.xlu0 %2274
    %v2276 = vmul.f32 %v2272, %v2263
    %v2277 = vmul.f32 %v2275, %v2263
    %v2278 = vadd.f32 %v2276, 1e-05
    %v2279 = vadd.f32 %v2277, 1e-05
    %v2280 = vrsqrt.pop %v2278
    %v2281 = vrsqrt.pop %v2279
    %v2282 = vmul.f32 %v2266, %v2280
    %v2283 = vmul.f32 %v2267, %v2281
    %v2284 = vlaneseq
    %v2285 = vshrl.u32 %v2284, 7
    %v2286 = vsub.s32 5, %v2285
    %v2287 = vrot.slane %v147, %v2286
    %v2288 = vmul.f32 %v2282, %v2287
    %v2289 = vmul.f32 %v2283, %v2287
    %v2290 = vlaneseq
    %v2291 = vshrl.u32 %v2290, 7
    %v2292 = vsub.s32 6, %v2291
    %v2293 = vrot.slane %v147, %v2292
    %v2294 = vadd.f32 %v2288, %v2293
    %v2295 = vadd.f32 %v2289, %v2293
    %v2296 = vld [vmem:[#allocation2] sm:$0xff]
    %v2297 = vld [vmem:[#allocation2 + $0x8] sm:$0xff]
    %v2298 = vld [vmem:[#allocation2 + $0x10] sm:$0xff]
    %v2299 = vld [vmem:[#allocation2 + $0x18] sm:$0xff]
    %v2300 = vld [vmem:[%s8] sm:$0x1]
    %v2302 = vlaneseq
    %v2303 = vshrl.u32 %v2302, 7
    %v2304 = vsub.s32 0, %v2303
    %v2305 = vrot.slane %v2300, %v2304
    %v2308 = vsel %vm165, %v2294, 0
    %v2311 = vsel %vm165, %v2295, 0
    %2313 = vmatprep.subr.mxu0 0.0
    %2314 = vmatpush1.msra.mxu0 0.0
    %2315 = vmatprep.subr.mxu0 0.0
    %2316 = vmatpush1.msra.mxu0 0.0
    %2317 = vmatprep.subr.mxu0 0.0
    %2318 = vmatpush1.msra.mxu0 0.0
    %2319 = vmatprep.subr.mxu0 0.0
    %2320 = vmatpush1.msra.mxu0 0.0
    %2321 = vmatprep.subr.mxu0 0.0
    %2322 = vmatpush1.msra.mxu0 0.0
    %2323 = vmatprep.subr.mxu0 0.0
    %2324 = vmatpush1.msra.mxu0 0.0
    %2325 = vmatprep.subr.mxu0 0.0
    %2326 = vmatpush1.msra.mxu0 0.0
    %2327 = vmatprep.subr.mxu0 0.0
    %2328 = vmatpush1.msra.mxu0 0.0
    %2329 = vmatprep.subr.mxu0 0.0
    %2330 = vmatpush1.msra.mxu0 0.0
    %2331 = vmatprep.subr.mxu0 0.0
    %2332 = vmatpush1.msra.mxu0 0.0
    %2333 = vmatprep.subr.mxu0 0.0
    %2334 = vmatpush1.msra.mxu0 0.0
    %2335 = vmatprep.subr.mxu0 0.0
    %2336 = vmatpush1.msra.mxu0 0.0
    %2337 = vmatprep.subr.mxu0 0.0
    %2338 = vmatpush1.msra.mxu0 %v2299
    %2339 = vmatprep.subr.mxu0 0.0
    %2340 = vmatpush1.msra.mxu0 %v2298
    %2341 = vmatprep.subr.mxu0 0.0
    %2342 = vmatpush1.msra.mxu0 %v2297
    %2343 = vmatprep.subr.mxu0 0.0
    %2344 = vmatpush1.msra.mxu0 %v2296
    %2345 = vmatprep.subr.mxu0 0.0
    %2346 = vmatpush2.msra.mxu0 0.0
    %2347 = vmatprep.subr.mxu0 0.0
    %2348 = vmatpush2.msra.mxu0 0.0
    %2349 = vmatprep.subr.mxu0 0.0
    %2350 = vmatpush2.msra.mxu0 0.0
    %2351 = vmatprep.subr.mxu0 0.0
    %2352 = vmatpush2.msra.mxu0 0.0
    %2353 = vmatprep.subr.mxu0 0.0
    %2354 = vmatpush2.msra.mxu0 0.0
    %2355 = vmatprep.subr.mxu0 0.0
    %2356 = vmatpush2.msra.mxu0 0.0
    %2357 = vmatprep.subr.mxu0 0.0
    %2358 = vmatpush2.msra.mxu0 0.0
    %2359 = vmatprep.subr.mxu0 0.0
    %2360 = vmatpush2.msra.mxu0 0.0
    %2361 = vmatprep.subr.mxu0 0.0
    %2362 = vmatpush2.msra.mxu0 0.0
    %2363 = vmatprep.subr.mxu0 0.0
    %2364 = vmatpush2.msra.mxu0 0.0
    %2365 = vmatprep.subr.mxu0 0.0
    %2366 = vmatpush2.msra.mxu0 0.0
    %2367 = vmatprep.subr.mxu0 0.0
    %2368 = vmatpush2.msra.mxu0 0.0
    %2369 = vmatprep.subr.mxu0 0.0
    %2370 = vmatpush2.msra.mxu0 0.0
    %2371 = vmatprep.subr.mxu0 0.0
    %2372 = vmatpush2.msra.mxu0 0.0
    %2373 = vmatprep.subr.mxu0 0.0
    %2374 = vmatpush2.msra.mxu0 0.0
    %2375 = vmatprep.subr.mxu0 0.0
    %2376 = vmatpush2.msra.mxu0 0.0
    %2377 = vmatprep.mubr.f32.mxu0 0.0
    %2378 = vmatmul.mubr.f32.gmra.mxu0 %v2308
    %v2379 = vpop.f32.mrf.mxu0
    %v2380 = vadd.f32 %v2305, %v2379
    %v2381 = vpop.f32.mrf.mxu0
    %2382 = vmatprep.mubr.f32.mxu0 0.0
    %2383 = vmatmul.mubr.f32.gmra.mxu0 %v2311
    %v2384 = vpop.f32.mrf.mxu0
    %v2385 = vadd.f32 %v2305, %v2384
    %v2386 = vpop.f32.mrf.mxu0
    %2387 = vdwg.mxu0
    %v2388 = vmax.f32 %v2380, 0.0
    %v2389 = vmax.f32 %v2385, 0.0
    %v2390 = vld [vmem:[%s6] sm:$0xff]
    %v2391 = vld [vmem:[%s6 + $0x8] sm:$0xff]
    %v2392 = vld [vmem:[%s6 + $0x10] sm:$0xff]
    %v2393 = vld [vmem:[%s6 + $0x18] sm:$0xff]
    %v2394 = vld [vmem:[%s6 + $0x20] sm:$0xff]
    %v2395 = vld [vmem:[%s6 + $0x28] sm:$0xff]
    %v2396 = vld [vmem:[%s6 + $0x30] sm:$0xff]
    %v2397 = vld [vmem:[%s6 + $0x38] sm:$0xff]
    %v2398 = vlaneseq
    %v2399 = vshrl.u32 %v2398, 7
    %v2400 = vsub.s32 4, %v2399
    %v2401 = vrot.slane %v147, %v2400
    %vm2402 = vcmask 523264
    %v2404 = vsel %vm2402, %v2388, 0
    %v2407 = vsel %vm2402, %v2389, 0
    %2409 = vmatprep.subr.mxu0 0.0
    %2410 = vmatpush1.msra.mxu0 0.0
    %2411 = vmatprep.subr.mxu0 0.0
    %2412 = vmatpush1.msra.mxu0 0.0
    %2413 = vmatprep.subr.mxu0 0.0
    %2414 = vmatpush1.msra.mxu0 0.0
    %2415 = vmatprep.subr.mxu0 0.0
    %2416 = vmatpush1.msra.mxu0 0.0
    %2417 = vmatprep.subr.mxu0 0.0
    %2418 = vmatpush1.msra.mxu0 0.0
    %2419 = vmatprep.subr.mxu0 0.0
    %2420 = vmatpush1.msra.mxu0 0.0
    %2421 = vmatprep.subr.mxu0 0.0
    %2422 = vmatpush1.msra.mxu0 0.0
    %2423 = vmatprep.subr.mxu0 0.0
    %2424 = vmatpush1.msra.mxu0 0.0
    %2425 = vmatprep.subr.mxu0 0.0
    %2426 = vmatpush1.msra.mxu0 %v2397
    %2427 = vmatprep.subr.mxu0 0.0
    %2428 = vmatpush1.msra.mxu0 %v2396
    %2429 = vmatprep.subr.mxu0 0.0
    %2430 = vmatpush1.msra.mxu0 %v2395
    %2431 = vmatprep.subr.mxu0 0.0
    %2432 = vmatpush1.msra.mxu0 %v2394
    %2433 = vmatprep.subr.mxu0 0.0
    %2434 = vmatpush1.msra.mxu0 %v2393
    %2435 = vmatprep.subr.mxu0 0.0
    %2436 = vmatpush1.msra.mxu0 %v2392
    %2437 = vmatprep.subr.mxu0 0.0
    %2438 = vmatpush1.msra.mxu0 %v2391
    %2439 = vmatprep.subr.mxu0 0.0
    %2440 = vmatpush1.msra.mxu0 %v2390
    %2441 = vmatprep.subr.mxu0 0.0
    %2442 = vmatpush2.msra.mxu0 0.0
    %2443 = vmatprep.subr.mxu0 0.0
    %2444 = vmatpush2.msra.mxu0 0.0
    %2445 = vmatprep.subr.mxu0 0.0
    %2446 = vmatpush2.msra.mxu0 0.0
    %2447 = vmatprep.subr.mxu0 0.0
    %2448 = vmatpush2.msra.mxu0 0.0
    %2449 = vmatprep.subr.mxu0 0.0
    %2450 = vmatpush2.msra.mxu0 0.0
    %2451 = vmatprep.subr.mxu0 0.0
    %2452 = vmatpush2.msra.mxu0 0.0
    %2453 = vmatprep.subr.mxu0 0.0
    %2454 = vmatpush2.msra.mxu0 0.0
    %2455 = vmatprep.subr.mxu0 0.0
    %2456 = vmatpush2.msra.mxu0 0.0
    %2457 = vmatprep.subr.mxu0 0.0
    %2458 = vmatpush2.msra.mxu0 0.0
    %2459 = vmatprep.subr.mxu0 0.0
    %2460 = vmatpush2.msra.mxu0 0.0
    %2461 = vmatprep.subr.mxu0 0.0
    %2462 = vmatpush2.msra.mxu0 0.0
    %2463 = vmatprep.subr.mxu0 0.0
    %2464 = vmatpush2.msra.mxu0 0.0
    %2465 = vmatprep.subr.mxu0 0.0
    %2466 = vmatpush2.msra.mxu0 0.0
    %2467 = vmatprep.subr.mxu0 0.0
    %2468 = vmatpush2.msra.mxu0 0.0
    %2469 = vmatprep.subr.mxu0 0.0
    %2470 = vmatpush2.msra.mxu0 0.0
    %2471 = vmatprep.subr.mxu0 0.0
    %2472 = vmatpush2.msra.mxu0 0.0
    %2473 = vmatprep.mubr.f32.mxu0 0.0
    %2474 = vmatmul.mubr.f32.gmra.mxu0 %v2404
    %v2475 = vpop.f32.mrf.mxu0
    %v2476 = vadd.f32 %v2401, %v2475
    %v2477 = vpop.f32.mrf.mxu0
    %2478 = vmatprep.mubr.f32.mxu0 0.0
    %2479 = vmatmul.mubr.f32.gmra.mxu0 %v2407
    %v2480 = vpop.f32.mrf.mxu0
    %v2481 = vadd.f32 %v2401, %v2480
    %v2482 = vpop.f32.mrf.mxu0
    %2483 = vdwg.mxu0
    %v2484 = vadd.f32 %v2294, %v2476
    %v2485 = vadd.f32 %v2295, %v2481
    %v2486 = vsel %vm165, %v2484, 0.0
    %2487 = vadd.xlane.f32.xlu0 %v2486
    %v2488 = vpop.xlane.xlu0 %2487
    %v2489 = vsel %vm165, %v2485, 0.0
    %2490 = vadd.xlane.f32.xlu0 %v2489
    %v2491 = vpop.xlane.xlu0 %2490
    %v2492 = vmul.f32 %v2488, %v2263
    %v2493 = vmul.f32 %v2491, %v2263
    %v2494 = vsub.f32 %v2484, %v2492
    %v2495 = vsub.f32 %v2485, %v2493
    %v2496 = vmul.f32 %v2494, %v2494
    %v2497 = vmul.f32 %v2495, %v2495
    %v2498 = vsel %vm165, %v2496, 0.0
    %2499 = vadd.xlane.f32.xlu0 %v2498
    %v2500 = vpop.xlane.xlu0 %2499
    %v2501 = vsel %vm165, %v2497, 0.0
    %2502 = vadd.xlane.f32.xlu0 %v2501
    %v2503 = vpop.xlane.xlu0 %2502
    %v2504 = vmul.f32 %v2500, %v2263
    %v2505 = vmul.f32 %v2503, %v2263
    %v2506 = vadd.f32 %v2504, 1e-05
    %v2507 = vadd.f32 %v2505, 1e-05
    %v2508 = vrsqrt.pop %v2506
    %v2509 = vrsqrt.pop %v2507
    %v2510 = vmul.f32 %v2494, %v2508
    %v2511 = vmul.f32 %v2495, %v2509
    %v2512 = vlaneseq
    %v2513 = vshrl.u32 %v2512, 7
    %v2514 = vsub.s32 7, %v2513
    %v2515 = vrot.slane %v147, %v2514
    %v2516 = vmul.f32 %v2510, %v2515
    %v2517 = vmul.f32 %v2511, %v2515
    %v2518 = vlaneseq
    %v2519 = vshrl.u32 %v2518, 7
    %v2520 = vsub.s32 0, %v2519
    %v2521 = vrot.slane %v148, %v2520
    %v2522 = vadd.f32 %v2516, %v2521
    %v2523 = vadd.f32 %v2517, %v2521
    %s2524 = scalar_lea.vmem %s7, 16
    %v2525 = vld [vmem:[%s2524] sm:$0xff]
    %v2526 = vld [vmem:[%s2524 + $0x8] sm:$0x1]
    %s2527 = scalar_lea.vmem %s2, 32
    %v2528 = vld [vmem:[%s2527] sm:$0xff]
    %v2529 = vld [vmem:[%s2527 + $0x8] sm:$0xff]
    %v2530 = vld [vmem:[%s2527 + $0x10] sm:$0xff]
    %v2531 = vld [vmem:[%s2527 + $0x18] sm:$0xff]
    %s2532 = scalar_lea.vmem %s3, 32
    %v2533 = vld [vmem:[%s2532] sm:$0xff]
    %v2534 = vld [vmem:[%s2532 + $0x8] sm:$0xff]
    %v2535 = vld [vmem:[%s2532 + $0x10] sm:$0xff]
    %v2536 = vld [vmem:[%s2532 + $0x18] sm:$0xff]
    %s2537 = scalar_lea.vmem %s4, 32
    %v2538 = vld [vmem:[%s2537] sm:$0xff]
    %v2539 = vld [vmem:[%s2537 + $0x8] sm:$0xff]
    %v2540 = vld [vmem:[%s2537 + $0x10] sm:$0xff]
    %v2541 = vld [vmem:[%s2537 + $0x18] sm:$0xff]
    %v2542 = vlaneseq
    %v2543 = vshrl.u32 %v2542, 7
    %v2544 = vsub.s32 0, %v2543
    %v2545 = vrot.slane %v2525, %v2544
    %v2547 = vsel %vm165, %v2522, 0
    %v2550 = vsel %vm165, %v2523, 0
    %2552 = vmatprep.subr.mxu0 0.0
    %2553 = vmatpush1.msra.mxu0 0.0
    %2554 = vmatprep.subr.mxu0 0.0
    %2555 = vmatpush1.msra.mxu0 0.0
    %2556 = vmatprep.subr.mxu0 0.0
    %2557 = vmatpush1.msra.mxu0 0.0
    %2558 = vmatprep.subr.mxu0 0.0
    %2559 = vmatpush1.msra.mxu0 0.0
    %2560 = vmatprep.subr.mxu0 0.0
    %2561 = vmatpush1.msra.mxu0 0.0
    %2562 = vmatprep.subr.mxu0 0.0
    %2563 = vmatpush1.msra.mxu0 0.0
    %2564 = vmatprep.subr.mxu0 0.0
    %2565 = vmatpush1.msra.mxu0 0.0
    %2566 = vmatprep.subr.mxu0 0.0
    %2567 = vmatpush1.msra.mxu0 0.0
    %2568 = vmatprep.subr.mxu0 0.0
    %2569 = vmatpush1.msra.mxu0 0.0
    %2570 = vmatprep.subr.mxu0 0.0
    %2571 = vmatpush1.msra.mxu0 0.0
    %2572 = vmatprep.subr.mxu0 0.0
    %2573 = vmatpush1.msra.mxu0 0.0
    %2574 = vmatprep.subr.mxu0 0.0
    %2575 = vmatpush1.msra.mxu0 0.0
    %2576 = vmatprep.subr.mxu0 0.0
    %2577 = vmatpush1.msra.mxu0 %v2531
    %2578 = vmatprep.subr.mxu0 0.0
    %2579 = vmatpush1.msra.mxu0 %v2530
    %2580 = vmatprep.subr.mxu0 0.0
    %2581 = vmatpush1.msra.mxu0 %v2529
    %2582 = vmatprep.subr.mxu0 0.0
    %2583 = vmatpush1.msra.mxu0 %v2528
    %2584 = vmatprep.subr.mxu0 0.0
    %2585 = vmatpush2.msra.mxu0 0.0
    %2586 = vmatprep.subr.mxu0 0.0
    %2587 = vmatpush2.msra.mxu0 0.0
    %2588 = vmatprep.subr.mxu0 0.0
    %2589 = vmatpush2.msra.mxu0 0.0
    %2590 = vmatprep.subr.mxu0 0.0
    %2591 = vmatpush2.msra.mxu0 0.0
    %2592 = vmatprep.subr.mxu0 0.0
    %2593 = vmatpush2.msra.mxu0 0.0
    %2594 = vmatprep.subr.mxu0 0.0
    %2595 = vmatpush2.msra.mxu0 0.0
    %2596 = vmatprep.subr.mxu0 0.0
    %2597 = vmatpush2.msra.mxu0 0.0
    %2598 = vmatprep.subr.mxu0 0.0
    %2599 = vmatpush2.msra.mxu0 0.0
    %2600 = vmatprep.subr.mxu0 0.0
    %2601 = vmatpush2.msra.mxu0 0.0
    %2602 = vmatprep.subr.mxu0 0.0
    %2603 = vmatpush2.msra.mxu0 0.0
    %2604 = vmatprep.subr.mxu0 0.0
    %2605 = vmatpush2.msra.mxu0 0.0
    %2606 = vmatprep.subr.mxu0 0.0
    %2607 = vmatpush2.msra.mxu0 0.0
    %2608 = vmatprep.subr.mxu0 0.0
    %2609 = vmatpush2.msra.mxu0 0.0
    %2610 = vmatprep.subr.mxu0 0.0
    %2611 = vmatpush2.msra.mxu0 0.0
    %2612 = vmatprep.subr.mxu0 0.0
    %2613 = vmatpush2.msra.mxu0 0.0
    %2614 = vmatprep.subr.mxu0 0.0
    %2615 = vmatpush2.msra.mxu0 0.0
    %2616 = vmatprep.mubr.f32.mxu0 0.0
    %2617 = vmatmul.mubr.f32.gmra.mxu0 %v2547
    %v2618 = vpop.f32.mrf.mxu0
    %v2619 = vadd.f32 %v2545, %v2618
    %v2620 = vpop.f32.mrf.mxu0
    %2621 = vmatprep.mubr.f32.mxu0 0.0
    %2622 = vmatmul.mubr.f32.gmra.mxu0 %v2550
    %v2623 = vpop.f32.mrf.mxu0
    %v2624 = vadd.f32 %v2545, %v2623
    %v2625 = vpop.f32.mrf.mxu0
    %2626 = vdwg.mxu0
    %2627 = vmatprep.subr.mxu0 0.0
    %2628 = vmatpush1.msra.mxu0 0.0
    %2629 = vmatprep.subr.mxu0 0.0
    %2630 = vmatpush1.msra.mxu0 0.0
    %2631 = vmatprep.subr.mxu0 0.0
    %2632 = vmatpush1.msra.mxu0 0.0
    %2633 = vmatprep.subr.mxu0 0.0
    %2634 = vmatpush1.msra.mxu0 0.0
    %2635 = vmatprep.subr.mxu0 0.0
    %2636 = vmatpush1.msra.mxu0 0.0
    %2637 = vmatprep.subr.mxu0 0.0
    %2638 = vmatpush1.msra.mxu0 0.0
    %2639 = vmatprep.subr.mxu0 0.0
    %2640 = vmatpush1.msra.mxu0 0.0
    %2641 = vmatprep.subr.mxu0 0.0
    %2642 = vmatpush1.msra.mxu0 0.0
    %2643 = vmatprep.subr.mxu0 0.0
    %2644 = vmatpush1.msra.mxu0 0.0
    %2645 = vmatprep.subr.mxu0 0.0
    %2646 = vmatpush1.msra.mxu0 0.0
    %2647 = vmatprep.subr.mxu0 0.0
    %2648 = vmatpush1.msra.mxu0 0.0
    %2649 = vmatprep.subr.mxu0 0.0
    %2650 = vmatpush1.msra.mxu0 0.0
    %2651 = vmatprep.subr.mxu0 0.0
    %2652 = vmatpush1.msra.mxu0 %v2536
    %2653 = vmatprep.subr.mxu0 0.0
    %2654 = vmatpush1.msra.mxu0 %v2535
    %2655 = vmatprep.subr.mxu0 0.0
    %2656 = vmatpush1.msra.mxu0 %v2534
    %2657 = vmatprep.subr.mxu0 0.0
    %2658 = vmatpush1.msra.mxu0 %v2533
    %2659 = vmatprep.subr.mxu0 0.0
    %2660 = vmatpush2.msra.mxu0 0.0
    %2661 = vmatprep.subr.mxu0 0.0
    %2662 = vmatpush2.msra.mxu0 0.0
    %2663 = vmatprep.subr.mxu0 0.0
    %2664 = vmatpush2.msra.mxu0 0.0
    %2665 = vmatprep.subr.mxu0 0.0
    %2666 = vmatpush2.msra.mxu0 0.0
    %2667 = vmatprep.subr.mxu0 0.0
    %2668 = vmatpush2.msra.mxu0 0.0
    %2669 = vmatprep.subr.mxu0 0.0
    %2670 = vmatpush2.msra.mxu0 0.0
    %2671 = vmatprep.subr.mxu0 0.0
    %2672 = vmatpush2.msra.mxu0 0.0
    %2673 = vmatprep.subr.mxu0 0.0
    %2674 = vmatpush2.msra.mxu0 0.0
    %2675 = vmatprep.subr.mxu0 0.0
    %2676 = vmatpush2.msra.mxu0 0.0
    %2677 = vmatprep.subr.mxu0 0.0
    %2678 = vmatpush2.msra.mxu0 0.0
    %2679 = vmatprep.subr.mxu0 0.0
    %2680 = vmatpush2.msra.mxu0 0.0
    %2681 = vmatprep.subr.mxu0 0.0
    %2682 = vmatpush2.msra.mxu0 0.0
    %2683 = vmatprep.subr.mxu0 0.0
    %2684 = vmatpush2.msra.mxu0 0.0
    %2685 = vmatprep.subr.mxu0 0.0
    %2686 = vmatpush2.msra.mxu0 0.0
    %2687 = vmatprep.subr.mxu0 0.0
    %2688 = vmatpush2.msra.mxu0 0.0
    %2689 = vmatprep.subr.mxu0 0.0
    %2690 = vmatpush2.msra.mxu0 0.0
    %2691 = vmatprep.mubr.f32.mxu0 0.0
    %2692 = vmatmul.mubr.f32.gmra.mxu0 %v245
    %v2693 = vpop.f32.mrf.mxu0
    %v2694 = vadd.f32 0.0, %v2693
    %v2695 = vpop.f32.mrf.mxu0
    %2696 = vmatprep.mubr.f32.mxu0 0.0
    %2697 = vmatmul.mubr.f32.gmra.mxu0 %v247
    %v2698 = vpop.f32.mrf.mxu0
    %v2699 = vadd.f32 0.0, %v2698
    %v2700 = vpop.f32.mrf.mxu0
    %2701 = vdwg.mxu0
    %v2702 = vlaneseq
    %v2703 = vshrl.u32 %v2702, 7
    %v2704 = vsub.s32 1, %v2703
    %v2705 = vrot.slane %v2525, %v2704
    %v2706 = vadd.f32 %v2694, %v2705
    %v2707 = vadd.f32 %v2699, %v2705
    %v2708 = vlaneseq
    %v2709 = vshrl.u32 %v2708, 7
    %v2710 = vsub.s32 2, %v2709
    %v2711 = vrot.slane %v2525, %v2710
    %2713 = vrot.lane.b32.xlu0 %v2711, 32
    %v2714 = vpop.permute.xlu0 %2713
    %v2716 = vadd.f32 %v2694, %v2714
    %v2717 = vadd.f32 %v2699, %v2714
    %v2718 = vmul.f32 %v2619, 0.35355338
    %v2720 = vsel %vm341, %v2718, 0
    %v2723 = vsel %vm341, %v2706, 0
    %2725 = vmatprep.subr.mxu0 0.0
    %2726 = vmatpush1.xpose.msra.mxu0 0.0
    %2727 = vmatprep.subr.mxu0 0.0
    %2728 = vmatpush1.xpose.msra.mxu0 0.0
    %2729 = vmatprep.subr.mxu0 0.0
    %2730 = vmatpush1.xpose.msra.mxu0 0.0
    %2731 = vmatprep.subr.mxu0 0.0
    %2732 = vmatpush1.xpose.msra.mxu0 0.0
    %2733 = vmatprep.subr.mxu0 0.0
    %2734 = vmatpush1.xpose.msra.mxu0 0.0
    %2735 = vmatprep.subr.mxu0 0.0
    %2736 = vmatpush1.xpose.msra.mxu0 0.0
    %2737 = vmatprep.subr.mxu0 0.0
    %2738 = vmatpush1.xpose.msra.mxu0 0.0
    %2739 = vmatprep.subr.mxu0 0.0
    %2740 = vmatpush1.xpose.msra.mxu0 0.0
    %2741 = vmatprep.subr.mxu0 0.0
    %2742 = vmatpush1.xpose.msra.mxu0 0.0
    %2743 = vmatprep.subr.mxu0 0.0
    %2744 = vmatpush1.xpose.msra.mxu0 0.0
    %2745 = vmatprep.subr.mxu0 0.0
    %2746 = vmatpush1.xpose.msra.mxu0 0.0
    %2747 = vmatprep.subr.mxu0 0.0
    %2748 = vmatpush1.xpose.msra.mxu0 0.0
    %2749 = vmatprep.subr.mxu0 0.0
    %2750 = vmatpush1.xpose.msra.mxu0 0.0
    %2751 = vmatprep.subr.mxu0 0.0
    %2752 = vmatpush1.xpose.msra.mxu0 0.0
    %2753 = vmatprep.subr.mxu0 0.0
    %2754 = vmatpush1.xpose.msra.mxu0 0.0
    %2755 = vmatprep.subr.mxu0 0.0
    %2756 = vmatpush1.xpose.msra.mxu0 %v2723
    %2757 = vmatprep.subr.mxu0 0.0
    %2758 = vmatpush2.xpose.msra.mxu0 0.0
    %2759 = vmatprep.subr.mxu0 0.0
    %2760 = vmatpush2.xpose.msra.mxu0 0.0
    %2761 = vmatprep.subr.mxu0 0.0
    %2762 = vmatpush2.xpose.msra.mxu0 0.0
    %2763 = vmatprep.subr.mxu0 0.0
    %2764 = vmatpush2.xpose.msra.mxu0 0.0
    %2765 = vmatprep.subr.mxu0 0.0
    %2766 = vmatpush2.xpose.msra.mxu0 0.0
    %2767 = vmatprep.subr.mxu0 0.0
    %2768 = vmatpush2.xpose.msra.mxu0 0.0
    %2769 = vmatprep.subr.mxu0 0.0
    %2770 = vmatpush2.xpose.msra.mxu0 0.0
    %2771 = vmatprep.subr.mxu0 0.0
    %2772 = vmatpush2.xpose.msra.mxu0 0.0
    %2773 = vmatprep.subr.mxu0 0.0
    %2774 = vmatpush2.xpose.msra.mxu0 0.0
    %2775 = vmatprep.subr.mxu0 0.0
    %2776 = vmatpush2.xpose.msra.mxu0 0.0
    %2777 = vmatprep.subr.mxu0 0.0
    %2778 = vmatpush2.xpose.msra.mxu0 0.0
    %2779 = vmatprep.subr.mxu0 0.0
    %2780 = vmatpush2.xpose.msra.mxu0 0.0
    %2781 = vmatprep.subr.mxu0 0.0
    %2782 = vmatpush2.xpose.msra.mxu0 0.0
    %2783 = vmatprep.subr.mxu0 0.0
    %2784 = vmatpush2.xpose.msra.mxu0 0.0
    %2785 = vmatprep.subr.mxu0 0.0
    %2786 = vmatpush2.xpose.msra.mxu0 0.0
    %2787 = vmatprep.subr.mxu0 0.0
    %2788 = vmatpush2.xpose.msra.mxu0 0.0
    %2789 = vmatprep.mubr.f32.mxu0 0.0
    %2790 = vmatmul.mubr.f32.gmra.mxu0 %v2720
    %v2791 = vpop.f32.mrf.mxu0
    %v2792 = vadd.f32 0.0, %v2791
    %v2793 = vpop.f32.mrf.mxu0
    %2794 = vdwg.mxu0
    %v2795 = vsel %vm341, %v2792, -inf
    %2796 = vmax.xlane.f32.xlu0 %v2795
    %v2797 = vpop.xlane.xlu0 %2796
    %v2798 = vsub.f32 %v2792, %v2797
    %v2799 = vmul.f32 %v2798, 1.442695
    %v2800 = vpow.pop %v2799
    %v2801 = vsel %vm341, %v2800, 0.0
    %2802 = vadd.xlane.f32.xlu0 %v2801
    %v2803 = vpop.xlane.xlu0 %2802
    %v2804 = vrcp.pop %v2803
    %v2805 = vmul.f32 %v2800, %v2804
    %2807 = vrot.lane.b32.xlu0 %v2716, 96
    %v2808 = vpop.permute.xlu0 %2807
    %v2811 = vsel %vm341, %v2805, 0
    %2813 = vmatprep.subr.mxu0 0.0
    %2814 = vmatpush1.msra.mxu0 0.0
    %2815 = vmatprep.subr.mxu0 0.0
    %2816 = vmatpush1.msra.mxu0 0.0
    %2817 = vmatprep.subr.mxu0 0.0
    %2818 = vmatpush1.msra.mxu0 0.0
    %2819 = vmatprep.subr.mxu0 0.0
    %2820 = vmatpush1.msra.mxu0 0.0
    %2821 = vmatprep.subr.mxu0 0.0
    %2822 = vmatpush1.msra.mxu0 0.0
    %2823 = vmatprep.subr.mxu0 0.0
    %2824 = vmatpush1.msra.mxu0 0.0
    %2825 = vmatprep.subr.mxu0 0.0
    %2826 = vmatpush1.msra.mxu0 0.0
    %2827 = vmatprep.subr.mxu0 0.0
    %2828 = vmatpush1.msra.mxu0 0.0
    %2829 = vmatprep.subr.mxu0 0.0
    %2830 = vmatpush1.msra.mxu0 0.0
    %2831 = vmatprep.subr.mxu0 0.0
    %2832 = vmatpush1.msra.mxu0 0.0
    %2833 = vmatprep.subr.mxu0 0.0
    %2834 = vmatpush1.msra.mxu0 0.0
    %2835 = vmatprep.subr.mxu0 0.0
    %2836 = vmatpush1.msra.mxu0 0.0
    %2837 = vmatprep.subr.mxu0 0.0
    %2838 = vmatpush1.msra.mxu0 0.0
    %2839 = vmatprep.subr.mxu0 0.0
    %2840 = vmatpush1.msra.mxu0 0.0
    %2841 = vmatprep.subr.mxu0 0.0
    %2842 = vmatpush1.msra.mxu0 0.0
    %2843 = vmatprep.subr.mxu0 0.0
    %2844 = vmatpush1.msra.mxu0 %v2808
    %2845 = vmatprep.subr.mxu0 0.0
    %2846 = vmatpush2.msra.mxu0 0.0
    %2847 = vmatprep.subr.mxu0 0.0
    %2848 = vmatpush2.msra.mxu0 0.0
    %2849 = vmatprep.subr.mxu0 0.0
    %2850 = vmatpush2.msra.mxu0 0.0
    %2851 = vmatprep.subr.mxu0 0.0
    %2852 = vmatpush2.msra.mxu0 0.0
    %2853 = vmatprep.subr.mxu0 0.0
    %2854 = vmatpush2.msra.mxu0 0.0
    %2855 = vmatprep.subr.mxu0 0.0
    %2856 = vmatpush2.msra.mxu0 0.0
    %2857 = vmatprep.subr.mxu0 0.0
    %2858 = vmatpush2.msra.mxu0 0.0
    %2859 = vmatprep.subr.mxu0 0.0
    %2860 = vmatpush2.msra.mxu0 0.0
    %2861 = vmatprep.subr.mxu0 0.0
    %2862 = vmatpush2.msra.mxu0 0.0
    %2863 = vmatprep.subr.mxu0 0.0
    %2864 = vmatpush2.msra.mxu0 0.0
    %2865 = vmatprep.subr.mxu0 0.0
    %2866 = vmatpush2.msra.mxu0 0.0
    %2867 = vmatprep.subr.mxu0 0.0
    %2868 = vmatpush2.msra.mxu0 0.0
    %2869 = vmatprep.subr.mxu0 0.0
    %2870 = vmatpush2.msra.mxu0 0.0
    %2871 = vmatprep.subr.mxu0 0.0
    %2872 = vmatpush2.msra.mxu0 0.0
    %2873 = vmatprep.subr.mxu0 0.0
    %2874 = vmatpush2.msra.mxu0 0.0
    %2875 = vmatprep.subr.mxu0 0.0
    %2876 = vmatpush2.msra.mxu0 0.0
    %2877 = vmatprep.mubr.f32.mxu0 0.0
    %2878 = vmatmul.mubr.f32.gmra.mxu0 %v2811
    %v2879 = vpop.f32.mrf.mxu0
    %v2880 = vadd.f32 0.0, %v2879
    %v2881 = vpop.f32.mrf.mxu0
    %2882 = vdwg.mxu0
    %2883 = vrot.lane.b32.xlu0 %v2718, 120
    %v2884 = vpop.permute.xlu0 %2883
    %2885 = vrot.lane.b32.xlu0 %v2706, 120
    %v2886 = vpop.permute.xlu0 %2885
    %v2887 = vsel %vm341, %v2884, 0
    %v2889 = vsel %vm341, %v2886, 0
    %2891 = vmatprep.subr.mxu0 0.0
    %2892 = vmatpush1.xpose.msra.mxu0 0.0
    %2893 = vmatprep.subr.mxu0 0.0
    %2894 = vmatpush1.xpose.msra.mxu0 0.0
    %2895 = vmatprep.subr.mxu0 0.0
    %2896 = vmatpush1.xpose.msra.mxu0 0.0
    %2897 = vmatprep.subr.mxu0 0.0
    %2898 = vmatpush1.xpose.msra.mxu0 0.0
    %2899 = vmatprep.subr.mxu0 0.0
    %2900 = vmatpush1.xpose.msra.mxu0 0.0
    %2901 = vmatprep.subr.mxu0 0.0
    %2902 = vmatpush1.xpose.msra.mxu0 0.0
    %2903 = vmatprep.subr.mxu0 0.0
    %2904 = vmatpush1.xpose.msra.mxu0 0.0
    %2905 = vmatprep.subr.mxu0 0.0
    %2906 = vmatpush1.xpose.msra.mxu0 0.0
    %2907 = vmatprep.subr.mxu0 0.0
    %2908 = vmatpush1.xpose.msra.mxu0 0.0
    %2909 = vmatprep.subr.mxu0 0.0
    %2910 = vmatpush1.xpose.msra.mxu0 0.0
    %2911 = vmatprep.subr.mxu0 0.0
    %2912 = vmatpush1.xpose.msra.mxu0 0.0
    %2913 = vmatprep.subr.mxu0 0.0
    %2914 = vmatpush1.xpose.msra.mxu0 0.0
    %2915 = vmatprep.subr.mxu0 0.0
    %2916 = vmatpush1.xpose.msra.mxu0 0.0
    %2917 = vmatprep.subr.mxu0 0.0
    %2918 = vmatpush1.xpose.msra.mxu0 0.0
    %2919 = vmatprep.subr.mxu0 0.0
    %2920 = vmatpush1.xpose.msra.mxu0 0.0
    %2921 = vmatprep.subr.mxu0 0.0
    %2922 = vmatpush1.xpose.msra.mxu0 %v2889
    %2923 = vmatprep.subr.mxu0 0.0
    %2924 = vmatpush2.xpose.msra.mxu0 0.0
    %2925 = vmatprep.subr.mxu0 0.0
    %2926 = vmatpush2.xpose.msra.mxu0 0.0
    %2927 = vmatprep.subr.mxu0 0.0
    %2928 = vmatpush2.xpose.msra.mxu0 0.0
    %2929 = vmatprep.subr.mxu0 0.0
    %2930 = vmatpush2.xpose.msra.mxu0 0.0
    %2931 = vmatprep.subr.mxu0 0.0
    %2932 = vmatpush2.xpose.msra.mxu0 0.0
    %2933 = vmatprep.subr.mxu0 0.0
    %2934 = vmatpush2.xpose.msra.mxu0 0.0
    %2935 = vmatprep.subr.mxu0 0.0
    %2936 = vmatpush2.xpose.msra.mxu0 0.0
    %2937 = vmatprep.subr.mxu0 0.0
    %2938 = vmatpush2.xpose.msra.mxu0 0.0
    %2939 = vmatprep.subr.mxu0 0.0
    %2940 = vmatpush2.xpose.msra.mxu0 0.0
    %2941 = vmatprep.subr.mxu0 0.0
    %2942 = vmatpush2.xpose.msra.mxu0 0.0
    %2943 = vmatprep.subr.mxu0 0.0
    %2944 = vmatpush2.xpose.msra.mxu0 0.0
    %2945 = vmatprep.subr.mxu0 0.0
    %2946 = vmatpush2.xpose.msra.mxu0 0.0
    %2947 = vmatprep.subr.mxu0 0.0
    %2948 = vmatpush2.xpose.msra.mxu0 0.0
    %2949 = vmatprep.subr.mxu0 0.0
    %2950 = vmatpush2.xpose.msra.mxu0 0.0
    %2951 = vmatprep.subr.mxu0 0.0
    %2952 = vmatpush2.xpose.msra.mxu0 0.0
    %2953 = vmatprep.subr.mxu0 0.0
    %2954 = vmatpush2.xpose.msra.mxu0 0.0
    %2955 = vmatprep.mubr.f32.mxu0 0.0
    %2956 = vmatmul.mubr.f32.gmra.mxu0 %v2887
    %v2957 = vpop.f32.mrf.mxu0
    %v2958 = vadd.f32 0.0, %v2957
    %v2959 = vpop.f32.mrf.mxu0
    %2960 = vdwg.mxu0
    %v2961 = vsel %vm341, %v2958, -inf
    %2962 = vmax.xlane.f32.xlu0 %v2961
    %v2963 = vpop.xlane.xlu0 %2962
    %v2964 = vsub.f32 %v2958, %v2963
    %v2965 = vmul.f32 %v2964, 1.442695
    %v2966 = vpow.pop %v2965
    %v2967 = vsel %vm341, %v2966, 0.0
    %2968 = vadd.xlane.f32.xlu0 %v2967
    %v2969 = vpop.xlane.xlu0 %2968
    %v2970 = vrcp.pop %v2969
    %v2971 = vmul.f32 %v2966, %v2970
    %2972 = vrot.lane.b32.xlu0 %v2716, 88
    %v2973 = vpop.permute.xlu0 %2972
    %v2976 = vsel %vm341, %v2971, 0
    %2978 = vmatprep.subr.mxu0 0.0
    %2979 = vmatpush1.msra.mxu0 0.0
    %2980 = vmatprep.subr.mxu0 0.0
    %2981 = vmatpush1.msra.mxu0 0.0
    %2982 = vmatprep.subr.mxu0 0.0
    %2983 = vmatpush1.msra.mxu0 0.0
    %2984 = vmatprep.subr.mxu0 0.0
    %2985 = vmatpush1.msra.mxu0 0.0
    %2986 = vmatprep.subr.mxu0 0.0
    %2987 = vmatpush1.msra.mxu0 0.0
    %2988 = vmatprep.subr.mxu0 0.0
    %2989 = vmatpush1.msra.mxu0 0.0
    %2990 = vmatprep.subr.mxu0 0.0
    %2991 = vmatpush1.msra.mxu0 0.0
    %2992 = vmatprep.subr.mxu0 0.0
    %2993 = vmatpush1.msra.mxu0 0.0
    %2994 = vmatprep.subr.mxu0 0.0
    %2995 = vmatpush1.msra.mxu0 0.0
    %2996 = vmatprep.subr.mxu0 0.0
    %2997 = vmatpush1.msra.mxu0 0.0
    %2998 = vmatprep.subr.mxu0 0.0
    %2999 = vmatpush1.msra.mxu0 0.0
    %3000 = vmatprep.subr.mxu0 0.0
    %3001 = vmatpush1.msra.mxu0 0.0
    %3002 = vmatprep.subr.mxu0 0.0
    %3003 = vmatpush1.msra.mxu0 0.0
    %3004 = vmatprep.subr.mxu0 0.0
    %3005 = vmatpush1.msra.mxu0 0.0
    %3006 = vmatprep.subr.mxu0 0.0
    %3007 = vmatpush1.msra.mxu0 0.0
    %3008 = vmatprep.subr.mxu0 0.0
    %3009 = vmatpush1.msra.mxu0 %v2973
    %3010 = vmatprep.subr.mxu0 0.0
    %3011 = vmatpush2.msra.mxu0 0.0
    %3012 = vmatprep.subr.mxu0 0.0
    %3013 = vmatpush2.msra.mxu0 0.0
    %3014 = vmatprep.subr.mxu0 0.0
    %3015 = vmatpush2.msra.mxu0 0.0
    %3016 = vmatprep.subr.mxu0 0.0
    %3017 = vmatpush2.msra.mxu0 0.0
    %3018 = vmatprep.subr.mxu0 0.0
    %3019 = vmatpush2.msra.mxu0 0.0
    %3020 = vmatprep.subr.mxu0 0.0
    %3021 = vmatpush2.msra.mxu0 0.0
    %3022 = vmatprep.subr.mxu0 0.0
    %3023 = vmatpush2.msra.mxu0 0.0
    %3024 = vmatprep.subr.mxu0 0.0
    %3025 = vmatpush2.msra.mxu0 0.0
    %3026 = vmatprep.subr.mxu0 0.0
    %3027 = vmatpush2.msra.mxu0 0.0
    %3028 = vmatprep.subr.mxu0 0.0
    %3029 = vmatpush2.msra.mxu0 0.0
    %3030 = vmatprep.subr.mxu0 0.0
    %3031 = vmatpush2.msra.mxu0 0.0
    %3032 = vmatprep.subr.mxu0 0.0
    %3033 = vmatpush2.msra.mxu0 0.0
    %3034 = vmatprep.subr.mxu0 0.0
    %3035 = vmatpush2.msra.mxu0 0.0
    %3036 = vmatprep.subr.mxu0 0.0
    %3037 = vmatpush2.msra.mxu0 0.0
    %3038 = vmatprep.subr.mxu0 0.0
    %3039 = vmatpush2.msra.mxu0 0.0
    %3040 = vmatprep.subr.mxu0 0.0
    %3041 = vmatpush2.msra.mxu0 0.0
    %3042 = vmatprep.mubr.f32.mxu0 0.0
    %3043 = vmatmul.mubr.f32.gmra.mxu0 %v2976
    %v3044 = vpop.f32.mrf.mxu0
    %v3045 = vadd.f32 0.0, %v3044
    %v3046 = vpop.f32.mrf.mxu0
    %3047 = vdwg.mxu0
    %v3049 = vsel %vm341, %v3045, 0
    %3051 = vmatprep.subr.mxu0 0.0
    %3052 = vmatpush1.msra.mxu0 0.0
    %3053 = vmatprep.subr.mxu0 0.0
    %3054 = vmatpush1.msra.mxu0 0.0
    %3055 = vmatprep.subr.mxu0 0.0
    %3056 = vmatpush1.msra.mxu0 0.0
    %3057 = vmatprep.subr.mxu0 0.0
    %3058 = vmatpush1.msra.mxu0 0.0
    %3059 = vmatprep.subr.mxu0 0.0
    %3060 = vmatpush1.msra.mxu0 0.0
    %3061 = vmatprep.subr.mxu0 0.0
    %3062 = vmatpush1.msra.mxu0 0.0
    %3063 = vmatprep.subr.mxu0 0.0
    %3064 = vmatpush1.msra.mxu0 0.0
    %3065 = vmatprep.subr.mxu0 0.0
    %3066 = vmatpush1.msra.mxu0 0.0
    %3067 = vmatprep.subr.mxu0 0.0
    %3068 = vmatpush1.msra.mxu0 0.0
    %3069 = vmatprep.subr.mxu0 0.0
    %3070 = vmatpush1.msra.mxu0 0.0
    %3071 = vmatprep.subr.mxu0 0.0
    %3072 = vmatpush1.msra.mxu0 0.0
    %3073 = vmatprep.subr.mxu0 0.0
    %3074 = vmatpush1.msra.mxu0 0.0
    %3075 = vmatprep.subr.mxu0 0.0
    %3076 = vmatpush1.msra.mxu0 0.0
    %3077 = vmatprep.subr.mxu0 0.0
    %3078 = vmatpush1.msra.mxu0 0.0
    %3079 = vmatprep.subr.mxu0 0.0
    %3080 = vmatpush1.msra.mxu0 0.0
    %3081 = vmatprep.subr.mxu0 0.0
    %3082 = vmatpush1.msra.mxu0 %v2539
    %3083 = vmatprep.subr.mxu0 0.0
    %3084 = vmatpush2.msra.mxu0 0.0
    %3085 = vmatprep.subr.mxu0 0.0
    %3086 = vmatpush2.msra.mxu0 0.0
    %3087 = vmatprep.subr.mxu0 0.0
    %3088 = vmatpush2.msra.mxu0 0.0
    %3089 = vmatprep.subr.mxu0 0.0
    %3090 = vmatpush2.msra.mxu0 0.0
    %3091 = vmatprep.subr.mxu0 0.0
    %3092 = vmatpush2.msra.mxu0 0.0
    %3093 = vmatprep.subr.mxu0 0.0
    %3094 = vmatpush2.msra.mxu0 0.0
    %3095 = vmatprep.subr.mxu0 0.0
    %3096 = vmatpush2.msra.mxu0 0.0
    %3097 = vmatprep.subr.mxu0 0.0
    %3098 = vmatpush2.msra.mxu0 0.0
    %3099 = vmatprep.subr.mxu0 0.0
    %3100 = vmatpush2.msra.mxu0 0.0
    %3101 = vmatprep.subr.mxu0 0.0
    %3102 = vmatpush2.msra.mxu0 0.0
    %3103 = vmatprep.subr.mxu0 0.0
    %3104 = vmatpush2.msra.mxu0 0.0
    %3105 = vmatprep.subr.mxu0 0.0
    %3106 = vmatpush2.msra.mxu0 0.0
    %3107 = vmatprep.subr.mxu0 0.0
    %3108 = vmatpush2.msra.mxu0 0.0
    %3109 = vmatprep.subr.mxu0 0.0
    %3110 = vmatpush2.msra.mxu0 0.0
    %3111 = vmatprep.subr.mxu0 0.0
    %3112 = vmatpush2.msra.mxu0 0.0
    %3113 = vmatprep.subr.mxu0 0.0
    %3114 = vmatpush2.msra.mxu0 0.0
    %3115 = vmatprep.mubr.f32.mxu0 0.0
    %3116 = vmatmul.mubr.f32.gmra.mxu0 %v3049
    %v3117 = vpop.f32.mrf.mxu0
    %v3118 = vadd.f32 0.0, %v3117
    %v3119 = vpop.f32.mrf.mxu0
    %3120 = vdwg.mxu0
    %v3122 = vsel %vm341, %v2880, 0
    %3124 = vmatprep.subr.mxu0 0.0
    %3125 = vmatpush1.msra.mxu0 0.0
    %3126 = vmatprep.subr.mxu0 0.0
    %3127 = vmatpush1.msra.mxu0 0.0
    %3128 = vmatprep.subr.mxu0 0.0
    %3129 = vmatpush1.msra.mxu0 0.0
    %3130 = vmatprep.subr.mxu0 0.0
    %3131 = vmatpush1.msra.mxu0 0.0
    %3132 = vmatprep.subr.mxu0 0.0
    %3133 = vmatpush1.msra.mxu0 0.0
    %3134 = vmatprep.subr.mxu0 0.0
    %3135 = vmatpush1.msra.mxu0 0.0
    %3136 = vmatprep.subr.mxu0 0.0
    %3137 = vmatpush1.msra.mxu0 0.0
    %3138 = vmatprep.subr.mxu0 0.0
    %3139 = vmatpush1.msra.mxu0 0.0
    %3140 = vmatprep.subr.mxu0 0.0
    %3141 = vmatpush1.msra.mxu0 0.0
    %3142 = vmatprep.subr.mxu0 0.0
    %3143 = vmatpush1.msra.mxu0 0.0
    %3144 = vmatprep.subr.mxu0 0.0
    %3145 = vmatpush1.msra.mxu0 0.0
    %3146 = vmatprep.subr.mxu0 0.0
    %3147 = vmatpush1.msra.mxu0 0.0
    %3148 = vmatprep.subr.mxu0 0.0
    %3149 = vmatpush1.msra.mxu0 0.0
    %3150 = vmatprep.subr.mxu0 0.0
    %3151 = vmatpush1.msra.mxu0 0.0
    %3152 = vmatprep.subr.mxu0 0.0
    %3153 = vmatpush1.msra.mxu0 0.0
    %3154 = vmatprep.subr.mxu0 0.0
    %3155 = vmatpush1.msra.mxu0 %v2538
    %3156 = vmatprep.subr.mxu0 0.0
    %3157 = vmatpush2.msra.mxu0 0.0
    %3158 = vmatprep.subr.mxu0 0.0
    %3159 = vmatpush2.msra.mxu0 0.0
    %3160 = vmatprep.subr.mxu0 0.0
    %3161 = vmatpush2.msra.mxu0 0.0
    %3162 = vmatprep.subr.mxu0 0.0
    %3163 = vmatpush2.msra.mxu0 0.0
    %3164 = vmatprep.subr.mxu0 0.0
    %3165 = vmatpush2.msra.mxu0 0.0
    %3166 = vmatprep.subr.mxu0 0.0
    %3167 = vmatpush2.msra.mxu0 0.0
    %3168 = vmatprep.subr.mxu0 0.0
    %3169 = vmatpush2.msra.mxu0 0.0
    %3170 = vmatprep.subr.mxu0 0.0
    %3171 = vmatpush2.msra.mxu0 0.0
    %3172 = vmatprep.subr.mxu0 0.0
    %3173 = vmatpush2.msra.mxu0 0.0
    %3174 = vmatprep.subr.mxu0 0.0
    %3175 = vmatpush2.msra.mxu0 0.0
    %3176 = vmatprep.subr.mxu0 0.0
    %3177 = vmatpush2.msra.mxu0 0.0
    %3178 = vmatprep.subr.mxu0 0.0
    %3179 = vmatpush2.msra.mxu0 0.0
    %3180 = vmatprep.subr.mxu0 0.0
    %3181 = vmatpush2.msra.mxu0 0.0
    %3182 = vmatprep.subr.mxu0 0.0
    %3183 = vmatpush2.msra.mxu0 0.0
    %3184 = vmatprep.subr.mxu0 0.0
    %3185 = vmatpush2.msra.mxu0 0.0
    %3186 = vmatprep.subr.mxu0 0.0
    %3187 = vmatpush2.msra.mxu0 0.0
    %3188 = vmatprep.mubr.f32.mxu0 0.0
    %3189 = vmatmul.mubr.f32.gmra.mxu0 %v3122
    %v3190 = vpop.f32.mrf.mxu0
    %v3191 = vadd.f32 %v3118, %v3190
    %v3192 = vpop.f32.mrf.mxu0
    %3193 = vdwg.mxu0
    %3194 = vrot.lane.b32.xlu0 %v2718, 112
    %v3195 = vpop.permute.xlu0 %3194
    %3196 = vrot.lane.b32.xlu0 %v2706, 112
    %v3197 = vpop.permute.xlu0 %3196
    %v3198 = vsel %vm341, %v3195, 0
    %v3200 = vsel %vm341, %v3197, 0
    %3202 = vmatprep.subr.mxu0 0.0
    %3203 = vmatpush1.xpose.msra.mxu0 0.0
    %3204 = vmatprep.subr.mxu0 0.0
    %3205 = vmatpush1.xpose.msra.mxu0 0.0
    %3206 = vmatprep.subr.mxu0 0.0
    %3207 = vmatpush1.xpose.msra.mxu0 0.0
    %3208 = vmatprep.subr.mxu0 0.0
    %3209 = vmatpush1.xpose.msra.mxu0 0.0
    %3210 = vmatprep.subr.mxu0 0.0
    %3211 = vmatpush1.xpose.msra.mxu0 0.0
    %3212 = vmatprep.subr.mxu0 0.0
    %3213 = vmatpush1.xpose.msra.mxu0 0.0
    %3214 = vmatprep.subr.mxu0 0.0
    %3215 = vmatpush1.xpose.msra.mxu0 0.0
    %3216 = vmatprep.subr.mxu0 0.0
    %3217 = vmatpush1.xpose.msra.mxu0 0.0
    %3218 = vmatprep.subr.mxu0 0.0
    %3219 = vmatpush1.xpose.msra.mxu0 0.0
    %3220 = vmatprep.subr.mxu0 0.0
    %3221 = vmatpush1.xpose.msra.mxu0 0.0
    %3222 = vmatprep.subr.mxu0 0.0
    %3223 = vmatpush1.xpose.msra.mxu0 0.0
    %3224 = vmatprep.subr.mxu0 0.0
    %3225 = vmatpush1.xpose.msra.mxu0 0.0
    %3226 = vmatprep.subr.mxu0 0.0
    %3227 = vmatpush1.xpose.msra.mxu0 0.0
    %3228 = vmatprep.subr.mxu0 0.0
    %3229 = vmatpush1.xpose.msra.mxu0 0.0
    %3230 = vmatprep.subr.mxu0 0.0
    %3231 = vmatpush1.xpose.msra.mxu0 0.0
    %3232 = vmatprep.subr.mxu0 0.0
    %3233 = vmatpush1.xpose.msra.mxu0 %v3200
    %3234 = vmatprep.subr.mxu0 0.0
    %3235 = vmatpush2.xpose.msra.mxu0 0.0
    %3236 = vmatprep.subr.mxu0 0.0
    %3237 = vmatpush2.xpose.msra.mxu0 0.0
    %3238 = vmatprep.subr.mxu0 0.0
    %3239 = vmatpush2.xpose.msra.mxu0 0.0
    %3240 = vmatprep.subr.mxu0 0.0
    %3241 = vmatpush2.xpose.msra.mxu0 0.0
    %3242 = vmatprep.subr.mxu0 0.0
    %3243 = vmatpush2.xpose.msra.mxu0 0.0
    %3244 = vmatprep.subr.mxu0 0.0
    %3245 = vmatpush2.xpose.msra.mxu0 0.0
    %3246 = vmatprep.subr.mxu0 0.0
    %3247 = vmatpush2.xpose.msra.mxu0 0.0
    %3248 = vmatprep.subr.mxu0 0.0
    %3249 = vmatpush2.xpose.msra.mxu0 0.0
    %3250 = vmatprep.subr.mxu0 0.0
    %3251 = vmatpush2.xpose.msra.mxu0 0.0
    %3252 = vmatprep.subr.mxu0 0.0
    %3253 = vmatpush2.xpose.msra.mxu0 0.0
    %3254 = vmatprep.subr.mxu0 0.0
    %3255 = vmatpush2.xpose.msra.mxu0 0.0
    %3256 = vmatprep.subr.mxu0 0.0
    %3257 = vmatpush2.xpose.msra.mxu0 0.0
    %3258 = vmatprep.subr.mxu0 0.0
    %3259 = vmatpush2.xpose.msra.mxu0 0.0
    %3260 = vmatprep.subr.mxu0 0.0
    %3261 = vmatpush2.xpose.msra.mxu0 0.0
    %3262 = vmatprep.subr.mxu0 0.0
    %3263 = vmatpush2.xpose.msra.mxu0 0.0
    %3264 = vmatprep.subr.mxu0 0.0
    %3265 = vmatpush2.xpose.msra.mxu0 0.0
    %3266 = vmatprep.mubr.f32.mxu0 0.0
    %3267 = vmatmul.mubr.f32.gmra.mxu0 %v3198
    %v3268 = vpop.f32.mrf.mxu0
    %v3269 = vadd.f32 0.0, %v3268
    %v3270 = vpop.f32.mrf.mxu0
    %3271 = vdwg.mxu0
    %v3272 = vsel %vm341, %v3269, -inf
    %3273 = vmax.xlane.f32.xlu0 %v3272
    %v3274 = vpop.xlane.xlu0 %3273
    %v3275 = vsub.f32 %v3269, %v3274
    %v3276 = vmul.f32 %v3275, 1.442695
    %v3277 = vpow.pop %v3276
    %v3278 = vsel %vm341, %v3277, 0.0
    %3279 = vadd.xlane.f32.xlu0 %v3278
    %v3280 = vpop.xlane.xlu0 %3279
    %v3281 = vrcp.pop %v3280
    %v3282 = vmul.f32 %v3277, %v3281
    %3283 = vrot.lane.b32.xlu0 %v2716, 80
    %v3284 = vpop.permute.xlu0 %3283
    %v3287 = vsel %vm341, %v3282, 0
    %3289 = vmatprep.subr.mxu0 0.0
    %3290 = vmatpush1.msra.mxu0 0.0
    %3291 = vmatprep.subr.mxu0 0.0
    %3292 = vmatpush1.msra.mxu0 0.0
    %3293 = vmatprep.subr.mxu0 0.0
    %3294 = vmatpush1.msra.mxu0 0.0
    %3295 = vmatprep.subr.mxu0 0.0
    %3296 = vmatpush1.msra.mxu0 0.0
    %3297 = vmatprep.subr.mxu0 0.0
    %3298 = vmatpush1.msra.mxu0 0.0
    %3299 = vmatprep.subr.mxu0 0.0
    %3300 = vmatpush1.msra.mxu0 0.0
    %3301 = vmatprep.subr.mxu0 0.0
    %3302 = vmatpush1.msra.mxu0 0.0
    %3303 = vmatprep.subr.mxu0 0.0
    %3304 = vmatpush1.msra.mxu0 0.0
    %3305 = vmatprep.subr.mxu0 0.0
    %3306 = vmatpush1.msra.mxu0 0.0
    %3307 = vmatprep.subr.mxu0 0.0
    %3308 = vmatpush1.msra.mxu0 0.0
    %3309 = vmatprep.subr.mxu0 0.0
    %3310 = vmatpush1.msra.mxu0 0.0
    %3311 = vmatprep.subr.mxu0 0.0
    %3312 = vmatpush1.msra.mxu0 0.0
    %3313 = vmatprep.subr.mxu0 0.0
    %3314 = vmatpush1.msra.mxu0 0.0
    %3315 = vmatprep.subr.mxu0 0.0
    %3316 = vmatpush1.msra.mxu0 0.0
    %3317 = vmatprep.subr.mxu0 0.0
    %3318 = vmatpush1.msra.mxu0 0.0
    %3319 = vmatprep.subr.mxu0 0.0
    %3320 = vmatpush1.msra.mxu0 %v3284
    %3321 = vmatprep.subr.mxu0 0.0
    %3322 = vmatpush2.msra.mxu0 0.0
    %3323 = vmatprep.subr.mxu0 0.0
    %3324 = vmatpush2.msra.mxu0 0.0
    %3325 = vmatprep.subr.mxu0 0.0
    %3326 = vmatpush2.msra.mxu0 0.0
    %3327 = vmatprep.subr.mxu0 0.0
    %3328 = vmatpush2.msra.mxu0 0.0
    %3329 = vmatprep.subr.mxu0 0.0
    %3330 = vmatpush2.msra.mxu0 0.0
    %3331 = vmatprep.subr.mxu0 0.0
    %3332 = vmatpush2.msra.mxu0 0.0
    %3333 = vmatprep.subr.mxu0 0.0
    %3334 = vmatpush2.msra.mxu0 0.0
    %3335 = vmatprep.subr.mxu0 0.0
    %3336 = vmatpush2.msra.mxu0 0.0
    %3337 = vmatprep.subr.mxu0 0.0
    %3338 = vmatpush2.msra.mxu0 0.0
    %3339 = vmatprep.subr.mxu0 0.0
    %3340 = vmatpush2.msra.mxu0 0.0
    %3341 = vmatprep.subr.mxu0 0.0
    %3342 = vmatpush2.msra.mxu0 0.0
    %3343 = vmatprep.subr.mxu0 0.0
    %3344 = vmatpush2.msra.mxu0 0.0
    %3345 = vmatprep.subr.mxu0 0.0
    %3346 = vmatpush2.msra.mxu0 0.0
    %3347 = vmatprep.subr.mxu0 0.0
    %3348 = vmatpush2.msra.mxu0 0.0
    %3349 = vmatprep.subr.mxu0 0.0
    %3350 = vmatpush2.msra.mxu0 0.0
    %3351 = vmatprep.subr.mxu0 0.0
    %3352 = vmatpush2.msra.mxu0 0.0
    %3353 = vmatprep.mubr.f32.mxu0 0.0
    %3354 = vmatmul.mubr.f32.gmra.mxu0 %v3287
    %v3355 = vpop.f32.mrf.mxu0
    %v3356 = vadd.f32 0.0, %v3355
    %v3357 = vpop.f32.mrf.mxu0
    %3358 = vdwg.mxu0
    %v3360 = vsel %vm341, %v3356, 0
    %3362 = vmatprep.subr.mxu0 0.0
    %3363 = vmatpush1.msra.mxu0 0.0
    %3364 = vmatprep.subr.mxu0 0.0
    %3365 = vmatpush1.msra.mxu0 0.0
    %3366 = vmatprep.subr.mxu0 0.0
    %3367 = vmatpush1.msra.mxu0 0.0
    %3368 = vmatprep.subr.mxu0 0.0
    %3369 = vmatpush1.msra.mxu0 0.0
    %3370 = vmatprep.subr.mxu0 0.0
    %3371 = vmatpush1.msra.mxu0 0.0
    %3372 = vmatprep.subr.mxu0 0.0
    %3373 = vmatpush1.msra.mxu0 0.0
    %3374 = vmatprep.subr.mxu0 0.0
    %3375 = vmatpush1.msra.mxu0 0.0
    %3376 = vmatprep.subr.mxu0 0.0
    %3377 = vmatpush1.msra.mxu0 0.0
    %3378 = vmatprep.subr.mxu0 0.0
    %3379 = vmatpush1.msra.mxu0 0.0
    %3380 = vmatprep.subr.mxu0 0.0
    %3381 = vmatpush1.msra.mxu0 0.0
    %3382 = vmatprep.subr.mxu0 0.0
    %3383 = vmatpush1.msra.mxu0 0.0
    %3384 = vmatprep.subr.mxu0 0.0
    %3385 = vmatpush1.msra.mxu0 0.0
    %3386 = vmatprep.subr.mxu0 0.0
    %3387 = vmatpush1.msra.mxu0 0.0
    %3388 = vmatprep.subr.mxu0 0.0
    %3389 = vmatpush1.msra.mxu0 0.0
    %3390 = vmatprep.subr.mxu0 0.0
    %3391 = vmatpush1.msra.mxu0 0.0
    %3392 = vmatprep.subr.mxu0 0.0
    %3393 = vmatpush1.msra.mxu0 %v2540
    %3394 = vmatprep.subr.mxu0 0.0
    %3395 = vmatpush2.msra.mxu0 0.0
    %3396 = vmatprep.subr.mxu0 0.0
    %3397 = vmatpush2.msra.mxu0 0.0
    %3398 = vmatprep.subr.mxu0 0.0
    %3399 = vmatpush2.msra.mxu0 0.0
    %3400 = vmatprep.subr.mxu0 0.0
    %3401 = vmatpush2.msra.mxu0 0.0
    %3402 = vmatprep.subr.mxu0 0.0
    %3403 = vmatpush2.msra.mxu0 0.0
    %3404 = vmatprep.subr.mxu0 0.0
    %3405 = vmatpush2.msra.mxu0 0.0
    %3406 = vmatprep.subr.mxu0 0.0
    %3407 = vmatpush2.msra.mxu0 0.0
    %3408 = vmatprep.subr.mxu0 0.0
    %3409 = vmatpush2.msra.mxu0 0.0
    %3410 = vmatprep.subr.mxu0 0.0
    %3411 = vmatpush2.msra.mxu0 0.0
    %3412 = vmatprep.subr.mxu0 0.0
    %3413 = vmatpush2.msra.mxu0 0.0
    %3414 = vmatprep.subr.mxu0 0.0
    %3415 = vmatpush2.msra.mxu0 0.0
    %3416 = vmatprep.subr.mxu0 0.0
    %3417 = vmatpush2.msra.mxu0 0.0
    %3418 = vmatprep.subr.mxu0 0.0
    %3419 = vmatpush2.msra.mxu0 0.0
    %3420 = vmatprep.subr.mxu0 0.0
    %3421 = vmatpush2.msra.mxu0 0.0
    %3422 = vmatprep.subr.mxu0 0.0
    %3423 = vmatpush2.msra.mxu0 0.0
    %3424 = vmatprep.subr.mxu0 0.0
    %3425 = vmatpush2.msra.mxu0 0.0
    %3426 = vmatprep.mubr.f32.mxu0 0.0
    %3427 = vmatmul.mubr.f32.gmra.mxu0 %v3360
    %v3428 = vpop.f32.mrf.mxu0
    %v3429 = vadd.f32 0.0, %v3428
    %v3430 = vpop.f32.mrf.mxu0
    %3431 = vdwg.mxu0
    %v3432 = vadd.f32 %v3191, %v3429
    %3433 = vrot.lane.b32.xlu0 %v2718, 104
    %v3434 = vpop.permute.xlu0 %3433
    %3435 = vrot.lane.b32.xlu0 %v2706, 104
    %v3436 = vpop.permute.xlu0 %3435
    %v3437 = vsel %vm341, %v3434, 0
    %v3439 = vsel %vm341, %v3436, 0
    %3441 = vmatprep.subr.mxu0 0.0
    %3442 = vmatpush1.xpose.msra.mxu0 0.0
    %3443 = vmatprep.subr.mxu0 0.0
    %3444 = vmatpush1.xpose.msra.mxu0 0.0
    %3445 = vmatprep.subr.mxu0 0.0
    %3446 = vmatpush1.xpose.msra.mxu0 0.0
    %3447 = vmatprep.subr.mxu0 0.0
    %3448 = vmatpush1.xpose.msra.mxu0 0.0
    %3449 = vmatprep.subr.mxu0 0.0
    %3450 = vmatpush1.xpose.msra.mxu0 0.0
    %3451 = vmatprep.subr.mxu0 0.0
    %3452 = vmatpush1.xpose.msra.mxu0 0.0
    %3453 = vmatprep.subr.mxu0 0.0
    %3454 = vmatpush1.xpose.msra.mxu0 0.0
    %3455 = vmatprep.subr.mxu0 0.0
    %3456 = vmatpush1.xpose.msra.mxu0 0.0
    %3457 = vmatprep.subr.mxu0 0.0
    %3458 = vmatpush1.xpose.msra.mxu0 0.0
    %3459 = vmatprep.subr.mxu0 0.0
    %3460 = vmatpush1.xpose.msra.mxu0 0.0
    %3461 = vmatprep.subr.mxu0 0.0
    %3462 = vmatpush1.xpose.msra.mxu0 0.0
    %3463 = vmatprep.subr.mxu0 0.0
    %3464 = vmatpush1.xpose.msra.mxu0 0.0
    %3465 = vmatprep.subr.mxu0 0.0
    %3466 = vmatpush1.xpose.msra.mxu0 0.0
    %3467 = vmatprep.subr.mxu0 0.0
    %3468 = vmatpush1.xpose.msra.mxu0 0.0
    %3469 = vmatprep.subr.mxu0 0.0
    %3470 = vmatpush1.xpose.msra.mxu0 0.0
    %3471 = vmatprep.subr.mxu0 0.0
    %3472 = vmatpush1.xpose.msra.mxu0 %v3439
    %3473 = vmatprep.subr.mxu0 0.0
    %3474 = vmatpush2.xpose.msra.mxu0 0.0
    %3475 = vmatprep.subr.mxu0 0.0
    %3476 = vmatpush2.xpose.msra.mxu0 0.0
    %3477 = vmatprep.subr.mxu0 0.0
    %3478 = vmatpush2.xpose.msra.mxu0 0.0
    %3479 = vmatprep.subr.mxu0 0.0
    %3480 = vmatpush2.xpose.msra.mxu0 0.0
    %3481 = vmatprep.subr.mxu0 0.0
    %3482 = vmatpush2.xpose.msra.mxu0 0.0
    %3483 = vmatprep.subr.mxu0 0.0
    %3484 = vmatpush2.xpose.msra.mxu0 0.0
    %3485 = vmatprep.subr.mxu0 0.0
    %3486 = vmatpush2.xpose.msra.mxu0 0.0
    %3487 = vmatprep.subr.mxu0 0.0
    %3488 = vmatpush2.xpose.msra.mxu0 0.0
    %3489 = vmatprep.subr.mxu0 0.0
    %3490 = vmatpush2.xpose.msra.mxu0 0.0
    %3491 = vmatprep.subr.mxu0 0.0
    %3492 = vmatpush2.xpose.msra.mxu0 0.0
    %3493 = vmatprep.subr.mxu0 0.0
    %3494 = vmatpush2.xpose.msra.mxu0 0.0
    %3495 = vmatprep.subr.mxu0 0.0
    %3496 = vmatpush2.xpose.msra.mxu0 0.0
    %3497 = vmatprep.subr.mxu0 0.0
    %3498 = vmatpush2.xpose.msra.mxu0 0.0
    %3499 = vmatprep.subr.mxu0 0.0
    %3500 = vmatpush2.xpose.msra.mxu0 0.0
    %3501 = vmatprep.subr.mxu0 0.0
    %3502 = vmatpush2.xpose.msra.mxu0 0.0
    %3503 = vmatprep.subr.mxu0 0.0
    %3504 = vmatpush2.xpose.msra.mxu0 0.0
    %3505 = vmatprep.mubr.f32.mxu0 0.0
    %3506 = vmatmul.mubr.f32.gmra.mxu0 %v3437
    %v3507 = vpop.f32.mrf.mxu0
    %v3508 = vadd.f32 0.0, %v3507
    %v3509 = vpop.f32.mrf.mxu0
    %3510 = vdwg.mxu0
    %v3511 = vsel %vm341, %v3508, -inf
    %3512 = vmax.xlane.f32.xlu0 %v3511
    %v3513 = vpop.xlane.xlu0 %3512
    %v3514 = vsub.f32 %v3508, %v3513
    %v3515 = vmul.f32 %v3514, 1.442695
    %v3516 = vpow.pop %v3515
    %v3517 = vsel %vm341, %v3516, 0.0
    %3518 = vadd.xlane.f32.xlu0 %v3517
    %v3519 = vpop.xlane.xlu0 %3518
    %v3520 = vrcp.pop %v3519
    %v3521 = vmul.f32 %v3516, %v3520
    %3522 = vrot.lane.b32.xlu0 %v2716, 72
    %v3523 = vpop.permute.xlu0 %3522
    %v3526 = vsel %vm341, %v3521, 0
    %3528 = vmatprep.subr.mxu0 0.0
    %3529 = vmatpush1.msra.mxu0 0.0
    %3530 = vmatprep.subr.mxu0 0.0
    %3531 = vmatpush1.msra.mxu0 0.0
    %3532 = vmatprep.subr.mxu0 0.0
    %3533 = vmatpush1.msra.mxu0 0.0
    %3534 = vmatprep.subr.mxu0 0.0
    %3535 = vmatpush1.msra.mxu0 0.0
    %3536 = vmatprep.subr.mxu0 0.0
    %3537 = vmatpush1.msra.mxu0 0.0
    %3538 = vmatprep.subr.mxu0 0.0
    %3539 = vmatpush1.msra.mxu0 0.0
    %3540 = vmatprep.subr.mxu0 0.0
    %3541 = vmatpush1.msra.mxu0 0.0
    %3542 = vmatprep.subr.mxu0 0.0
    %3543 = vmatpush1.msra.mxu0 0.0
    %3544 = vmatprep.subr.mxu0 0.0
    %3545 = vmatpush1.msra.mxu0 0.0
    %3546 = vmatprep.subr.mxu0 0.0
    %3547 = vmatpush1.msra.mxu0 0.0
    %3548 = vmatprep.subr.mxu0 0.0
    %3549 = vmatpush1.msra.mxu0 0.0
    %3550 = vmatprep.subr.mxu0 0.0
    %3551 = vmatpush1.msra.mxu0 0.0
    %3552 = vmatprep.subr.mxu0 0.0
    %3553 = vmatpush1.msra.mxu0 0.0
    %3554 = vmatprep.subr.mxu0 0.0
    %3555 = vmatpush1.msra.mxu0 0.0
    %3556 = vmatprep.subr.mxu0 0.0
    %3557 = vmatpush1.msra.mxu0 0.0
    %3558 = vmatprep.subr.mxu0 0.0
    %3559 = vmatpush1.msra.mxu0 %v3523
    %3560 = vmatprep.subr.mxu0 0.0
    %3561 = vmatpush2.msra.mxu0 0.0
    %3562 = vmatprep.subr.mxu0 0.0
    %3563 = vmatpush2.msra.mxu0 0.0
    %3564 = vmatprep.subr.mxu0 0.0
    %3565 = vmatpush2.msra.mxu0 0.0
    %3566 = vmatprep.subr.mxu0 0.0
    %3567 = vmatpush2.msra.mxu0 0.0
    %3568 = vmatprep.subr.mxu0 0.0
    %3569 = vmatpush2.msra.mxu0 0.0
    %3570 = vmatprep.subr.mxu0 0.0
    %3571 = vmatpush2.msra.mxu0 0.0
    %3572 = vmatprep.subr.mxu0 0.0
    %3573 = vmatpush2.msra.mxu0 0.0
    %3574 = vmatprep.subr.mxu0 0.0
    %3575 = vmatpush2.msra.mxu0 0.0
    %3576 = vmatprep.subr.mxu0 0.0
    %3577 = vmatpush2.msra.mxu0 0.0
    %3578 = vmatprep.subr.mxu0 0.0
    %3579 = vmatpush2.msra.mxu0 0.0
    %3580 = vmatprep.subr.mxu0 0.0
    %3581 = vmatpush2.msra.mxu0 0.0
    %3582 = vmatprep.subr.mxu0 0.0
    %3583 = vmatpush2.msra.mxu0 0.0
    %3584 = vmatprep.subr.mxu0 0.0
    %3585 = vmatpush2.msra.mxu0 0.0
    %3586 = vmatprep.subr.mxu0 0.0
    %3587 = vmatpush2.msra.mxu0 0.0
    %3588 = vmatprep.subr.mxu0 0.0
    %3589 = vmatpush2.msra.mxu0 0.0
    %3590 = vmatprep.subr.mxu0 0.0
    %3591 = vmatpush2.msra.mxu0 0.0
    %3592 = vmatprep.mubr.f32.mxu0 0.0
    %3593 = vmatmul.mubr.f32.gmra.mxu0 %v3526
    %v3594 = vpop.f32.mrf.mxu0
    %v3595 = vadd.f32 0.0, %v3594
    %v3596 = vpop.f32.mrf.mxu0
    %3597 = vdwg.mxu0
    %v3599 = vsel %vm341, %v3595, 0
    %3601 = vmatprep.subr.mxu0 0.0
    %3602 = vmatpush1.msra.mxu0 0.0
    %3603 = vmatprep.subr.mxu0 0.0
    %3604 = vmatpush1.msra.mxu0 0.0
    %3605 = vmatprep.subr.mxu0 0.0
    %3606 = vmatpush1.msra.mxu0 0.0
    %3607 = vmatprep.subr.mxu0 0.0
    %3608 = vmatpush1.msra.mxu0 0.0
    %3609 = vmatprep.subr.mxu0 0.0
    %3610 = vmatpush1.msra.mxu0 0.0
    %3611 = vmatprep.subr.mxu0 0.0
    %3612 = vmatpush1.msra.mxu0 0.0
    %3613 = vmatprep.subr.mxu0 0.0
    %3614 = vmatpush1.msra.mxu0 0.0
    %3615 = vmatprep.subr.mxu0 0.0
    %3616 = vmatpush1.msra.mxu0 0.0
    %3617 = vmatprep.subr.mxu0 0.0
    %3618 = vmatpush1.msra.mxu0 0.0
    %3619 = vmatprep.subr.mxu0 0.0
    %3620 = vmatpush1.msra.mxu0 0.0
    %3621 = vmatprep.subr.mxu0 0.0
    %3622 = vmatpush1.msra.mxu0 0.0
    %3623 = vmatprep.subr.mxu0 0.0
    %3624 = vmatpush1.msra.mxu0 0.0
    %3625 = vmatprep.subr.mxu0 0.0
    %3626 = vmatpush1.msra.mxu0 0.0
    %3627 = vmatprep.subr.mxu0 0.0
    %3628 = vmatpush1.msra.mxu0 0.0
    %3629 = vmatprep.subr.mxu0 0.0
    %3630 = vmatpush1.msra.mxu0 0.0
    %3631 = vmatprep.subr.mxu0 0.0
    %3632 = vmatpush1.msra.mxu0 %v2541
    %3633 = vmatprep.subr.mxu0 0.0
    %3634 = vmatpush2.msra.mxu0 0.0
    %3635 = vmatprep.subr.mxu0 0.0
    %3636 = vmatpush2.msra.mxu0 0.0
    %3637 = vmatprep.subr.mxu0 0.0
    %3638 = vmatpush2.msra.mxu0 0.0
    %3639 = vmatprep.subr.mxu0 0.0
    %3640 = vmatpush2.msra.mxu0 0.0
    %3641 = vmatprep.subr.mxu0 0.0
    %3642 = vmatpush2.msra.mxu0 0.0
    %3643 = vmatprep.subr.mxu0 0.0
    %3644 = vmatpush2.msra.mxu0 0.0
    %3645 = vmatprep.subr.mxu0 0.0
    %3646 = vmatpush2.msra.mxu0 0.0
    %3647 = vmatprep.subr.mxu0 0.0
    %3648 = vmatpush2.msra.mxu0 0.0
    %3649 = vmatprep.subr.mxu0 0.0
    %3650 = vmatpush2.msra.mxu0 0.0
    %3651 = vmatprep.subr.mxu0 0.0
    %3652 = vmatpush2.msra.mxu0 0.0
    %3653 = vmatprep.subr.mxu0 0.0
    %3654 = vmatpush2.msra.mxu0 0.0
    %3655 = vmatprep.subr.mxu0 0.0
    %3656 = vmatpush2.msra.mxu0 0.0
    %3657 = vmatprep.subr.mxu0 0.0
    %3658 = vmatpush2.msra.mxu0 0.0
    %3659 = vmatprep.subr.mxu0 0.0
    %3660 = vmatpush2.msra.mxu0 0.0
    %3661 = vmatprep.subr.mxu0 0.0
    %3662 = vmatpush2.msra.mxu0 0.0
    %3663 = vmatprep.subr.mxu0 0.0
    %3664 = vmatpush2.msra.mxu0 0.0
    %3665 = vmatprep.mubr.f32.mxu0 0.0
    %3666 = vmatmul.mubr.f32.gmra.mxu0 %v3599
    %v3667 = vpop.f32.mrf.mxu0
    %v3668 = vadd.f32 0.0, %v3667
    %v3669 = vpop.f32.mrf.mxu0
    %3670 = vdwg.mxu0
    %v3671 = vadd.f32 %v3432, %v3668
    %v3672 = vmul.f32 %v2624, 0.35355338
    %v3674 = vsel %vm341, %v3672, 0
    %v3677 = vsel %vm341, %v2707, 0
    %3679 = vmatprep.subr.mxu0 0.0
    %3680 = vmatpush1.xpose.msra.mxu0 0.0
    %3681 = vmatprep.subr.mxu0 0.0
    %3682 = vmatpush1.xpose.msra.mxu0 0.0
    %3683 = vmatprep.subr.mxu0 0.0
    %3684 = vmatpush1.xpose.msra.mxu0 0.0
    %3685 = vmatprep.subr.mxu0 0.0
    %3686 = vmatpush1.xpose.msra.mxu0 0.0
    %3687 = vmatprep.subr.mxu0 0.0
    %3688 = vmatpush1.xpose.msra.mxu0 0.0
    %3689 = vmatprep.subr.mxu0 0.0
    %3690 = vmatpush1.xpose.msra.mxu0 0.0
    %3691 = vmatprep.subr.mxu0 0.0
    %3692 = vmatpush1.xpose.msra.mxu0 0.0
    %3693 = vmatprep.subr.mxu0 0.0
    %3694 = vmatpush1.xpose.msra.mxu0 0.0
    %3695 = vmatprep.subr.mxu0 0.0
    %3696 = vmatpush1.xpose.msra.mxu0 0.0
    %3697 = vmatprep.subr.mxu0 0.0
    %3698 = vmatpush1.xpose.msra.mxu0 0.0
    %3699 = vmatprep.subr.mxu0 0.0
    %3700 = vmatpush1.xpose.msra.mxu0 0.0
    %3701 = vmatprep.subr.mxu0 0.0
    %3702 = vmatpush1.xpose.msra.mxu0 0.0
    %3703 = vmatprep.subr.mxu0 0.0
    %3704 = vmatpush1.xpose.msra.mxu0 0.0
    %3705 = vmatprep.subr.mxu0 0.0
    %3706 = vmatpush1.xpose.msra.mxu0 0.0
    %3707 = vmatprep.subr.mxu0 0.0
    %3708 = vmatpush1.xpose.msra.mxu0 0.0
    %3709 = vmatprep.subr.mxu0 0.0
    %3710 = vmatpush1.xpose.msra.mxu0 %v3677
    %3711 = vmatprep.subr.mxu0 0.0
    %3712 = vmatpush2.xpose.msra.mxu0 0.0
    %3713 = vmatprep.subr.mxu0 0.0
    %3714 = vmatpush2.xpose.msra.mxu0 0.0
    %3715 = vmatprep.subr.mxu0 0.0
    %3716 = vmatpush2.xpose.msra.mxu0 0.0
    %3717 = vmatprep.subr.mxu0 0.0
    %3718 = vmatpush2.xpose.msra.mxu0 0.0
    %3719 = vmatprep.subr.mxu0 0.0
    %3720 = vmatpush2.xpose.msra.mxu0 0.0
    %3721 = vmatprep.subr.mxu0 0.0
    %3722 = vmatpush2.xpose.msra.mxu0 0.0
    %3723 = vmatprep.subr.mxu0 0.0
    %3724 = vmatpush2.xpose.msra.mxu0 0.0
    %3725 = vmatprep.subr.mxu0 0.0
    %3726 = vmatpush2.xpose.msra.mxu0 0.0
    %3727 = vmatprep.subr.mxu0 0.0
    %3728 = vmatpush2.xpose.msra.mxu0 0.0
    %3729 = vmatprep.subr.mxu0 0.0
    %3730 = vmatpush2.xpose.msra.mxu0 0.0
    %3731 = vmatprep.subr.mxu0 0.0
    %3732 = vmatpush2.xpose.msra.mxu0 0.0
    %3733 = vmatprep.subr.mxu0 0.0
    %3734 = vmatpush2.xpose.msra.mxu0 0.0
    %3735 = vmatprep.subr.mxu0 0.0
    %3736 = vmatpush2.xpose.msra.mxu0 0.0
    %3737 = vmatprep.subr.mxu0 0.0
    %3738 = vmatpush2.xpose.msra.mxu0 0.0
    %3739 = vmatprep.subr.mxu0 0.0
    %3740 = vmatpush2.xpose.msra.mxu0 0.0
    %3741 = vmatprep.subr.mxu0 0.0
    %3742 = vmatpush2.xpose.msra.mxu0 0.0
    %3743 = vmatprep.mubr.f32.mxu0 0.0
    %3744 = vmatmul.mubr.f32.gmra.mxu0 %v3674
    %v3745 = vpop.f32.mrf.mxu0
    %v3746 = vadd.f32 0.0, %v3745
    %v3747 = vpop.f32.mrf.mxu0
    %3748 = vdwg.mxu0
    %v3749 = vsel %vm341, %v3746, -inf
    %3750 = vmax.xlane.f32.xlu0 %v3749
    %v3751 = vpop.xlane.xlu0 %3750
    %v3752 = vsub.f32 %v3746, %v3751
    %v3753 = vmul.f32 %v3752, 1.442695
    %v3754 = vpow.pop %v3753
    %v3755 = vsel %vm341, %v3754, 0.0
    %3756 = vadd.xlane.f32.xlu0 %v3755
    %v3757 = vpop.xlane.xlu0 %3756
    %v3758 = vrcp.pop %v3757
    %v3759 = vmul.f32 %v3754, %v3758
    %3761 = vrot.lane.b32.xlu0 %v2717, 96
    %v3762 = vpop.permute.xlu0 %3761
    %v3765 = vsel %vm341, %v3759, 0
    %3767 = vmatprep.subr.mxu0 0.0
    %3768 = vmatpush1.msra.mxu0 0.0
    %3769 = vmatprep.subr.mxu0 0.0
    %3770 = vmatpush1.msra.mxu0 0.0
    %3771 = vmatprep.subr.mxu0 0.0
    %3772 = vmatpush1.msra.mxu0 0.0
    %3773 = vmatprep.subr.mxu0 0.0
    %3774 = vmatpush1.msra.mxu0 0.0
    %3775 = vmatprep.subr.mxu0 0.0
    %3776 = vmatpush1.msra.mxu0 0.0
    %3777 = vmatprep.subr.mxu0 0.0
    %3778 = vmatpush1.msra.mxu0 0.0
    %3779 = vmatprep.subr.mxu0 0.0
    %3780 = vmatpush1.msra.mxu0 0.0
    %3781 = vmatprep.subr.mxu0 0.0
    %3782 = vmatpush1.msra.mxu0 0.0
    %3783 = vmatprep.subr.mxu0 0.0
    %3784 = vmatpush1.msra.mxu0 0.0
    %3785 = vmatprep.subr.mxu0 0.0
    %3786 = vmatpush1.msra.mxu0 0.0
    %3787 = vmatprep.subr.mxu0 0.0
    %3788 = vmatpush1.msra.mxu0 0.0
    %3789 = vmatprep.subr.mxu0 0.0
    %3790 = vmatpush1.msra.mxu0 0.0
    %3791 = vmatprep.subr.mxu0 0.0
    %3792 = vmatpush1.msra.mxu0 0.0
    %3793 = vmatprep.subr.mxu0 0.0
    %3794 = vmatpush1.msra.mxu0 0.0
    %3795 = vmatprep.subr.mxu0 0.0
    %3796 = vmatpush1.msra.mxu0 0.0
    %3797 = vmatprep.subr.mxu0 0.0
    %3798 = vmatpush1.msra.mxu0 %v3762
    %3799 = vmatprep.subr.mxu0 0.0
    %3800 = vmatpush2.msra.mxu0 0.0
    %3801 = vmatprep.subr.mxu0 0.0
    %3802 = vmatpush2.msra.mxu0 0.0
    %3803 = vmatprep.subr.mxu0 0.0
    %3804 = vmatpush2.msra.mxu0 0.0
    %3805 = vmatprep.subr.mxu0 0.0
    %3806 = vmatpush2.msra.mxu0 0.0
    %3807 = vmatprep.subr.mxu0 0.0
    %3808 = vmatpush2.msra.mxu0 0.0
    %3809 = vmatprep.subr.mxu0 0.0
    %3810 = vmatpush2.msra.mxu0 0.0
    %3811 = vmatprep.subr.mxu0 0.0
    %3812 = vmatpush2.msra.mxu0 0.0
    %3813 = vmatprep.subr.mxu0 0.0
    %3814 = vmatpush2.msra.mxu0 0.0
    %3815 = vmatprep.subr.mxu0 0.0
    %3816 = vmatpush2.msra.mxu0 0.0
    %3817 = vmatprep.subr.mxu0 0.0
    %3818 = vmatpush2.msra.mxu0 0.0
    %3819 = vmatprep.subr.mxu0 0.0
    %3820 = vmatpush2.msra.mxu0 0.0
    %3821 = vmatprep.subr.mxu0 0.0
    %3822 = vmatpush2.msra.mxu0 0.0
    %3823 = vmatprep.subr.mxu0 0.0
    %3824 = vmatpush2.msra.mxu0 0.0
    %3825 = vmatprep.subr.mxu0 0.0
    %3826 = vmatpush2.msra.mxu0 0.0
    %3827 = vmatprep.subr.mxu0 0.0
    %3828 = vmatpush2.msra.mxu0 0.0
    %3829 = vmatprep.subr.mxu0 0.0
    %3830 = vmatpush2.msra.mxu0 0.0
    %3831 = vmatprep.mubr.f32.mxu0 0.0
    %3832 = vmatmul.mubr.f32.gmra.mxu0 %v3765
    %v3833 = vpop.f32.mrf.mxu0
    %v3834 = vadd.f32 0.0, %v3833
    %v3835 = vpop.f32.mrf.mxu0
    %3836 = vdwg.mxu0
    %3837 = vrot.lane.b32.xlu0 %v3672, 120
    %v3838 = vpop.permute.xlu0 %3837
    %3839 = vrot.lane.b32.xlu0 %v2707, 120
    %v3840 = vpop.permute.xlu0 %3839
    %v3841 = vsel %vm341, %v3838, 0
    %v3843 = vsel %vm341, %v3840, 0
    %3845 = vmatprep.subr.mxu0 0.0
    %3846 = vmatpush1.xpose.msra.mxu0 0.0
    %3847 = vmatprep.subr.mxu0 0.0
    %3848 = vmatpush1.xpose.msra.mxu0 0.0
    %3849 = vmatprep.subr.mxu0 0.0
    %3850 = vmatpush1.xpose.msra.mxu0 0.0
    %3851 = vmatprep.subr.mxu0 0.0
    %3852 = vmatpush1.xpose.msra.mxu0 0.0
    %3853 = vmatprep.subr.mxu0 0.0
    %3854 = vmatpush1.xpose.msra.mxu0 0.0
    %3855 = vmatprep.subr.mxu0 0.0
    %3856 = vmatpush1.xpose.msra.mxu0 0.0
    %3857 = vmatprep.subr.mxu0 0.0
    %3858 = vmatpush1.xpose.msra.mxu0 0.0
    %3859 = vmatprep.subr.mxu0 0.0
    %3860 = vmatpush1.xpose.msra.mxu0 0.0
    %3861 = vmatprep.subr.mxu0 0.0
    %3862 = vmatpush1.xpose.msra.mxu0 0.0
    %3863 = vmatprep.subr.mxu0 0.0
    %3864 = vmatpush1.xpose.msra.mxu0 0.0
    %3865 = vmatprep.subr.mxu0 0.0
    %3866 = vmatpush1.xpose.msra.mxu0 0.0
    %3867 = vmatprep.subr.mxu0 0.0
    %3868 = vmatpush1.xpose.msra.mxu0 0.0
    %3869 = vmatprep.subr.mxu0 0.0
    %3870 = vmatpush1.xpose.msra.mxu0 0.0
    %3871 = vmatprep.subr.mxu0 0.0
    %3872 = vmatpush1.xpose.msra.mxu0 0.0
    %3873 = vmatprep.subr.mxu0 0.0
    %3874 = vmatpush1.xpose.msra.mxu0 0.0
    %3875 = vmatprep.subr.mxu0 0.0
    %3876 = vmatpush1.xpose.msra.mxu0 %v3843
    %3877 = vmatprep.subr.mxu0 0.0
    %3878 = vmatpush2.xpose.msra.mxu0 0.0
    %3879 = vmatprep.subr.mxu0 0.0
    %3880 = vmatpush2.xpose.msra.mxu0 0.0
    %3881 = vmatprep.subr.mxu0 0.0
    %3882 = vmatpush2.xpose.msra.mxu0 0.0
    %3883 = vmatprep.subr.mxu0 0.0
    %3884 = vmatpush2.xpose.msra.mxu0 0.0
    %3885 = vmatprep.subr.mxu0 0.0
    %3886 = vmatpush2.xpose.msra.mxu0 0.0
    %3887 = vmatprep.subr.mxu0 0.0
    %3888 = vmatpush2.xpose.msra.mxu0 0.0
    %3889 = vmatprep.subr.mxu0 0.0
    %3890 = vmatpush2.xpose.msra.mxu0 0.0
    %3891 = vmatprep.subr.mxu0 0.0
    %3892 = vmatpush2.xpose.msra.mxu0 0.0
    %3893 = vmatprep.subr.mxu0 0.0
    %3894 = vmatpush2.xpose.msra.mxu0 0.0
    %3895 = vmatprep.subr.mxu0 0.0
    %3896 = vmatpush2.xpose.msra.mxu0 0.0
    %3897 = vmatprep.subr.mxu0 0.0
    %3898 = vmatpush2.xpose.msra.mxu0 0.0
    %3899 = vmatprep.subr.mxu0 0.0
    %3900 = vmatpush2.xpose.msra.mxu0 0.0
    %3901 = vmatprep.subr.mxu0 0.0
    %3902 = vmatpush2.xpose.msra.mxu0 0.0
    %3903 = vmatprep.subr.mxu0 0.0
    %3904 = vmatpush2.xpose.msra.mxu0 0.0
    %3905 = vmatprep.subr.mxu0 0.0
    %3906 = vmatpush2.xpose.msra.mxu0 0.0
    %3907 = vmatprep.subr.mxu0 0.0
    %3908 = vmatpush2.xpose.msra.mxu0 0.0
    %3909 = vmatprep.mubr.f32.mxu0 0.0
    %3910 = vmatmul.mubr.f32.gmra.mxu0 %v3841
    %v3911 = vpop.f32.mrf.mxu0
    %v3912 = vadd.f32 0.0, %v3911
    %v3913 = vpop.f32.mrf.mxu0
    %3914 = vdwg.mxu0
    %v3915 = vsel %vm341, %v3912, -inf
    %3916 = vmax.xlane.f32.xlu0 %v3915
    %v3917 = vpop.xlane.xlu0 %3916
    %v3918 = vsub.f32 %v3912, %v3917
    %v3919 = vmul.f32 %v3918, 1.442695
    %v3920 = vpow.pop %v3919
    %v3921 = vsel %vm341, %v3920, 0.0
    %3922 = vadd.xlane.f32.xlu0 %v3921
    %v3923 = vpop.xlane.xlu0 %3922
    %v3924 = vrcp.pop %v3923
    %v3925 = vmul.f32 %v3920, %v3924
    %3926 = vrot.lane.b32.xlu0 %v2717, 88
    %v3927 = vpop.permute.xlu0 %3926
    %v3930 = vsel %vm341, %v3925, 0
    %3932 = vmatprep.subr.mxu0 0.0
    %3933 = vmatpush1.msra.mxu0 0.0
    %3934 = vmatprep.subr.mxu0 0.0
    %3935 = vmatpush1.msra.mxu0 0.0
    %3936 = vmatprep.subr.mxu0 0.0
    %3937 = vmatpush1.msra.mxu0 0.0
    %3938 = vmatprep.subr.mxu0 0.0
    %3939 = vmatpush1.msra.mxu0 0.0
    %3940 = vmatprep.subr.mxu0 0.0
    %3941 = vmatpush1.msra.mxu0 0.0
    %3942 = vmatprep.subr.mxu0 0.0
    %3943 = vmatpush1.msra.mxu0 0.0
    %3944 = vmatprep.subr.mxu0 0.0
    %3945 = vmatpush1.msra.mxu0 0.0
    %3946 = vmatprep.subr.mxu0 0.0
    %3947 = vmatpush1.msra.mxu0 0.0
    %3948 = vmatprep.subr.mxu0 0.0
    %3949 = vmatpush1.msra.mxu0 0.0
    %3950 = vmatprep.subr.mxu0 0.0
    %3951 = vmatpush1.msra.mxu0 0.0
    %3952 = vmatprep.subr.mxu0 0.0
    %3953 = vmatpush1.msra.mxu0 0.0
    %3954 = vmatprep.subr.mxu0 0.0
    %3955 = vmatpush1.msra.mxu0 0.0
    %3956 = vmatprep.subr.mxu0 0.0
    %3957 = vmatpush1.msra.mxu0 0.0
    %3958 = vmatprep.subr.mxu0 0.0
    %3959 = vmatpush1.msra.mxu0 0.0
    %3960 = vmatprep.subr.mxu0 0.0
    %3961 = vmatpush1.msra.mxu0 0.0
    %3962 = vmatprep.subr.mxu0 0.0
    %3963 = vmatpush1.msra.mxu0 %v3927
    %3964 = vmatprep.subr.mxu0 0.0
    %3965 = vmatpush2.msra.mxu0 0.0
    %3966 = vmatprep.subr.mxu0 0.0
    %3967 = vmatpush2.msra.mxu0 0.0
    %3968 = vmatprep.subr.mxu0 0.0
    %3969 = vmatpush2.msra.mxu0 0.0
    %3970 = vmatprep.subr.mxu0 0.0
    %3971 = vmatpush2.msra.mxu0 0.0
    %3972 = vmatprep.subr.mxu0 0.0
    %3973 = vmatpush2.msra.mxu0 0.0
    %3974 = vmatprep.subr.mxu0 0.0
    %3975 = vmatpush2.msra.mxu0 0.0
    %3976 = vmatprep.subr.mxu0 0.0
    %3977 = vmatpush2.msra.mxu0 0.0
    %3978 = vmatprep.subr.mxu0 0.0
    %3979 = vmatpush2.msra.mxu0 0.0
    %3980 = vmatprep.subr.mxu0 0.0
    %3981 = vmatpush2.msra.mxu0 0.0
    %3982 = vmatprep.subr.mxu0 0.0
    %3983 = vmatpush2.msra.mxu0 0.0
    %3984 = vmatprep.subr.mxu0 0.0
    %3985 = vmatpush2.msra.mxu0 0.0
    %3986 = vmatprep.subr.mxu0 0.0
    %3987 = vmatpush2.msra.mxu0 0.0
    %3988 = vmatprep.subr.mxu0 0.0
    %3989 = vmatpush2.msra.mxu0 0.0
    %3990 = vmatprep.subr.mxu0 0.0
    %3991 = vmatpush2.msra.mxu0 0.0
    %3992 = vmatprep.subr.mxu0 0.0
    %3993 = vmatpush2.msra.mxu0 0.0
    %3994 = vmatprep.subr.mxu0 0.0
    %3995 = vmatpush2.msra.mxu0 0.0
    %3996 = vmatprep.mubr.f32.mxu0 0.0
    %3997 = vmatmul.mubr.f32.gmra.mxu0 %v3930
    %v3998 = vpop.f32.mrf.mxu0
    %v3999 = vadd.f32 0.0, %v3998
    %v4000 = vpop.f32.mrf.mxu0
    %4001 = vdwg.mxu0
    %v4003 = vsel %vm341, %v3999, 0
    %4005 = vmatprep.subr.mxu0 0.0
    %4006 = vmatpush1.msra.mxu0 0.0
    %4007 = vmatprep.subr.mxu0 0.0
    %4008 = vmatpush1.msra.mxu0 0.0
    %4009 = vmatprep.subr.mxu0 0.0
    %4010 = vmatpush1.msra.mxu0 0.0
    %4011 = vmatprep.subr.mxu0 0.0
    %4012 = vmatpush1.msra.mxu0 0.0
    %4013 = vmatprep.subr.mxu0 0.0
    %4014 = vmatpush1.msra.mxu0 0.0
    %4015 = vmatprep.subr.mxu0 0.0
    %4016 = vmatpush1.msra.mxu0 0.0
    %4017 = vmatprep.subr.mxu0 0.0
    %4018 = vmatpush1.msra.mxu0 0.0
    %4019 = vmatprep.subr.mxu0 0.0
    %4020 = vmatpush1.msra.mxu0 0.0
    %4021 = vmatprep.subr.mxu0 0.0
    %4022 = vmatpush1.msra.mxu0 0.0
    %4023 = vmatprep.subr.mxu0 0.0
    %4024 = vmatpush1.msra.mxu0 0.0
    %4025 = vmatprep.subr.mxu0 0.0
    %4026 = vmatpush1.msra.mxu0 0.0
    %4027 = vmatprep.subr.mxu0 0.0
    %4028 = vmatpush1.msra.mxu0 0.0
    %4029 = vmatprep.subr.mxu0 0.0
    %4030 = vmatpush1.msra.mxu0 0.0
    %4031 = vmatprep.subr.mxu0 0.0
    %4032 = vmatpush1.msra.mxu0 0.0
    %4033 = vmatprep.subr.mxu0 0.0
    %4034 = vmatpush1.msra.mxu0 0.0
    %4035 = vmatprep.subr.mxu0 0.0
    %4036 = vmatpush1.msra.mxu0 %v2539
    %4037 = vmatprep.subr.mxu0 0.0
    %4038 = vmatpush2.msra.mxu0 0.0
    %4039 = vmatprep.subr.mxu0 0.0
    %4040 = vmatpush2.msra.mxu0 0.0
    %4041 = vmatprep.subr.mxu0 0.0
    %4042 = vmatpush2.msra.mxu0 0.0
    %4043 = vmatprep.subr.mxu0 0.0
    %4044 = vmatpush2.msra.mxu0 0.0
    %4045 = vmatprep.subr.mxu0 0.0
    %4046 = vmatpush2.msra.mxu0 0.0
    %4047 = vmatprep.subr.mxu0 0.0
    %4048 = vmatpush2.msra.mxu0 0.0
    %4049 = vmatprep.subr.mxu0 0.0
    %4050 = vmatpush2.msra.mxu0 0.0
    %4051 = vmatprep.subr.mxu0 0.0
    %4052 = vmatpush2.msra.mxu0 0.0
    %4053 = vmatprep.subr.mxu0 0.0
    %4054 = vmatpush2.msra.mxu0 0.0
    %4055 = vmatprep.subr.mxu0 0.0
    %4056 = vmatpush2.msra.mxu0 0.0
    %4057 = vmatprep.subr.mxu0 0.0
    %4058 = vmatpush2.msra.mxu0 0.0
    %4059 = vmatprep.subr.mxu0 0.0
    %4060 = vmatpush2.msra.mxu0 0.0
    %4061 = vmatprep.subr.mxu0 0.0
    %4062 = vmatpush2.msra.mxu0 0.0
    %4063 = vmatprep.subr.mxu0 0.0
    %4064 = vmatpush2.msra.mxu0 0.0
    %4065 = vmatprep.subr.mxu0 0.0
    %4066 = vmatpush2.msra.mxu0 0.0
    %4067 = vmatprep.subr.mxu0 0.0
    %4068 = vmatpush2.msra.mxu0 0.0
    %4069 = vmatprep.mubr.f32.mxu0 0.0
    %4070 = vmatmul.mubr.f32.gmra.mxu0 %v4003
    %v4071 = vpop.f32.mrf.mxu0
    %v4072 = vadd.f32 0.0, %v4071
    %v4073 = vpop.f32.mrf.mxu0
    %4074 = vdwg.mxu0
    %v4076 = vsel %vm341, %v3834, 0
    %4078 = vmatprep.subr.mxu0 0.0
    %4079 = vmatpush1.msra.mxu0 0.0
    %4080 = vmatprep.subr.mxu0 0.0
    %4081 = vmatpush1.msra.mxu0 0.0
    %4082 = vmatprep.subr.mxu0 0.0
    %4083 = vmatpush1.msra.mxu0 0.0
    %4084 = vmatprep.subr.mxu0 0.0
    %4085 = vmatpush1.msra.mxu0 0.0
    %4086 = vmatprep.subr.mxu0 0.0
    %4087 = vmatpush1.msra.mxu0 0.0
    %4088 = vmatprep.subr.mxu0 0.0
    %4089 = vmatpush1.msra.mxu0 0.0
    %4090 = vmatprep.subr.mxu0 0.0
    %4091 = vmatpush1.msra.mxu0 0.0
    %4092 = vmatprep.subr.mxu0 0.0
    %4093 = vmatpush1.msra.mxu0 0.0
    %4094 = vmatprep.subr.mxu0 0.0
    %4095 = vmatpush1.msra.mxu0 0.0
    %4096 = vmatprep.subr.mxu0 0.0
    %4097 = vmatpush1.msra.mxu0 0.0
    %4098 = vmatprep.subr.mxu0 0.0
    %4099 = vmatpush1.msra.mxu0 0.0
    %4100 = vmatprep.subr.mxu0 0.0
    %4101 = vmatpush1.msra.mxu0 0.0
    %4102 = vmatprep.subr.mxu0 0.0
    %4103 = vmatpush1.msra.mxu0 0.0
    %4104 = vmatprep.subr.mxu0 0.0
    %4105 = vmatpush1.msra.mxu0 0.0
    %4106 = vmatprep.subr.mxu0 0.0
    %4107 = vmatpush1.msra.mxu0 0.0
    %4108 = vmatprep.subr.mxu0 0.0
    %4109 = vmatpush1.msra.mxu0 %v2538
    %4110 = vmatprep.subr.mxu0 0.0
    %4111 = vmatpush2.msra.mxu0 0.0
    %4112 = vmatprep.subr.mxu0 0.0
    %4113 = vmatpush2.msra.mxu0 0.0
    %4114 = vmatprep.subr.mxu0 0.0
    %4115 = vmatpush2.msra.mxu0 0.0
    %4116 = vmatprep.subr.mxu0 0.0
    %4117 = vmatpush2.msra.mxu0 0.0
    %4118 = vmatprep.subr.mxu0 0.0
    %4119 = vmatpush2.msra.mxu0 0.0
    %4120 = vmatprep.subr.mxu0 0.0
    %4121 = vmatpush2.msra.mxu0 0.0
    %4122 = vmatprep.subr.mxu0 0.0
    %4123 = vmatpush2.msra.mxu0 0.0
    %4124 = vmatprep.subr.mxu0 0.0
    %4125 = vmatpush2.msra.mxu0 0.0
    %4126 = vmatprep.subr.mxu0 0.0
    %4127 = vmatpush2.msra.mxu0 0.0
    %4128 = vmatprep.subr.mxu0 0.0
    %4129 = vmatpush2.msra.mxu0 0.0
    %4130 = vmatprep.subr.mxu0 0.0
    %4131 = vmatpush2.msra.mxu0 0.0
    %4132 = vmatprep.subr.mxu0 0.0
    %4133 = vmatpush2.msra.mxu0 0.0
    %4134 = vmatprep.subr.mxu0 0.0
    %4135 = vmatpush2.msra.mxu0 0.0
    %4136 = vmatprep.subr.mxu0 0.0
    %4137 = vmatpush2.msra.mxu0 0.0
    %4138 = vmatprep.subr.mxu0 0.0
    %4139 = vmatpush2.msra.mxu0 0.0
    %4140 = vmatprep.subr.mxu0 0.0
    %4141 = vmatpush2.msra.mxu0 0.0
    %4142 = vmatprep.mubr.f32.mxu0 0.0
    %4143 = vmatmul.mubr.f32.gmra.mxu0 %v4076
    %v4144 = vpop.f32.mrf.mxu0
    %v4145 = vadd.f32 %v4072, %v4144
    %v4146 = vpop.f32.mrf.mxu0
    %4147 = vdwg.mxu0
    %4148 = vrot.lane.b32.xlu0 %v3672, 112
    %v4149 = vpop.permute.xlu0 %4148
    %4150 = vrot.lane.b32.xlu0 %v2707, 112
    %v4151 = vpop.permute.xlu0 %4150
    %v4152 = vsel %vm341, %v4149, 0
    %v4154 = vsel %vm341, %v4151, 0
    %4156 = vmatprep.subr.mxu0 0.0
    %4157 = vmatpush1.xpose.msra.mxu0 0.0
    %4158 = vmatprep.subr.mxu0 0.0
    %4159 = vmatpush1.xpose.msra.mxu0 0.0
    %4160 = vmatprep.subr.mxu0 0.0
    %4161 = vmatpush1.xpose.msra.mxu0 0.0
    %4162 = vmatprep.subr.mxu0 0.0
    %4163 = vmatpush1.xpose.msra.mxu0 0.0
    %4164 = vmatprep.subr.mxu0 0.0
    %4165 = vmatpush1.xpose.msra.mxu0 0.0
    %4166 = vmatprep.subr.mxu0 0.0
    %4167 = vmatpush1.xpose.msra.mxu0 0.0
    %4168 = vmatprep.subr.mxu0 0.0
    %4169 = vmatpush1.xpose.msra.mxu0 0.0
    %4170 = vmatprep.subr.mxu0 0.0
    %4171 = vmatpush1.xpose.msra.mxu0 0.0
    %4172 = vmatprep.subr.mxu0 0.0
    %4173 = vmatpush1.xpose.msra.mxu0 0.0
    %4174 = vmatprep.subr.mxu0 0.0
    %4175 = vmatpush1.xpose.msra.mxu0 0.0
    %4176 = vmatprep.subr.mxu0 0.0
    %4177 = vmatpush1.xpose.msra.mxu0 0.0
    %4178 = vmatprep.subr.mxu0 0.0
    %4179 = vmatpush1.xpose.msra.mxu0 0.0
    %4180 = vmatprep.subr.mxu0 0.0
    %4181 = vmatpush1.xpose.msra.mxu0 0.0
    %4182 = vmatprep.subr.mxu0 0.0
    %4183 = vmatpush1.xpose.msra.mxu0 0.0
    %4184 = vmatprep.subr.mxu0 0.0
    %4185 = vmatpush1.xpose.msra.mxu0 0.0
    %4186 = vmatprep.subr.mxu0 0.0
    %4187 = vmatpush1.xpose.msra.mxu0 %v4154
    %4188 = vmatprep.subr.mxu0 0.0
    %4189 = vmatpush2.xpose.msra.mxu0 0.0
    %4190 = vmatprep.subr.mxu0 0.0
    %4191 = vmatpush2.xpose.msra.mxu0 0.0
    %4192 = vmatprep.subr.mxu0 0.0
    %4193 = vmatpush2.xpose.msra.mxu0 0.0
    %4194 = vmatprep.subr.mxu0 0.0
    %4195 = vmatpush2.xpose.msra.mxu0 0.0
    %4196 = vmatprep.subr.mxu0 0.0
    %4197 = vmatpush2.xpose.msra.mxu0 0.0
    %4198 = vmatprep.subr.mxu0 0.0
    %4199 = vmatpush2.xpose.msra.mxu0 0.0
    %4200 = vmatprep.subr.mxu0 0.0
    %4201 = vmatpush2.xpose.msra.mxu0 0.0
    %4202 = vmatprep.subr.mxu0 0.0
    %4203 = vmatpush2.xpose.msra.mxu0 0.0
    %4204 = vmatprep.subr.mxu0 0.0
    %4205 = vmatpush2.xpose.msra.mxu0 0.0
    %4206 = vmatprep.subr.mxu0 0.0
    %4207 = vmatpush2.xpose.msra.mxu0 0.0
    %4208 = vmatprep.subr.mxu0 0.0
    %4209 = vmatpush2.xpose.msra.mxu0 0.0
    %4210 = vmatprep.subr.mxu0 0.0
    %4211 = vmatpush2.xpose.msra.mxu0 0.0
    %4212 = vmatprep.subr.mxu0 0.0
    %4213 = vmatpush2.xpose.msra.mxu0 0.0
    %4214 = vmatprep.subr.mxu0 0.0
    %4215 = vmatpush2.xpose.msra.mxu0 0.0
    %4216 = vmatprep.subr.mxu0 0.0
    %4217 = vmatpush2.xpose.msra.mxu0 0.0
    %4218 = vmatprep.subr.mxu0 0.0
    %4219 = vmatpush2.xpose.msra.mxu0 0.0
    %4220 = vmatprep.mubr.f32.mxu0 0.0
    %4221 = vmatmul.mubr.f32.gmra.mxu0 %v4152
    %v4222 = vpop.f32.mrf.mxu0
    %v4223 = vadd.f32 0.0, %v4222
    %v4224 = vpop.f32.mrf.mxu0
    %4225 = vdwg.mxu0
    %v4226 = vsel %vm341, %v4223, -inf
    %4227 = vmax.xlane.f32.xlu0 %v4226
    %v4228 = vpop.xlane.xlu0 %4227
    %v4229 = vsub.f32 %v4223, %v4228
    %v4230 = vmul.f32 %v4229, 1.442695
    %v4231 = vpow.pop %v4230
    %v4232 = vsel %vm341, %v4231, 0.0
    %4233 = vadd.xlane.f32.xlu0 %v4232
    %v4234 = vpop.xlane.xlu0 %4233
    %v4235 = vrcp.pop %v4234
    %v4236 = vmul.f32 %v4231, %v4235
    %4237 = vrot.lane.b32.xlu0 %v2717, 80
    %v4238 = vpop.permute.xlu0 %4237
    %v4241 = vsel %vm341, %v4236, 0
    %4243 = vmatprep.subr.mxu0 0.0
    %4244 = vmatpush1.msra.mxu0 0.0
    %4245 = vmatprep.subr.mxu0 0.0
    %4246 = vmatpush1.msra.mxu0 0.0
    %4247 = vmatprep.subr.mxu0 0.0
    %4248 = vmatpush1.msra.mxu0 0.0
    %4249 = vmatprep.subr.mxu0 0.0
    %4250 = vmatpush1.msra.mxu0 0.0
    %4251 = vmatprep.subr.mxu0 0.0
    %4252 = vmatpush1.msra.mxu0 0.0
    %4253 = vmatprep.subr.mxu0 0.0
    %4254 = vmatpush1.msra.mxu0 0.0
    %4255 = vmatprep.subr.mxu0 0.0
    %4256 = vmatpush1.msra.mxu0 0.0
    %4257 = vmatprep.subr.mxu0 0.0
    %4258 = vmatpush1.msra.mxu0 0.0
    %4259 = vmatprep.subr.mxu0 0.0
    %4260 = vmatpush1.msra.mxu0 0.0
    %4261 = vmatprep.subr.mxu0 0.0
    %4262 = vmatpush1.msra.mxu0 0.0
    %4263 = vmatprep.subr.mxu0 0.0
    %4264 = vmatpush1.msra.mxu0 0.0
    %4265 = vmatprep.subr.mxu0 0.0
    %4266 = vmatpush1.msra.mxu0 0.0
    %4267 = vmatprep.subr.mxu0 0.0
    %4268 = vmatpush1.msra.mxu0 0.0
    %4269 = vmatprep.subr.mxu0 0.0
    %4270 = vmatpush1.msra.mxu0 0.0
    %4271 = vmatprep.subr.mxu0 0.0
    %4272 = vmatpush1.msra.mxu0 0.0
    %4273 = vmatprep.subr.mxu0 0.0
    %4274 = vmatpush1.msra.mxu0 %v4238
    %4275 = vmatprep.subr.mxu0 0.0
    %4276 = vmatpush2.msra.mxu0 0.0
    %4277 = vmatprep.subr.mxu0 0.0
    %4278 = vmatpush2.msra.mxu0 0.0
    %4279 = vmatprep.subr.mxu0 0.0
    %4280 = vmatpush2.msra.mxu0 0.0
    %4281 = vmatprep.subr.mxu0 0.0
    %4282 = vmatpush2.msra.mxu0 0.0
    %4283 = vmatprep.subr.mxu0 0.0
    %4284 = vmatpush2.msra.mxu0 0.0
    %4285 = vmatprep.subr.mxu0 0.0
    %4286 = vmatpush2.msra.mxu0 0.0
    %4287 = vmatprep.subr.mxu0 0.0
    %4288 = vmatpush2.msra.mxu0 0.0
    %4289 = vmatprep.subr.mxu0 0.0
    %4290 = vmatpush2.msra.mxu0 0.0
    %4291 = vmatprep.subr.mxu0 0.0
    %4292 = vmatpush2.msra.mxu0 0.0
    %4293 = vmatprep.subr.mxu0 0.0
    %4294 = vmatpush2.msra.mxu0 0.0
    %4295 = vmatprep.subr.mxu0 0.0
    %4296 = vmatpush2.msra.mxu0 0.0
    %4297 = vmatprep.subr.mxu0 0.0
    %4298 = vmatpush2.msra.mxu0 0.0
    %4299 = vmatprep.subr.mxu0 0.0
    %4300 = vmatpush2.msra.mxu0 0.0
    %4301 = vmatprep.subr.mxu0 0.0
    %4302 = vmatpush2.msra.mxu0 0.0
    %4303 = vmatprep.subr.mxu0 0.0
    %4304 = vmatpush2.msra.mxu0 0.0
    %4305 = vmatprep.subr.mxu0 0.0
    %4306 = vmatpush2.msra.mxu0 0.0
    %4307 = vmatprep.mubr.f32.mxu0 0.0
    %4308 = vmatmul.mubr.f32.gmra.mxu0 %v4241
    %v4309 = vpop.f32.mrf.mxu0
    %v4310 = vadd.f32 0.0, %v4309
    %v4311 = vpop.f32.mrf.mxu0
    %4312 = vdwg.mxu0
    %v4314 = vsel %vm341, %v4310, 0
    %4316 = vmatprep.subr.mxu0 0.0
    %4317 = vmatpush1.msra.mxu0 0.0
    %4318 = vmatprep.subr.mxu0 0.0
    %4319 = vmatpush1.msra.mxu0 0.0
    %4320 = vmatprep.subr.mxu0 0.0
    %4321 = vmatpush1.msra.mxu0 0.0
    %4322 = vmatprep.subr.mxu0 0.0
    %4323 = vmatpush1.msra.mxu0 0.0
    %4324 = vmatprep.subr.mxu0 0.0
    %4325 = vmatpush1.msra.mxu0 0.0
    %4326 = vmatprep.subr.mxu0 0.0
    %4327 = vmatpush1.msra.mxu0 0.0
    %4328 = vmatprep.subr.mxu0 0.0
    %4329 = vmatpush1.msra.mxu0 0.0
    %4330 = vmatprep.subr.mxu0 0.0
    %4331 = vmatpush1.msra.mxu0 0.0
    %4332 = vmatprep.subr.mxu0 0.0
    %4333 = vmatpush1.msra.mxu0 0.0
    %4334 = vmatprep.subr.mxu0 0.0
    %4335 = vmatpush1.msra.mxu0 0.0
    %4336 = vmatprep.subr.mxu0 0.0
    %4337 = vmatpush1.msra.mxu0 0.0
    %4338 = vmatprep.subr.mxu0 0.0
    %4339 = vmatpush1.msra.mxu0 0.0
    %4340 = vmatprep.subr.mxu0 0.0
    %4341 = vmatpush1.msra.mxu0 0.0
    %4342 = vmatprep.subr.mxu0 0.0
    %4343 = vmatpush1.msra.mxu0 0.0
    %4344 = vmatprep.subr.mxu0 0.0
    %4345 = vmatpush1.msra.mxu0 0.0
    %4346 = vmatprep.subr.mxu0 0.0
    %4347 = vmatpush1.msra.mxu0 %v2540
    %4348 = vmatprep.subr.mxu0 0.0
    %4349 = vmatpush2.msra.mxu0 0.0
    %4350 = vmatprep.subr.mxu0 0.0
    %4351 = vmatpush2.msra.mxu0 0.0
    %4352 = vmatprep.subr.mxu0 0.0
    %4353 = vmatpush2.msra.mxu0 0.0
    %4354 = vmatprep.subr.mxu0 0.0
    %4355 = vmatpush2.msra.mxu0 0.0
    %4356 = vmatprep.subr.mxu0 0.0
    %4357 = vmatpush2.msra.mxu0 0.0
    %4358 = vmatprep.subr.mxu0 0.0
    %4359 = vmatpush2.msra.mxu0 0.0
    %4360 = vmatprep.subr.mxu0 0.0
    %4361 = vmatpush2.msra.mxu0 0.0
    %4362 = vmatprep.subr.mxu0 0.0
    %4363 = vmatpush2.msra.mxu0 0.0
    %4364 = vmatprep.subr.mxu0 0.0
    %4365 = vmatpush2.msra.mxu0 0.0
    %4366 = vmatprep.subr.mxu0 0.0
    %4367 = vmatpush2.msra.mxu0 0.0
    %4368 = vmatprep.subr.mxu0 0.0
    %4369 = vmatpush2.msra.mxu0 0.0
    %4370 = vmatprep.subr.mxu0 0.0
    %4371 = vmatpush2.msra.mxu0 0.0
    %4372 = vmatprep.subr.mxu0 0.0
    %4373 = vmatpush2.msra.mxu0 0.0
    %4374 = vmatprep.subr.mxu0 0.0
    %4375 = vmatpush2.msra.mxu0 0.0
    %4376 = vmatprep.subr.mxu0 0.0
    %4377 = vmatpush2.msra.mxu0 0.0
    %4378 = vmatprep.subr.mxu0 0.0
    %4379 = vmatpush2.msra.mxu0 0.0
    %4380 = vmatprep.mubr.f32.mxu0 0.0
    %4381 = vmatmul.mubr.f32.gmra.mxu0 %v4314
    %v4382 = vpop.f32.mrf.mxu0
    %v4383 = vadd.f32 0.0, %v4382
    %v4384 = vpop.f32.mrf.mxu0
    %4385 = vdwg.mxu0
    %v4386 = vadd.f32 %v4145, %v4383
    %4387 = vrot.lane.b32.xlu0 %v3672, 104
    %v4388 = vpop.permute.xlu0 %4387
    %4389 = vrot.lane.b32.xlu0 %v2707, 104
    %v4390 = vpop.permute.xlu0 %4389
    %v4391 = vsel %vm341, %v4388, 0
    %v4393 = vsel %vm341, %v4390, 0
    %4395 = vmatprep.subr.mxu0 0.0
    %4396 = vmatpush1.xpose.msra.mxu0 0.0
    %4397 = vmatprep.subr.mxu0 0.0
    %4398 = vmatpush1.xpose.msra.mxu0 0.0
    %4399 = vmatprep.subr.mxu0 0.0
    %4400 = vmatpush1.xpose.msra.mxu0 0.0
    %4401 = vmatprep.subr.mxu0 0.0
    %4402 = vmatpush1.xpose.msra.mxu0 0.0
    %4403 = vmatprep.subr.mxu0 0.0
    %4404 = vmatpush1.xpose.msra.mxu0 0.0
    %4405 = vmatprep.subr.mxu0 0.0
    %4406 = vmatpush1.xpose.msra.mxu0 0.0
    %4407 = vmatprep.subr.mxu0 0.0
    %4408 = vmatpush1.xpose.msra.mxu0 0.0
    %4409 = vmatprep.subr.mxu0 0.0
    %4410 = vmatpush1.xpose.msra.mxu0 0.0
    %4411 = vmatprep.subr.mxu0 0.0
    %4412 = vmatpush1.xpose.msra.mxu0 0.0
    %4413 = vmatprep.subr.mxu0 0.0
    %4414 = vmatpush1.xpose.msra.mxu0 0.0
    %4415 = vmatprep.subr.mxu0 0.0
    %4416 = vmatpush1.xpose.msra.mxu0 0.0
    %4417 = vmatprep.subr.mxu0 0.0
    %4418 = vmatpush1.xpose.msra.mxu0 0.0
    %4419 = vmatprep.subr.mxu0 0.0
    %4420 = vmatpush1.xpose.msra.mxu0 0.0
    %4421 = vmatprep.subr.mxu0 0.0
    %4422 = vmatpush1.xpose.msra.mxu0 0.0
    %4423 = vmatprep.subr.mxu0 0.0
    %4424 = vmatpush1.xpose.msra.mxu0 0.0
    %4425 = vmatprep.subr.mxu0 0.0
    %4426 = vmatpush1.xpose.msra.mxu0 %v4393
    %4427 = vmatprep.subr.mxu0 0.0
    %4428 = vmatpush2.xpose.msra.mxu0 0.0
    %4429 = vmatprep.subr.mxu0 0.0
    %4430 = vmatpush2.xpose.msra.mxu0 0.0
    %4431 = vmatprep.subr.mxu0 0.0
    %4432 = vmatpush2.xpose.msra.mxu0 0.0
    %4433 = vmatprep.subr.mxu0 0.0
    %4434 = vmatpush2.xpose.msra.mxu0 0.0
    %4435 = vmatprep.subr.mxu0 0.0
    %4436 = vmatpush2.xpose.msra.mxu0 0.0
    %4437 = vmatprep.subr.mxu0 0.0
    %4438 = vmatpush2.xpose.msra.mxu0 0.0
    %4439 = vmatprep.subr.mxu0 0.0
    %4440 = vmatpush2.xpose.msra.mxu0 0.0
    %4441 = vmatprep.subr.mxu0 0.0
    %4442 = vmatpush2.xpose.msra.mxu0 0.0
    %4443 = vmatprep.subr.mxu0 0.0
    %4444 = vmatpush2.xpose.msra.mxu0 0.0
    %4445 = vmatprep.subr.mxu0 0.0
    %4446 = vmatpush2.xpose.msra.mxu0 0.0
    %4447 = vmatprep.subr.mxu0 0.0
    %4448 = vmatpush2.xpose.msra.mxu0 0.0
    %4449 = vmatprep.subr.mxu0 0.0
    %4450 = vmatpush2.xpose.msra.mxu0 0.0
    %4451 = vmatprep.subr.mxu0 0.0
    %4452 = vmatpush2.xpose.msra.mxu0 0.0
    %4453 = vmatprep.subr.mxu0 0.0
    %4454 = vmatpush2.xpose.msra.mxu0 0.0
    %4455 = vmatprep.subr.mxu0 0.0
    %4456 = vmatpush2.xpose.msra.mxu0 0.0
    %4457 = vmatprep.subr.mxu0 0.0
    %4458 = vmatpush2.xpose.msra.mxu0 0.0
    %4459 = vmatprep.mubr.f32.mxu0 0.0
    %4460 = vmatmul.mubr.f32.gmra.mxu0 %v4391
    %v4461 = vpop.f32.mrf.mxu0
    %v4462 = vadd.f32 0.0, %v4461
    %v4463 = vpop.f32.mrf.mxu0
    %4464 = vdwg.mxu0
    %v4465 = vsel %vm341, %v4462, -inf
    %4466 = vmax.xlane.f32.xlu0 %v4465
    %v4467 = vpop.xlane.xlu0 %4466
    %v4468 = vsub.f32 %v4462, %v4467
    %v4469 = vmul.f32 %v4468, 1.442695
    %v4470 = vpow.pop %v4469
    %v4471 = vsel %vm341, %v4470, 0.0
    %4472 = vadd.xlane.f32.xlu0 %v4471
    %v4473 = vpop.xlane.xlu0 %4472
    %v4474 = vrcp.pop %v4473
    %v4475 = vmul.f32 %v4470, %v4474
    %4476 = vrot.lane.b32.xlu0 %v2717, 72
    %v4477 = vpop.permute.xlu0 %4476
    %v4480 = vsel %vm341, %v4475, 0
    %4482 = vmatprep.subr.mxu0 0.0
    %4483 = vmatpush1.msra.mxu0 0.0
    %4484 = vmatprep.subr.mxu0 0.0
    %4485 = vmatpush1.msra.mxu0 0.0
    %4486 = vmatprep.subr.mxu0 0.0
    %4487 = vmatpush1.msra.mxu0 0.0
    %4488 = vmatprep.subr.mxu0 0.0
    %4489 = vmatpush1.msra.mxu0 0.0
    %4490 = vmatprep.subr.mxu0 0.0
    %4491 = vmatpush1.msra.mxu0 0.0
    %4492 = vmatprep.subr.mxu0 0.0
    %4493 = vmatpush1.msra.mxu0 0.0
    %4494 = vmatprep.subr.mxu0 0.0
    %4495 = vmatpush1.msra.mxu0 0.0
    %4496 = vmatprep.subr.mxu0 0.0
    %4497 = vmatpush1.msra.mxu0 0.0
    %4498 = vmatprep.subr.mxu0 0.0
    %4499 = vmatpush1.msra.mxu0 0.0
    %4500 = vmatprep.subr.mxu0 0.0
    %4501 = vmatpush1.msra.mxu0 0.0
    %4502 = vmatprep.subr.mxu0 0.0
    %4503 = vmatpush1.msra.mxu0 0.0
    %4504 = vmatprep.subr.mxu0 0.0
    %4505 = vmatpush1.msra.mxu0 0.0
    %4506 = vmatprep.subr.mxu0 0.0
    %4507 = vmatpush1.msra.mxu0 0.0
    %4508 = vmatprep.subr.mxu0 0.0
    %4509 = vmatpush1.msra.mxu0 0.0
    %4510 = vmatprep.subr.mxu0 0.0
    %4511 = vmatpush1.msra.mxu0 0.0
    %4512 = vmatprep.subr.mxu0 0.0
    %4513 = vmatpush1.msra.mxu0 %v4477
    %4514 = vmatprep.subr.mxu0 0.0
    %4515 = vmatpush2.msra.mxu0 0.0
    %4516 = vmatprep.subr.mxu0 0.0
    %4517 = vmatpush2.msra.mxu0 0.0
    %4518 = vmatprep.subr.mxu0 0.0
    %4519 = vmatpush2.msra.mxu0 0.0
    %4520 = vmatprep.subr.mxu0 0.0
    %4521 = vmatpush2.msra.mxu0 0.0
    %4522 = vmatprep.subr.mxu0 0.0
    %4523 = vmatpush2.msra.mxu0 0.0
    %4524 = vmatprep.subr.mxu0 0.0
    %4525 = vmatpush2.msra.mxu0 0.0
    %4526 = vmatprep.subr.mxu0 0.0
    %4527 = vmatpush2.msra.mxu0 0.0
    %4528 = vmatprep.subr.mxu0 0.0
    %4529 = vmatpush2.msra.mxu0 0.0
    %4530 = vmatprep.subr.mxu0 0.0
    %4531 = vmatpush2.msra.mxu0 0.0
    %4532 = vmatprep.subr.mxu0 0.0
    %4533 = vmatpush2.msra.mxu0 0.0
    %4534 = vmatprep.subr.mxu0 0.0
    %4535 = vmatpush2.msra.mxu0 0.0
    %4536 = vmatprep.subr.mxu0 0.0
    %4537 = vmatpush2.msra.mxu0 0.0
    %4538 = vmatprep.subr.mxu0 0.0
    %4539 = vmatpush2.msra.mxu0 0.0
    %4540 = vmatprep.subr.mxu0 0.0
    %4541 = vmatpush2.msra.mxu0 0.0
    %4542 = vmatprep.subr.mxu0 0.0
    %4543 = vmatpush2.msra.mxu0 0.0
    %4544 = vmatprep.subr.mxu0 0.0
    %4545 = vmatpush2.msra.mxu0 0.0
    %4546 = vmatprep.mubr.f32.mxu0 0.0
    %4547 = vmatmul.mubr.f32.gmra.mxu0 %v4480
    %v4548 = vpop.f32.mrf.mxu0
    %v4549 = vadd.f32 0.0, %v4548
    %v4550 = vpop.f32.mrf.mxu0
    %4551 = vdwg.mxu0
    %v4553 = vsel %vm341, %v4549, 0
    %4555 = vmatprep.subr.mxu0 0.0
    %4556 = vmatpush1.msra.mxu0 0.0
    %4557 = vmatprep.subr.mxu0 0.0
    %4558 = vmatpush1.msra.mxu0 0.0
    %4559 = vmatprep.subr.mxu0 0.0
    %4560 = vmatpush1.msra.mxu0 0.0
    %4561 = vmatprep.subr.mxu0 0.0
    %4562 = vmatpush1.msra.mxu0 0.0
    %4563 = vmatprep.subr.mxu0 0.0
    %4564 = vmatpush1.msra.mxu0 0.0
    %4565 = vmatprep.subr.mxu0 0.0
    %4566 = vmatpush1.msra.mxu0 0.0
    %4567 = vmatprep.subr.mxu0 0.0
    %4568 = vmatpush1.msra.mxu0 0.0
    %4569 = vmatprep.subr.mxu0 0.0
    %4570 = vmatpush1.msra.mxu0 0.0
    %4571 = vmatprep.subr.mxu0 0.0
    %4572 = vmatpush1.msra.mxu0 0.0
    %4573 = vmatprep.subr.mxu0 0.0
    %4574 = vmatpush1.msra.mxu0 0.0
    %4575 = vmatprep.subr.mxu0 0.0
    %4576 = vmatpush1.msra.mxu0 0.0
    %4577 = vmatprep.subr.mxu0 0.0
    %4578 = vmatpush1.msra.mxu0 0.0
    %4579 = vmatprep.subr.mxu0 0.0
    %4580 = vmatpush1.msra.mxu0 0.0
    %4581 = vmatprep.subr.mxu0 0.0
    %4582 = vmatpush1.msra.mxu0 0.0
    %4583 = vmatprep.subr.mxu0 0.0
    %4584 = vmatpush1.msra.mxu0 0.0
    %4585 = vmatprep.subr.mxu0 0.0
    %4586 = vmatpush1.msra.mxu0 %v2541
    %4587 = vmatprep.subr.mxu0 0.0
    %4588 = vmatpush2.msra.mxu0 0.0
    %4589 = vmatprep.subr.mxu0 0.0
    %4590 = vmatpush2.msra.mxu0 0.0
    %4591 = vmatprep.subr.mxu0 0.0
    %4592 = vmatpush2.msra.mxu0 0.0
    %4593 = vmatprep.subr.mxu0 0.0
    %4594 = vmatpush2.msra.mxu0 0.0
    %4595 = vmatprep.subr.mxu0 0.0
    %4596 = vmatpush2.msra.mxu0 0.0
    %4597 = vmatprep.subr.mxu0 0.0
    %4598 = vmatpush2.msra.mxu0 0.0
    %4599 = vmatprep.subr.mxu0 0.0
    %4600 = vmatpush2.msra.mxu0 0.0
    %4601 = vmatprep.subr.mxu0 0.0
    %4602 = vmatpush2.msra.mxu0 0.0
    %4603 = vmatprep.subr.mxu0 0.0
    %4604 = vmatpush2.msra.mxu0 0.0
    %4605 = vmatprep.subr.mxu0 0.0
    %4606 = vmatpush2.msra.mxu0 0.0
    %4607 = vmatprep.subr.mxu0 0.0
    %4608 = vmatpush2.msra.mxu0 0.0
    %4609 = vmatprep.subr.mxu0 0.0
    %4610 = vmatpush2.msra.mxu0 0.0
    %4611 = vmatprep.subr.mxu0 0.0
    %4612 = vmatpush2.msra.mxu0 0.0
    %4613 = vmatprep.subr.mxu0 0.0
    %4614 = vmatpush2.msra.mxu0 0.0
    %4615 = vmatprep.subr.mxu0 0.0
    %4616 = vmatpush2.msra.mxu0 0.0
    %4617 = vmatprep.subr.mxu0 0.0
    %4618 = vmatpush2.msra.mxu0 0.0
    %4619 = vmatprep.mubr.f32.mxu0 0.0
    %4620 = vmatmul.mubr.f32.gmra.mxu0 %v4553
    %v4621 = vpop.f32.mrf.mxu0
    %v4622 = vadd.f32 0.0, %v4621
    %v4623 = vpop.f32.mrf.mxu0
    %4624 = vdwg.mxu0
    %v4625 = vadd.f32 %v4386, %v4622
    %v4626 = vlaneseq
    %v4627 = vshrl.u32 %v4626, 7
    %v4628 = vsub.s32 3, %v4627
    %v4629 = vrot.slane %v2525, %v4628
    %v4630 = vadd.f32 %v3671, %v4629
    %v4631 = vadd.f32 %v4625, %v4629
    %v4632 = vadd.f32 %v2522, %v4630
    %v4633 = vadd.f32 %v2523, %v4631
    %v4634 = vsel %vm165, %v4632, 0.0
    %4635 = vadd.xlane.f32.xlu0 %v4634
    %v4636 = vpop.xlane.xlu0 %4635
    %v4637 = vsel %vm165, %v4633, 0.0
    %4638 = vadd.xlane.f32.xlu0 %v4637
    %v4639 = vpop.xlane.xlu0 %4638
    %v4640 = vmul.f32 %v4636, %v2263
    %v4641 = vmul.f32 %v4639, %v2263
    %v4642 = vsub.f32 %v4632, %v4640
    %v4643 = vsub.f32 %v4633, %v4641
    %v4644 = vmul.f32 %v4642, %v4642
    %v4645 = vmul.f32 %v4643, %v4643
    %v4646 = vsel %vm165, %v4644, 0.0
    %4647 = vadd.xlane.f32.xlu0 %v4646
    %v4648 = vpop.xlane.xlu0 %4647
    %v4649 = vsel %vm165, %v4645, 0.0
    %4650 = vadd.xlane.f32.xlu0 %v4649
    %v4651 = vpop.xlane.xlu0 %4650
    %v4652 = vmul.f32 %v4648, %v2263
    %v4653 = vmul.f32 %v4651, %v2263
    %v4654 = vadd.f32 %v4652, 1e-05
    %v4655 = vadd.f32 %v4653, 1e-05
    %v4656 = vrsqrt.pop %v4654
    %v4657 = vrsqrt.pop %v4655
    %v4658 = vmul.f32 %v4642, %v4656
    %v4659 = vmul.f32 %v4643, %v4657
    %v4660 = vlaneseq
    %v4661 = vshrl.u32 %v4660, 7
    %v4662 = vsub.s32 5, %v4661
    %v4663 = vrot.slane %v2525, %v4662
    %v4664 = vmul.f32 %v4658, %v4663
    %v4665 = vmul.f32 %v4659, %v4663
    %v4666 = vlaneseq
    %v4667 = vshrl.u32 %v4666, 7
    %v4668 = vsub.s32 6, %v4667
    %v4669 = vrot.slane %v2525, %v4668
    %v4670 = vadd.f32 %v4664, %v4669
    %v4671 = vadd.f32 %v4665, %v4669
    %s4672 = scalar_lea.vmem [#allocation2], 32
    %v4673 = vld [vmem:[%s4672] sm:$0xff]
    %v4674 = vld [vmem:[%s4672 + $0x8] sm:$0xff]
    %v4675 = vld [vmem:[%s4672 + $0x10] sm:$0xff]
    %v4676 = vld [vmem:[%s4672 + $0x18] sm:$0xff]
    %s4677 = scalar_lea.vmem %s8, 1
    %v4678 = vld [vmem:[%s4677] sm:$0x1]
    %v4680 = vlaneseq
    %v4681 = vshrl.u32 %v4680, 7
    %v4682 = vsub.s32 0, %v4681
    %v4683 = vrot.slane %v4678, %v4682
    %v4686 = vsel %vm165, %v4670, 0
    %v4689 = vsel %vm165, %v4671, 0
    %4691 = vmatprep.subr.mxu0 0.0
    %4692 = vmatpush1.msra.mxu0 0.0
    %4693 = vmatprep.subr.mxu0 0.0
    %4694 = vmatpush1.msra.mxu0 0.0
    %4695 = vmatprep.subr.mxu0 0.0
    %4696 = vmatpush1.msra.mxu0 0.0
    %4697 = vmatprep.subr.mxu0 0.0
    %4698 = vmatpush1.msra.mxu0 0.0
    %4699 = vmatprep.subr.mxu0 0.0
    %4700 = vmatpush1.msra.mxu0 0.0
    %4701 = vmatprep.subr.mxu0 0.0
    %4702 = vmatpush1.msra.mxu0 0.0
    %4703 = vmatprep.subr.mxu0 0.0
    %4704 = vmatpush1.msra.mxu0 0.0
    %4705 = vmatprep.subr.mxu0 0.0
    %4706 = vmatpush1.msra.mxu0 0.0
    %4707 = vmatprep.subr.mxu0 0.0
    %4708 = vmatpush1.msra.mxu0 0.0
    %4709 = vmatprep.subr.mxu0 0.0
    %4710 = vmatpush1.msra.mxu0 0.0
    %4711 = vmatprep.subr.mxu0 0.0
    %4712 = vmatpush1.msra.mxu0 0.0
    %4713 = vmatprep.subr.mxu0 0.0
    %4714 = vmatpush1.msra.mxu0 0.0
    %4715 = vmatprep.subr.mxu0 0.0
    %4716 = vmatpush1.msra.mxu0 %v4676
    %4717 = vmatprep.subr.mxu0 0.0
    %4718 = vmatpush1.msra.mxu0 %v4675
    %4719 = vmatprep.subr.mxu0 0.0
    %4720 = vmatpush1.msra.mxu0 %v4674
    %4721 = vmatprep.subr.mxu0 0.0
    %4722 = vmatpush1.msra.mxu0 %v4673
    %4723 = vmatprep.subr.mxu0 0.0
    %4724 = vmatpush2.msra.mxu0 0.0
    %4725 = vmatprep.subr.mxu0 0.0
    %4726 = vmatpush2.msra.mxu0 0.0
    %4727 = vmatprep.subr.mxu0 0.0
    %4728 = vmatpush2.msra.mxu0 0.0
    %4729 = vmatprep.subr.mxu0 0.0
    %4730 = vmatpush2.msra.mxu0 0.0
    %4731 = vmatprep.subr.mxu0 0.0
    %4732 = vmatpush2.msra.mxu0 0.0
    %4733 = vmatprep.subr.mxu0 0.0
    %4734 = vmatpush2.msra.mxu0 0.0
    %4735 = vmatprep.subr.mxu0 0.0
    %4736 = vmatpush2.msra.mxu0 0.0
    %4737 = vmatprep.subr.mxu0 0.0
    %4738 = vmatpush2.msra.mxu0 0.0
    %4739 = vmatprep.subr.mxu0 0.0
    %4740 = vmatpush2.msra.mxu0 0.0
    %4741 = vmatprep.subr.mxu0 0.0
    %4742 = vmatpush2.msra.mxu0 0.0
    %4743 = vmatprep.subr.mxu0 0.0
    %4744 = vmatpush2.msra.mxu0 0.0
    %4745 = vmatprep.subr.mxu0 0.0
    %4746 = vmatpush2.msra.mxu0 0.0
    %4747 = vmatprep.subr.mxu0 0.0
    %4748 = vmatpush2.msra.mxu0 0.0
    %4749 = vmatprep.subr.mxu0 0.0
    %4750 = vmatpush2.msra.mxu0 0.0
    %4751 = vmatprep.subr.mxu0 0.0
    %4752 = vmatpush2.msra.mxu0 0.0
    %4753 = vmatprep.subr.mxu0 0.0
    %4754 = vmatpush2.msra.mxu0 0.0
    %4755 = vmatprep.mubr.f32.mxu0 0.0
    %4756 = vmatmul.mubr.f32.gmra.mxu0 %v4686
    %v4757 = vpop.f32.mrf.mxu0
    %v4758 = vadd.f32 %v4683, %v4757
    %v4759 = vpop.f32.mrf.mxu0
    %4760 = vmatprep.mubr.f32.mxu0 0.0
    %4761 = vmatmul.mubr.f32.gmra.mxu0 %v4689
    %v4762 = vpop.f32.mrf.mxu0
    %v4763 = vadd.f32 %v4683, %v4762
    %v4764 = vpop.f32.mrf.mxu0
    %4765 = vdwg.mxu0
    %v4766 = vmax.f32 %v4758, 0.0
    %v4767 = vmax.f32 %v4763, 0.0
    %s4768 = scalar_lea.vmem %s6, 64
    %v4769 = vld [vmem:[%s4768] sm:$0xff]
    %v4770 = vld [vmem:[%s4768 + $0x8] sm:$0xff]
    %v4771 = vld [vmem:[%s4768 + $0x10] sm:$0xff]
    %v4772 = vld [vmem:[%s4768 + $0x18] sm:$0xff]
    %v4773 = vld [vmem:[%s4768 + $0x20] sm:$0xff]
    %v4774 = vld [vmem:[%s4768 + $0x28] sm:$0xff]
    %v4775 = vld [vmem:[%s4768 + $0x30] sm:$0xff]
    %v4776 = vld [vmem:[%s4768 + $0x38] sm:$0xff]
    %v4777 = vlaneseq
    %v4778 = vshrl.u32 %v4777, 7
    %v4779 = vsub.s32 4, %v4778
    %v4780 = vrot.slane %v2525, %v4779
    %v4782 = vsel %vm2402, %v4766, 0
    %v4785 = vsel %vm2402, %v4767, 0
    %4787 = vmatprep.subr.mxu0 0.0
    %4788 = vmatpush1.msra.mxu0 0.0
    %4789 = vmatprep.subr.mxu0 0.0
    %4790 = vmatpush1.msra.mxu0 0.0
    %4791 = vmatprep.subr.mxu0 0.0
    %4792 = vmatpush1.msra.mxu0 0.0
    %4793 = vmatprep.subr.mxu0 0.0
    %4794 = vmatpush1.msra.mxu0 0.0
    %4795 = vmatprep.subr.mxu0 0.0
    %4796 = vmatpush1.msra.mxu0 0.0
    %4797 = vmatprep.subr.mxu0 0.0
    %4798 = vmatpush1.msra.mxu0 0.0
    %4799 = vmatprep.subr.mxu0 0.0
    %4800 = vmatpush1.msra.mxu0 0.0
    %4801 = vmatprep.subr.mxu0 0.0
    %4802 = vmatpush1.msra.mxu0 0.0
    %4803 = vmatprep.subr.mxu0 0.0
    %4804 = vmatpush1.msra.mxu0 %v4776
    %4805 = vmatprep.subr.mxu0 0.0
    %4806 = vmatpush1.msra.mxu0 %v4775
    %4807 = vmatprep.subr.mxu0 0.0
    %4808 = vmatpush1.msra.mxu0 %v4774
    %4809 = vmatprep.subr.mxu0 0.0
    %4810 = vmatpush1.msra.mxu0 %v4773
    %4811 = vmatprep.subr.mxu0 0.0
    %4812 = vmatpush1.msra.mxu0 %v4772
    %4813 = vmatprep.subr.mxu0 0.0
    %4814 = vmatpush1.msra.mxu0 %v4771
    %4815 = vmatprep.subr.mxu0 0.0
    %4816 = vmatpush1.msra.mxu0 %v4770
    %4817 = vmatprep.subr.mxu0 0.0
    %4818 = vmatpush1.msra.mxu0 %v4769
    %4819 = vmatprep.subr.mxu0 0.0
    %4820 = vmatpush2.msra.mxu0 0.0
    %4821 = vmatprep.subr.mxu0 0.0
    %4822 = vmatpush2.msra.mxu0 0.0
    %4823 = vmatprep.subr.mxu0 0.0
    %4824 = vmatpush2.msra.mxu0 0.0
    %4825 = vmatprep.subr.mxu0 0.0
    %4826 = vmatpush2.msra.mxu0 0.0
    %4827 = vmatprep.subr.mxu0 0.0
    %4828 = vmatpush2.msra.mxu0 0.0
    %4829 = vmatprep.subr.mxu0 0.0
    %4830 = vmatpush2.msra.mxu0 0.0
    %4831 = vmatprep.subr.mxu0 0.0
    %4832 = vmatpush2.msra.mxu0 0.0
    %4833 = vmatprep.subr.mxu0 0.0
    %4834 = vmatpush2.msra.mxu0 0.0
    %4835 = vmatprep.subr.mxu0 0.0
    %4836 = vmatpush2.msra.mxu0 0.0
    %4837 = vmatprep.subr.mxu0 0.0
    %4838 = vmatpush2.msra.mxu0 0.0
    %4839 = vmatprep.subr.mxu0 0.0
    %4840 = vmatpush2.msra.mxu0 0.0
    %4841 = vmatprep.subr.mxu0 0.0
    %4842 = vmatpush2.msra.mxu0 0.0
    %4843 = vmatprep.subr.mxu0 0.0
    %4844 = vmatpush2.msra.mxu0 0.0
    %4845 = vmatprep.subr.mxu0 0.0
    %4846 = vmatpush2.msra.mxu0 0.0
    %4847 = vmatprep.subr.mxu0 0.0
    %4848 = vmatpush2.msra.mxu0 0.0
    %4849 = vmatprep.subr.mxu0 0.0
    %4850 = vmatpush2.msra.mxu0 0.0
    %4851 = vmatprep.mubr.f32.mxu0 0.0
    %4852 = vmatmul.mubr.f32.gmra.mxu0 %v4782
    %v4853 = vpop.f32.mrf.mxu0
    %v4854 = vadd.f32 %v4780, %v4853
    %v4855 = vpop.f32.mrf.mxu0
    %4856 = vmatprep.mubr.f32.mxu0 0.0
    %4857 = vmatmul.mubr.f32.gmra.mxu0 %v4785
    %v4858 = vpop.f32.mrf.mxu0
    %v4859 = vadd.f32 %v4780, %v4858
    %v4860 = vpop.f32.mrf.mxu0
    %4861 = vdwg.mxu0
    %v4862 = vadd.f32 %v4670, %v4854
    %v4863 = vadd.f32 %v4671, %v4859
    %v4864 = vsel %vm165, %v4862, 0.0
    %4865 = vadd.xlane.f32.xlu0 %v4864
    %v4866 = vpop.xlane.xlu0 %4865
    %v4867 = vsel %vm165, %v4863, 0.0
    %4868 = vadd.xlane.f32.xlu0 %v4867
    %v4869 = vpop.xlane.xlu0 %4868
    %v4870 = vmul.f32 %v4866, %v2263
    %v4871 = vmul.f32 %v4869, %v2263
    %v4872 = vsub.f32 %v4862, %v4870
    %v4873 = vsub.f32 %v4863, %v4871
    %v4874 = vmul.f32 %v4872, %v4872
    %v4875 = vmul.f32 %v4873, %v4873
    %v4876 = vsel %vm165, %v4874, 0.0
    %4877 = vadd.xlane.f32.xlu0 %v4876
    %v4878 = vpop.xlane.xlu0 %4877
    %v4879 = vsel %vm165, %v4875, 0.0
    %4880 = vadd.xlane.f32.xlu0 %v4879
    %v4881 = vpop.xlane.xlu0 %4880
    %v4882 = vmul.f32 %v4878, %v2263
    %v4883 = vmul.f32 %v4881, %v2263
    %v4884 = vadd.f32 %v4882, 1e-05
    %v4885 = vadd.f32 %v4883, 1e-05
    %v4886 = vrsqrt.pop %v4884
    %v4887 = vrsqrt.pop %v4885
    %v4888 = vmul.f32 %v4872, %v4886
    %v4889 = vmul.f32 %v4873, %v4887
    %v4890 = vlaneseq
    %v4891 = vshrl.u32 %v4890, 7
    %v4892 = vsub.s32 7, %v4891
    %v4893 = vrot.slane %v2525, %v4892
    %v4894 = vmul.f32 %v4888, %v4893
    %v4895 = vmul.f32 %v4889, %v4893
    %v4896 = vlaneseq
    %v4897 = vshrl.u32 %v4896, 7
    %v4898 = vsub.s32 0, %v4897
    %v4899 = vrot.slane %v2526, %v4898
    %v4900 = vadd.f32 %v4894, %v4899
    %v4901 = vadd.f32 %v4895, %v4899
    %v4902 = vld [vmem:[%s9] sm:$0x1]
    %v4903 = vld [vmem:[%s9 + $0x1] sm:$0x1]
    %v4904 = vsel %vm165, %v4900, 0.0
    %4905 = vadd.xlane.f32.xlu0 %v4904
    %v4906 = vpop.xlane.xlu0 %4905
    %v4907 = vsel %vm165, %v4901, 0.0
    %4908 = vadd.xlane.f32.xlu0 %v4907
    %v4909 = vpop.xlane.xlu0 %4908
    %v4910 = vmul.f32 %v4906, %v2263
    %v4911 = vmul.f32 %v4909, %v2263
    %v4912 = vsub.f32 %v4900, %v4910
    %v4913 = vsub.f32 %v4901, %v4911
    %v4914 = vmul.f32 %v4912, %v4912
    %v4915 = vmul.f32 %v4913, %v4913
    %v4916 = vsel %vm165, %v4914, 0.0
    %4917 = vadd.xlane.f32.xlu0 %v4916
    %v4918 = vpop.xlane.xlu0 %4917
    %v4919 = vsel %vm165, %v4915, 0.0
    %4920 = vadd.xlane.f32.xlu0 %v4919
    %v4921 = vpop.xlane.xlu0 %4920
    %v4922 = vmul.f32 %v4918, %v2263
    %v4923 = vmul.f32 %v4921, %v2263
    %v4924 = vadd.f32 %v4922, 1e-05
    %v4925 = vadd.f32 %v4923, 1e-05
    %v4926 = vrsqrt.pop %v4924
    %v4927 = vrsqrt.pop %v4925
    %v4928 = vmul.f32 %v4912, %v4926
    %v4929 = vmul.f32 %v4913, %v4927
    %v4930 = vlaneseq
    %v4931 = vshrl.u32 %v4930, 7
    %v4932 = vsub.s32 0, %v4931
    %v4933 = vrot.slane %v4902, %v4932
    %v4934 = vmul.f32 %v4928, %v4933
    %v4935 = vmul.f32 %v4929, %v4933
    %v4936 = vlaneseq
    %v4937 = vshrl.u32 %v4936, 7
    %v4938 = vsub.s32 0, %v4937
    %v4939 = vrot.slane %v4903, %v4938
    %v4940 = vadd.f32 %v4934, %v4939
    %v4941 = vadd.f32 %v4935, %v4939
    %v4943 = vcombine.high %v4940, %v4940
    %v4945 = vunpack.c.l.s4 1966171168
    %v4946 = vunpack.c.0.s8 %v4945
    %v4947 = vlaneseq
    %v4948 = vshrl.u32 %v4947, 7
    %v4949 = vsub.s32 %v4946, %v4948
    %v4950 = vrot.slane %v4940, %v4949
    %v4952 = vunpack.c.l.s4 1966171168
    %v4953 = vunpack.c.0.s8 %v4952
    %v4954 = vlaneseq
    %v4955 = vshrl.u32 %v4954, 7
    %v4956 = vsub.s32 %v4953, %v4955
    %v4957 = vrot.slane %v4943, %v4956
    %v4958 = vcombine.high %v4950, %v4950
    %v4959 = vcombine.high %v4957, %v4957
    %v4961 = vunpack.c.l.s4 1966171168
    %v4962 = vunpack.c.0.s8 %v4961
    %v4963 = vlaneseq
    %v4964 = vshrl.u32 %v4963, 7
    %v4965 = vsub.s32 %v4962, %v4964
    %v4966 = vrot.slane %v4950, %v4965
    %v4968 = vunpack.c.l.s4 1966171168
    %v4969 = vunpack.c.0.s8 %v4968
    %v4970 = vlaneseq
    %v4971 = vshrl.u32 %v4970, 7
    %v4972 = vsub.s32 %v4969, %v4971
    %v4973 = vrot.slane %v4957, %v4972
    %v4975 = vunpack.c.l.s4 1966171168
    %v4976 = vunpack.c.0.s8 %v4975
    %v4977 = vlaneseq
    %v4978 = vshrl.u32 %v4977, 7
    %v4979 = vsub.s32 %v4976, %v4978
    %v4980 = vrot.slane %v4958, %v4979
    %v4982 = vunpack.c.l.s4 1966171168
    %v4983 = vunpack.c.0.s8 %v4982
    %v4984 = vlaneseq
    %v4985 = vshrl.u32 %v4984, 7
    %v4986 = vsub.s32 %v4983, %v4985
    %v4987 = vrot.slane %v4959, %v4986
    %v4988 = vcombine.high %v4966, %v4966
    %v4989 = vcombine.high %v4973, %v4973
    %v4990 = vcombine.high %v4980, %v4980
    %v4991 = vcombine.high %v4987, %v4987
    %vm5000 = vcmask 253952
    %5001 = vst.msk [vmem:[#allocation5] sm:$0x1] %vm5000, %v4966
    %5002 = vst.msk [vmem:[#allocation5 + $0x2] sm:$0x1] %vm5000, %v4980
    %5003 = vst.msk [vmem:[#allocation5 + $0x4] sm:$0x1] %vm5000, %v4988
    %5004 = vst.msk [vmem:[#allocation5 + $0x6] sm:$0x1] %vm5000, %v4990
    %5005 = vst.msk [vmem:[#allocation5 + $0x8] sm:$0x1] %vm5000, %v4973
    %5006 = vst.msk [vmem:[#allocation5 + $0xa] sm:$0x1] %vm5000, %v4987
    %5007 = vst.msk [vmem:[#allocation5 + $0xc] sm:$0x1] %vm5000, %v4989
    %5008 = vst.msk [vmem:[#allocation5 + $0xe] sm:$0x1] %vm5000, %v4991
    %v5010 = vcombine.high %v4941, %v4941
    %v5012 = vunpack.c.l.s4 1966171168
    %v5013 = vunpack.c.0.s8 %v5012
    %v5014 = vlaneseq
    %v5015 = vshrl.u32 %v5014, 7
    %v5016 = vsub.s32 %v5013, %v5015
    %v5017 = vrot.slane %v4941, %v5016
    %v5019 = vunpack.c.l.s4 1966171168
    %v5020 = vunpack.c.0.s8 %v5019
    %v5021 = vlaneseq
    %v5022 = vshrl.u32 %v5021, 7
    %v5023 = vsub.s32 %v5020, %v5022
    %v5024 = vrot.slane %v5010, %v5023
    %v5025 = vcombine.high %v5017, %v5017
    %v5026 = vcombine.high %v5024, %v5024
    %v5028 = vunpack.c.l.s4 1966171168
    %v5029 = vunpack.c.0.s8 %v5028
    %v5030 = vlaneseq
    %v5031 = vshrl.u32 %v5030, 7
    %v5032 = vsub.s32 %v5029, %v5031
    %v5033 = vrot.slane %v5017, %v5032
    %v5035 = vunpack.c.l.s4 1966171168
    %v5036 = vunpack.c.0.s8 %v5035
    %v5037 = vlaneseq
    %v5038 = vshrl.u32 %v5037, 7
    %v5039 = vsub.s32 %v5036, %v5038
    %v5040 = vrot.slane %v5024, %v5039
    %v5042 = vunpack.c.l.s4 1966171168
    %v5043 = vunpack.c.0.s8 %v5042
    %v5044 = vlaneseq
    %v5045 = vshrl.u32 %v5044, 7
    %v5046 = vsub.s32 %v5043, %v5045
    %v5047 = vrot.slane %v5025, %v5046
    %v5049 = vunpack.c.l.s4 1966171168
    %v5050 = vunpack.c.0.s8 %v5049
    %v5051 = vlaneseq
    %v5052 = vshrl.u32 %v5051, 7
    %v5053 = vsub.s32 %v5050, %v5052
    %v5054 = vrot.slane %v5026, %v5053
    %v5055 = vcombine.high %v5033, %v5033
    %v5056 = vcombine.high %v5040, %v5040
    %v5057 = vcombine.high %v5047, %v5047
    %v5058 = vcombine.high %v5054, %v5054
    %5067 = vst.msk [vmem:[#allocation5 + $0x1] sm:$0x1] %vm5000, %v5033
    %5068 = vst.msk [vmem:[#allocation5 + $0x3] sm:$0x1] %vm5000, %v5047
    %5069 = vst.msk [vmem:[#allocation5 + $0x5] sm:$0x1] %vm5000, %v5055
    %5070 = vst.msk [vmem:[#allocation5 + $0x7] sm:$0x1] %vm5000, %v5057
    %5071 = vst.msk [vmem:[#allocation5 + $0x9] sm:$0x1] %vm5000, %v5040
    %5072 = vst.msk [vmem:[#allocation5 + $0xb] sm:$0x1] %vm5000, %v5054
    %5073 = vst.msk [vmem:[#allocation5 + $0xd] sm:$0x1] %vm5000, %v5056
    %5074 = vst.msk [vmem:[#allocation5 + $0xf] sm:$0x1] %vm5000, %v5058
    // Predicated region
    $region46: #{transformer_encoder.1} parent=1 // pred_check
      _
    $region47: #{transformer_encoder.1} parent=1 // pred_check_branch
      %5076 = sbr.rel (0) target = $region49
    $region48: #{transformer_encoder.1} parent=1 // pred_region
      %s5078 = ssub.s32 256, 256
      %5079 = vsyncadd [#allocation4], %s5078
      %s5080 = sshll.u32 [#allocation5], 4
      %s5081 = int_to_ptr.vmem [resolvable:$true] %s5080
      %5086 = dma.vmem_to_hbm [thread:$0]  %s5081, 256, %s10, [#allocation4], 32, 32, 2
    $region49: #{transformer_encoder.1} parent=1 // pred_fallthru
      _
    // Predicated region
    $region50: #{transformer_encoder.1} parent=1 // pred_check
      _
    $region51: #{transformer_encoder.1} parent=1 // pred_check_branch
      %5088 = sbr.rel (0) target = $region53
    $region52: #{transformer_encoder.1} parent=1 // pred_region
      %5089 = dma.done [#allocation4], 256
    $region53: #{transformer_encoder.1} parent=1 // pred_fallthru
      _
    %5090 = vsyncpa [#allocation3], 1
    %5091 = vsyncpa [#allocation4], 1

</llo_original>
